<compile_context>
chip_gen: v7x
topology: tpu7x:2x2x1
jax: 0.10.0
libtpu: 0.0.40
codegen_flags: <defaults>
</compile_context>

<pallas_src>
import functools
import math

import jax
import jax.numpy as jnp
from jax.experimental import pallas as pl
from jax.experimental.pallas import tpu as pltpu


# ------------------------------------------------------------------ in-kernel helpers

def _ln(x, g, b, eps):
    """LayerNorm over the last (hidden) axis, f32."""
    mu = jnp.mean(x, axis=-1, keepdims=True)
    xc = x - mu
    var = jnp.mean(xc * xc, axis=-1, keepdims=True)
    return xc * jax.lax.rsqrt(var + eps) * g + b


def _erf(x):
    # Abramowitz & Stegun 7.1.26 rational approximation (|err| < 1.5e-7),
    # built only from exp/abs/select so it lowers on all TPU targets.
    # TODO(synk): switch to jax.lax.erf once its Mosaic lowering is confirmed everywhere.
    a = jnp.abs(x)
    t = 1.0 / (1.0 + 0.3275911 * a)
    poly = t * (0.254829592 + t * (-0.284496736 + t * (1.421413741 +
                t * (-1.453152027 + t * 1.061405429))))
    y = 1.0 - poly * jnp.exp(-a * a)
    return jnp.where(x >= 0.0, y, -y)


def _gelu_exact(x):
    """HF-BERT exact (erf) GELU."""
    return 0.5 * x * (1.0 + _erf(x * (1.0 / math.sqrt(2.0))))


# ------------------------------------------------------------------ fused kernel

def _fused_forward_kernel(x_ref, mask_ref, elng_ref, elnb_ref,
                          wqkv_ref, bqkv_ref, wo_ref, bo_ref,
                          ln1g_ref, ln1b_ref, w1_ref, b1_ref,
                          w2_ref, b2_ref, ln2g_ref, ln2b_ref,
                          pw_ref, pb_ref, fw_ref, fb_ref,
                          out_ref,
                          *, batch, seq, heads, head_dim, layers, scale, eps):
    """Whole PatentClassificationModel forward for all batches, in VMEM."""
    hidden = heads * head_dim
    rows = batch * seq

    # ---- embedding LayerNorm (fused; no HBM round trip)
    x = _ln(x_ref[...], elng_ref[...], elnb_ref[...], eps)        # (B*S, H) f32

    # ---- additive mask, loaded once, full-shaped (no per-head broadcasts)
    mask2d = mask_ref[...]                                        # (B*S, B*S) f32

    # ---- encoder layers, statically unrolled, all weights resident in VMEM
    for l in range(layers):
        xb = x.astype(jnp.bfloat16)

        # fused QKV projection: one bf16 MXU pass with N = 3H
        qkv = jnp.dot(xb, wqkv_ref[l],
                      preferred_element_type=jnp.float32) + bqkv_ref[l]   # (B*S, 3H)

        # per-head attention over the full (B*S) row block; batch separation
        # comes from the block-diagonal additive mask (masked probs are exactly 0)
        ctx_heads = []
        for h in range(heads):
            lo = h * head_dim
            q = qkv[:, lo:lo + head_dim].astype(jnp.bfloat16)                       # (B*S, Dh)
            k = qkv[:, hidden + lo:hidden + lo + head_dim].astype(jnp.bfloat16)     # (B*S, Dh)
            v = qkv[:, 2 * hidden + lo:2 * hidden + lo + head_dim].astype(jnp.bfloat16)

            s = jnp.dot(q, k.T, preferred_element_type=jnp.float32) * scale         # (B*S, B*S)
            s = s + mask2d
            s = s - jnp.max(s, axis=-1, keepdims=True)
            p = jnp.exp(s)
            p = p / jnp.sum(p, axis=-1, keepdims=True)            # exact divide (parity)
            ctx_heads.append(jnp.dot(p.astype(jnp.bfloat16), v,
                                     preferred_element_type=jnp.float32))           # (B*S, Dh)

        # reassemble heads and do ONE output projection (K = H)
        ctx = jnp.concatenate(ctx_heads, axis=-1).astype(jnp.bfloat16)               # (B*S, H)
        attn = jnp.dot(ctx, wo_ref[l],
                       preferred_element_type=jnp.float32) + bo_ref[l]

        # residual + LayerNorm 1
        x1 = _ln(attn + x, ln1g_ref[l], ln1b_ref[l], eps)

        # FFN with fused GELU, residual + LayerNorm 2
        ff = jnp.dot(x1.astype(jnp.bfloat16), w1_ref[l],
                     preferred_element_type=jnp.float32) + b1_ref[l]
        ff = _gelu_exact(ff)
        ff = jnp.dot(ff.astype(jnp.bfloat16), w2_ref[l],
                     preferred_element_type=jnp.float32) + b2_ref[l]
        x = _ln(ff + x1, ln2g_ref[l], ln2b_ref[l], eps)

    # ---- pooler (tanh on CLS rows) + classifier head; only logits leave VMEM
    # one-hot selector picks row b*seq for each batch b (avoids strided slicing)
    r = jax.lax.broadcasted_iota(jnp.int32, (batch, rows), 0)
    c = jax.lax.broadcasted_iota(jnp.int32, (batch, rows), 1)
    sel = (c == r * seq).astype(jnp.bfloat16)                     # (B, B*S)
    cls = jnp.dot(sel, x.astype(jnp.bfloat16),
                  preferred_element_type=jnp.float32)             # (B, H)

    pooled = jnp.tanh(jnp.dot(cls.astype(jnp.bfloat16), pw_ref[...],
                              preferred_element_type=jnp.float32) + pb_ref[...])
    logits = jnp.dot(pooled.astype(jnp.bfloat16), fw_ref[...],
                     preferred_element_type=jnp.float32) + fb_ref[...]
    out_ref[...] = logits.astype(out_ref.dtype)


# ------------------------------------------------------------------ model config / params

CFG = dict(
    vocab_size=100,
    max_position=32,
    type_vocab_size=2,
    hidden=32,
    heads=4,
    layers=2,
    intermediate=64,
    num_classes=5,
    initializer_range=0.02,
    ln_eps=1e-12,
)


def init_params(key, cfg):
    std = cfg["initializer_range"]
    H, I, C, L = cfg["hidden"], cfg["intermediate"], cfg["num_classes"], cfg["layers"]
    keys = iter(jax.random.split(key, 64))

    def nrm(shape, dtype=jnp.float32):
        return (std * jax.random.normal(next(keys), shape, jnp.float32)).astype(dtype)

    params = {
        "emb": {
            "word": nrm((cfg["vocab_size"], H)),
            "pos": nrm((cfg["max_position"], H)),
            "type": nrm((cfg["type_vocab_size"], H)),
            "ln_g": jnp.ones((1, H), jnp.float32),
            "ln_b": jnp.zeros((1, H), jnp.float32),
        },
        # per-layer weights stacked along a leading L axis so the fused kernel
        # indexes them with ref[l] inside the unrolled layer loop.
        # Matmul weights stored in bf16 (native MXU rate, half the DMA bytes).
        "stack": {
            "wqkv": nrm((L, H, 3 * H), jnp.bfloat16),
            "bqkv": jnp.zeros((L, 1, 3 * H), jnp.float32),
            "wo": nrm((L, H, H), jnp.bfloat16),
            "bo": jnp.zeros((L, 1, H), jnp.float32),
            "ln1_g": jnp.ones((L, 1, H), jnp.float32),
            "ln1_b": jnp.zeros((L, 1, H), jnp.float32),
            "w1": nrm((L, H, I), jnp.bfloat16),
            "b1": jnp.zeros((L, 1, I), jnp.float32),
            "w2": nrm((L, I, H), jnp.bfloat16),
            "b2": jnp.zeros((L, 1, H), jnp.float32),
            "ln2_g": jnp.ones((L, 1, H), jnp.float32),
            "ln2_b": jnp.zeros((L, 1, H), jnp.float32),
        },
        "pool_w": nrm((H, H), jnp.bfloat16),
        "pool_b": jnp.zeros((1, H), jnp.float32),
        # fc follows PatentClassificationModel._init_weights: normal(std), zero bias
        "fc_w": nrm((H, C), jnp.bfloat16),
        "fc_b": jnp.zeros((1, C), jnp.float32),
    }
    return params


# ------------------------------------------------------------------ forward (wrapper)

def patent_classification_forward(params, input_ids, token_type_ids, attention_mask, cfg):
    B, S = input_ids.shape
    H, nH, L = cfg["hidden"], cfg["heads"], cfg["layers"]
    C = cfg["num_classes"]
    Dh = H // nH

    # ---- embedding table gathers are plain-JAX glue (data-dependent lookups)
    emb = params["emb"]
    x = (emb["word"][input_ids]
         + emb["pos"][jnp.arange(S)][None, :, :]
         + emb["type"][token_type_ids]).reshape(B * S, H).astype(jnp.float32)

    # ---- block-diagonal additive attention mask over keys: (B*S, B*S)
    # allowed iff same batch element AND key position is not padding.
    key_ok = attention_mask.astype(jnp.float32)                       # (B, S)
    same_batch = jnp.eye(B, dtype=jnp.float32)                        # (B, B)
    allowed = same_batch[:, None, :, None] * key_ok[None, None, :, :]  # (B,1,B,S)
    allowed = jnp.broadcast_to(allowed, (B, S, B, S)).reshape(B * S, B * S)
    mask2d = (1.0 - allowed) * -10000.0

    stk = params["stack"]
    args = (x, mask2d, emb["ln_g"], emb["ln_b"],
            stk["wqkv"], stk["bqkv"], stk["wo"], stk["bo"],
            stk["ln1_g"], stk["ln1_b"], stk["w1"], stk["b1"],
            stk["w2"], stk["b2"], stk["ln2_g"], stk["ln2_b"],
            params["pool_w"], params["pool_b"], params["fc_w"], params["fc_b"])

    def fs(a):  # whole array as one VMEM block
        nd = a.ndim
        return pl.BlockSpec(a.shape, lambda i, nd=nd: (0,) * nd)

    kernel = functools.partial(
        _fused_forward_kernel,
        batch=B, seq=S, heads=nH, head_dim=Dh, layers=L,
        scale=1.0 / math.sqrt(Dh), eps=cfg["ln_eps"])

    logits = pl.pallas_call(
        kernel,
        out_shape=jax.ShapeDtypeStruct((B, C), jnp.float32),
        grid=(1,),
        in_specs=[fs(a) for a in args],
        out_specs=pl.BlockSpec((B, C), lambda i: (0, 0)),
        compiler_params=pltpu.CompilerParams(
            dimension_semantics=("arbitrary",)),
    )(*args)
    return logits


# ------------------------------------------------------------------ main

if __name__ == "__main__":
    cfg = CFG
    B, S = 2, 8

    root = jax.random.PRNGKey(0)
    k_params, k_ids, _ = jax.random.split(root, 3)

    params = init_params(k_params, cfg)

    input_ids = jax.random.randint(k_ids, (B, S), 0, cfg["vocab_size"], dtype=jnp.int32)
    token_type_ids = jnp.zeros((B, S), dtype=jnp.int32)
    # mask out the last two tokens of the second example to exercise the attention mask
    attention_mask = jnp.ones((B, S), dtype=jnp.int32).at[1, S - 2:].set(0)

    fwd = jax.jit(functools.partial(patent_classification_forward, cfg=cfg))
    logits = fwd(params, input_ids, token_type_ids, attention_mask)
    jax.block_until_ready(logits)

    assert logits.shape == (B, cfg["num_classes"])
    assert bool(jnp.all(jnp.isfinite(logits)))
    print("KERNEL_OK")
</pallas_src>

<mosaic_0001>
module attributes {stable_mosaic.version = 11 : i64} {
  func.func @_fused_forward_kernel(%arg0: i32, %arg1: memref<16x32xf32, #tpu.memory_space<vmem>>, %arg2: memref<16x16xf32, #tpu.memory_space<vmem>>, %arg3: memref<1x32xf32, #tpu.memory_space<vmem>>, %arg4: memref<1x32xf32, #tpu.memory_space<vmem>>, %arg5: memref<2x32x96xbf16, #tpu.memory_space<vmem>>, %arg6: memref<2x1x96xf32, #tpu.memory_space<vmem>>, %arg7: memref<2x32x32xbf16, #tpu.memory_space<vmem>>, %arg8: memref<2x1x32xf32, #tpu.memory_space<vmem>>, %arg9: memref<2x1x32xf32, #tpu.memory_space<vmem>>, %arg10: memref<2x1x32xf32, #tpu.memory_space<vmem>>, %arg11: memref<2x32x64xbf16, #tpu.memory_space<vmem>>, %arg12: memref<2x1x64xf32, #tpu.memory_space<vmem>>, %arg13: memref<2x64x32xbf16, #tpu.memory_space<vmem>>, %arg14: memref<2x1x32xf32, #tpu.memory_space<vmem>>, %arg15: memref<2x1x32xf32, #tpu.memory_space<vmem>>, %arg16: memref<2x1x32xf32, #tpu.memory_space<vmem>>, %arg17: memref<32x32xbf16, #tpu.memory_space<vmem>>, %arg18: memref<1x32xf32, #tpu.memory_space<vmem>>, %arg19: memref<32x5xbf16, #tpu.memory_space<vmem>>, %arg20: memref<1x5xf32, #tpu.memory_space<vmem>>, %arg21: memref<2x5xf32, #tpu.memory_space<vmem>>) attributes {dimension_semantics = [#tpu.dimension_semantics<arbitrary>], iteration_bounds = array<i64: 1>, scalar_prefetch = 0 : i64, scratch_operands = 0 : i64, tpu.core_type = #tpu.core_type<tc>, window_params = [{pipeline_mode = #tpu.pipeline_mode<synchronous>, transform_indices = @transform_0, window_bounds = array<i64: 16, 32>}, {pipeline_mode = #tpu.pipeline_mode<synchronous>, transform_indices = @transform_1, window_bounds = array<i64: 16, 16>}, {pipeline_mode = #tpu.pipeline_mode<synchronous>, transform_indices = @transform_2, window_bounds = array<i64: 1, 32>}, {pipeline_mode = #tpu.pipeline_mode<synchronous>, transform_indices = @transform_3, window_bounds = array<i64: 1, 32>}, {pipeline_mode = #tpu.pipeline_mode<synchronous>, transform_indices = @transform_4, window_bounds = array<i64: 2, 32, 96>}, {pipeline_mode = #tpu.pipeline_mode<synchronous>, transform_indices = @transform_5, window_bounds = array<i64: 2, 1, 96>}, {pipeline_mode = #tpu.pipeline_mode<synchronous>, transform_indices = @transform_6, window_bounds = array<i64: 2, 32, 32>}, {pipeline_mode = #tpu.pipeline_mode<synchronous>, transform_indices = @transform_7, window_bounds = array<i64: 2, 1, 32>}, {pipeline_mode = #tpu.pipeline_mode<synchronous>, transform_indices = @transform_8, window_bounds = array<i64: 2, 1, 32>}, {pipeline_mode = #tpu.pipeline_mode<synchronous>, transform_indices = @transform_9, window_bounds = array<i64: 2, 1, 32>}, {pipeline_mode = #tpu.pipeline_mode<synchronous>, transform_indices = @transform_10, window_bounds = array<i64: 2, 32, 64>}, {pipeline_mode = #tpu.pipeline_mode<synchronous>, transform_indices = @transform_11, window_bounds = array<i64: 2, 1, 64>}, {pipeline_mode = #tpu.pipeline_mode<synchronous>, transform_indices = @transform_12, window_bounds = array<i64: 2, 64, 32>}, {pipeline_mode = #tpu.pipeline_mode<synchronous>, transform_indices = @transform_13, window_bounds = array<i64: 2, 1, 32>}, {pipeline_mode = #tpu.pipeline_mode<synchronous>, transform_indices = @transform_14, window_bounds = array<i64: 2, 1, 32>}, {pipeline_mode = #tpu.pipeline_mode<synchronous>, transform_indices = @transform_15, window_bounds = array<i64: 2, 1, 32>}, {pipeline_mode = #tpu.pipeline_mode<synchronous>, transform_indices = @transform_16, window_bounds = array<i64: 32, 32>}, {pipeline_mode = #tpu.pipeline_mode<synchronous>, transform_indices = @transform_17, window_bounds = array<i64: 1, 32>}, {pipeline_mode = #tpu.pipeline_mode<synchronous>, transform_indices = @transform_18, window_bounds = array<i64: 32, 5>}, {pipeline_mode = #tpu.pipeline_mode<synchronous>, transform_indices = @transform_19, window_bounds = array<i64: 1, 5>}, {pipeline_mode = #tpu.pipeline_mode<synchronous>, transform_indices = @transform_20, window_bounds = array<i64: 2, 5>}]} {
    %c0 = arith.constant 0 : index
    %c0_0 = arith.constant 0 : index
    %0 = vector.load %arg1[%c0, %c0_0] : memref<16x32xf32, #tpu.memory_space<vmem>>, vector<16x32xf32>
    %c0_1 = arith.constant 0 : index
    %c0_2 = arith.constant 0 : index
    %1 = vector.load %arg3[%c0_1, %c0_2] : memref<1x32xf32, #tpu.memory_space<vmem>>, vector<1x32xf32>
    %c0_3 = arith.constant 0 : index
    %c0_4 = arith.constant 0 : index
    %2 = vector.load %arg4[%c0_3, %c0_4] : memref<1x32xf32, #tpu.memory_space<vmem>>, vector<1x32xf32>
    %cst = arith.constant dense<0.000000e+00> : vector<16xf32>
    %3 = vector.multi_reduction <add>, %0, %cst [1] : vector<16x32xf32> to vector<16xf32>
    %4 = vector.shape_cast %3 : vector<16xf32> to vector<16x1xf32>
    %cst_5 = arith.constant 3.200000e+01 : f32
    %5 = vector.broadcast %cst_5 : f32 to vector<16x1xf32>
    %6 = arith.divf %4, %5 : vector<16x1xf32>
    %7 = vector.broadcast %6 : vector<16x1xf32> to vector<16x32xf32>
    %8 = arith.subf %0, %7 : vector<16x32xf32>
    %9 = arith.mulf %8, %8 : vector<16x32xf32>
    %cst_6 = arith.constant dense<0.000000e+00> : vector<16xf32>
    %10 = vector.multi_reduction <add>, %9, %cst_6 [1] : vector<16x32xf32> to vector<16xf32>
    %11 = vector.shape_cast %10 : vector<16xf32> to vector<16x1xf32>
    %cst_7 = arith.constant 3.200000e+01 : f32
    %12 = vector.broadcast %cst_7 : f32 to vector<16x1xf32>
    %13 = arith.divf %11, %12 : vector<16x1xf32>
    %cst_8 = arith.constant 9.99999996E-13 : f32
    %14 = vector.broadcast %cst_8 : f32 to vector<16x1xf32>
    %15 = arith.addf %13, %14 : vector<16x1xf32>
    %16 = math.rsqrt %15 : vector<16x1xf32>
    %17 = vector.broadcast %16 : vector<16x1xf32> to vector<16x32xf32>
    %18 = arith.mulf %8, %17 : vector<16x32xf32>
    %19 = vector.broadcast %1 : vector<1x32xf32> to vector<16x32xf32>
    %20 = arith.mulf %18, %19 : vector<16x32xf32>
    %21 = vector.broadcast %2 : vector<1x32xf32> to vector<16x32xf32>
    %22 = arith.addf %20, %21 : vector<16x32xf32>
    %c0_9 = arith.constant 0 : index
    %c0_10 = arith.constant 0 : index
    %23 = vector.load %arg2[%c0_9, %c0_10] : memref<16x16xf32, #tpu.memory_space<vmem>>, vector<16x16xf32>
    %24 = arith.truncf %22 : vector<16x32xf32> to vector<16x32xbf16>
    %c0_11 = arith.constant 0 : index
    %c0_12 = arith.constant 0 : index
    %c0_13 = arith.constant 0 : index
    %25 = vector.load %arg5[%c0_11, %c0_12, %c0_13] : memref<2x32x96xbf16, #tpu.memory_space<vmem>>, vector<1x32x96xbf16>
    %26 = vector.shape_cast %25 : vector<1x32x96xbf16> to vector<32x96xbf16>
    %cst_14 = arith.constant dense<0.000000e+00> : vector<16x96xf32>
    %27 = tpu.matmul %24, %26, %cst_14 {dimension_numbers = #tpu.dot_dimension_numbers<[1], [0], [0], [1], [0, 0, 1, 1], [], []>} : vector<16x32xbf16>, vector<32x96xbf16>, vector<16x96xf32> -> vector<16x96xf32>
    %c0_15 = arith.constant 0 : index
    %c0_16 = arith.constant 0 : index
    %c0_17 = arith.constant 0 : index
    %28 = vector.load %arg6[%c0_15, %c0_16, %c0_17] : memref<2x1x96xf32, #tpu.memory_space<vmem>>, vector<1x1x96xf32>
    %29 = vector.shape_cast %28 : vector<1x1x96xf32> to vector<1x96xf32>
    %30 = vector.broadcast %29 : vector<1x96xf32> to vector<16x96xf32>
    %31 = arith.addf %27, %30 : vector<16x96xf32>
    %32 = vector.extract_strided_slice %31 {offsets = [0, 0], sizes = [16, 8], strides = [1, 1]} : vector<16x96xf32> to vector<16x8xf32>
    %33 = arith.truncf %32 : vector<16x8xf32> to vector<16x8xbf16>
    %34 = vector.extract_strided_slice %31 {offsets = [0, 32], sizes = [16, 8], strides = [1, 1]} : vector<16x96xf32> to vector<16x8xf32>
    %35 = arith.truncf %34 : vector<16x8xf32> to vector<16x8xbf16>
    %36 = vector.extract_strided_slice %31 {offsets = [0, 64], sizes = [16, 8], strides = [1, 1]} : vector<16x96xf32> to vector<16x8xf32>
    %37 = arith.truncf %36 : vector<16x8xf32> to vector<16x8xbf16>
    %38 = tpu.transpose %35, [1, 0] : vector<16x8xbf16> -> vector<8x16xbf16>
    %cst_18 = arith.constant dense<0.000000e+00> : vector<16x16xf32>
    %39 = tpu.matmul %33, %38, %cst_18 {dimension_numbers = #tpu.dot_dimension_numbers<[1], [0], [0], [1], [0, 0, 1, 1], [], []>} : vector<16x8xbf16>, vector<8x16xbf16>, vector<16x16xf32> -> vector<16x16xf32>
    %cst_19 = arith.constant 0.353553385 : f32
    %40 = vector.broadcast %cst_19 : f32 to vector<16x16xf32>
    %41 = arith.mulf %39, %40 : vector<16x16xf32>
    %42 = arith.addf %41, %23 : vector<16x16xf32>
    %cst_20 = arith.constant dense<0xFF800000> : vector<16xf32>
    %43 = vector.multi_reduction <maximumf>, %42, %cst_20 [1] : vector<16x16xf32> to vector<16xf32>
    %44 = vector.shape_cast %43 : vector<16xf32> to vector<16x1xf32>
    %45 = vector.broadcast %44 : vector<16x1xf32> to vector<16x16xf32>
    %46 = arith.subf %42, %45 : vector<16x16xf32>
    %47 = math.exp %46 : vector<16x16xf32>
    %cst_21 = arith.constant dense<0.000000e+00> : vector<16xf32>
    %48 = vector.multi_reduction <add>, %47, %cst_21 [1] : vector<16x16xf32> to vector<16xf32>
    %49 = vector.shape_cast %48 : vector<16xf32> to vector<16x1xf32>
    %50 = vector.broadcast %49 : vector<16x1xf32> to vector<16x16xf32>
    %51 = arith.divf %47, %50 : vector<16x16xf32>
    %52 = arith.truncf %51 : vector<16x16xf32> to vector<16x16xbf16>
    %cst_22 = arith.constant dense<0.000000e+00> : vector<16x8xf32>
    %53 = tpu.matmul %52, %37, %cst_22 {dimension_numbers = #tpu.dot_dimension_numbers<[1], [0], [0], [1], [0, 0, 1, 1], [], []>} : vector<16x16xbf16>, vector<16x8xbf16>, vector<16x8xf32> -> vector<16x8xf32>
    %54 = vector.extract_strided_slice %31 {offsets = [0, 8], sizes = [16, 8], strides = [1, 1]} : vector<16x96xf32> to vector<16x8xf32>
    %55 = arith.truncf %54 : vector<16x8xf32> to vector<16x8xbf16>
    %56 = vector.extract_strided_slice %31 {offsets = [0, 40], sizes = [16, 8], strides = [1, 1]} : vector<16x96xf32> to vector<16x8xf32>
    %57 = arith.truncf %56 : vector<16x8xf32> to vector<16x8xbf16>
    %58 = vector.extract_strided_slice %31 {offsets = [0, 72], sizes = [16, 8], strides = [1, 1]} : vector<16x96xf32> to vector<16x8xf32>
    %59 = arith.truncf %58 : vector<16x8xf32> to vector<16x8xbf16>
    %60 = tpu.transpose %57, [1, 0] : vector<16x8xbf16> -> vector<8x16xbf16>
    %cst_23 = arith.constant dense<0.000000e+00> : vector<16x16xf32>
    %61 = tpu.matmul %55, %60, %cst_23 {dimension_numbers = #tpu.dot_dimension_numbers<[1], [0], [0], [1], [0, 0, 1, 1], [], []>} : vector<16x8xbf16>, vector<8x16xbf16>, vector<16x16xf32> -> vector<16x16xf32>
    %cst_24 = arith.constant 0.353553385 : f32
    %62 = vector.broadcast %cst_24 : f32 to vector<16x16xf32>
    %63 = arith.mulf %61, %62 : vector<16x16xf32>
    %64 = arith.addf %63, %23 : vector<16x16xf32>
    %cst_25 = arith.constant dense<0xFF800000> : vector<16xf32>
    %65 = vector.multi_reduction <maximumf>, %64, %cst_25 [1] : vector<16x16xf32> to vector<16xf32>
    %66 = vector.shape_cast %65 : vector<16xf32> to vector<16x1xf32>
    %67 = vector.broadcast %66 : vector<16x1xf32> to vector<16x16xf32>
    %68 = arith.subf %64, %67 : vector<16x16xf32>
    %69 = math.exp %68 : vector<16x16xf32>
    %cst_26 = arith.constant dense<0.000000e+00> : vector<16xf32>
    %70 = vector.multi_reduction <add>, %69, %cst_26 [1] : vector<16x16xf32> to vector<16xf32>
    %71 = vector.shape_cast %70 : vector<16xf32> to vector<16x1xf32>
    %72 = vector.broadcast %71 : vector<16x1xf32> to vector<16x16xf32>
    %73 = arith.divf %69, %72 : vector<16x16xf32>
    %74 = arith.truncf %73 : vector<16x16xf32> to vector<16x16xbf16>
    %cst_27 = arith.constant dense<0.000000e+00> : vector<16x8xf32>
    %75 = tpu.matmul %74, %59, %cst_27 {dimension_numbers = #tpu.dot_dimension_numbers<[1], [0], [0], [1], [0, 0, 1, 1], [], []>} : vector<16x16xbf16>, vector<16x8xbf16>, vector<16x8xf32> -> vector<16x8xf32>
    %76 = vector.extract_strided_slice %31 {offsets = [0, 16], sizes = [16, 8], strides = [1, 1]} : vector<16x96xf32> to vector<16x8xf32>
    %77 = arith.truncf %76 : vector<16x8xf32> to vector<16x8xbf16>
    %78 = vector.extract_strided_slice %31 {offsets = [0, 48], sizes = [16, 8], strides = [1, 1]} : vector<16x96xf32> to vector<16x8xf32>
    %79 = arith.truncf %78 : vector<16x8xf32> to vector<16x8xbf16>
    %80 = vector.extract_strided_slice %31 {offsets = [0, 80], sizes = [16, 8], strides = [1, 1]} : vector<16x96xf32> to vector<16x8xf32>
    %81 = arith.truncf %80 : vector<16x8xf32> to vector<16x8xbf16>
    %82 = tpu.transpose %79, [1, 0] : vector<16x8xbf16> -> vector<8x16xbf16>
    %cst_28 = arith.constant dense<0.000000e+00> : vector<16x16xf32>
    %83 = tpu.matmul %77, %82, %cst_28 {dimension_numbers = #tpu.dot_dimension_numbers<[1], [0], [0], [1], [0, 0, 1, 1], [], []>} : vector<16x8xbf16>, vector<8x16xbf16>, vector<16x16xf32> -> vector<16x16xf32>
    %cst_29 = arith.constant 0.353553385 : f32
    %84 = vector.broadcast %cst_29 : f32 to vector<16x16xf32>
    %85 = arith.mulf %83, %84 : vector<16x16xf32>
    %86 = arith.addf %85, %23 : vector<16x16xf32>
    %cst_30 = arith.constant dense<0xFF800000> : vector<16xf32>
    %87 = vector.multi_reduction <maximumf>, %86, %cst_30 [1] : vector<16x16xf32> to vector<16xf32>
    %88 = vector.shape_cast %87 : vector<16xf32> to vector<16x1xf32>
    %89 = vector.broadcast %88 : vector<16x1xf32> to vector<16x16xf32>
    %90 = arith.subf %86, %89 : vector<16x16xf32>
    %91 = math.exp %90 : vector<16x16xf32>
    %cst_31 = arith.constant dense<0.000000e+00> : vector<16xf32>
    %92 = vector.multi_reduction <add>, %91, %cst_31 [1] : vector<16x16xf32> to vector<16xf32>
    %93 = vector.shape_cast %92 : vector<16xf32> to vector<16x1xf32>
    %94 = vector.broadcast %93 : vector<16x1xf32> to vector<16x16xf32>
    %95 = arith.divf %91, %94 : vector<16x16xf32>
    %96 = arith.truncf %95 : vector<16x16xf32> to vector<16x16xbf16>
    %cst_32 = arith.constant dense<0.000000e+00> : vector<16x8xf32>
    %97 = tpu.matmul %96, %81, %cst_32 {dimension_numbers = #tpu.dot_dimension_numbers<[1], [0], [0], [1], [0, 0, 1, 1], [], []>} : vector<16x16xbf16>, vector<16x8xbf16>, vector<16x8xf32> -> vector<16x8xf32>
    %98 = vector.extract_strided_slice %31 {offsets = [0, 24], sizes = [16, 8], strides = [1, 1]} : vector<16x96xf32> to vector<16x8xf32>
    %99 = arith.truncf %98 : vector<16x8xf32> to vector<16x8xbf16>
    %100 = vector.extract_strided_slice %31 {offsets = [0, 56], sizes = [16, 8], strides = [1, 1]} : vector<16x96xf32> to vector<16x8xf32>
    %101 = arith.truncf %100 : vector<16x8xf32> to vector<16x8xbf16>
    %102 = vector.extract_strided_slice %31 {offsets = [0, 88], sizes = [16, 8], strides = [1, 1]} : vector<16x96xf32> to vector<16x8xf32>
    %103 = arith.truncf %102 : vector<16x8xf32> to vector<16x8xbf16>
    %104 = tpu.transpose %101, [1, 0] : vector<16x8xbf16> -> vector<8x16xbf16>
    %cst_33 = arith.constant dense<0.000000e+00> : vector<16x16xf32>
    %105 = tpu.matmul %99, %104, %cst_33 {dimension_numbers = #tpu.dot_dimension_numbers<[1], [0], [0], [1], [0, 0, 1, 1], [], []>} : vector<16x8xbf16>, vector<8x16xbf16>, vector<16x16xf32> -> vector<16x16xf32>
    %cst_34 = arith.constant 0.353553385 : f32
    %106 = vector.broadcast %cst_34 : f32 to vector<16x16xf32>
    %107 = arith.mulf %105, %106 : vector<16x16xf32>
    %108 = arith.addf %107, %23 : vector<16x16xf32>
    %cst_35 = arith.constant dense<0xFF800000> : vector<16xf32>
    %109 = vector.multi_reduction <maximumf>, %108, %cst_35 [1] : vector<16x16xf32> to vector<16xf32>
    %110 = vector.shape_cast %109 : vector<16xf32> to vector<16x1xf32>
    %111 = vector.broadcast %110 : vector<16x1xf32> to vector<16x16xf32>
    %112 = arith.subf %108, %111 : vector<16x16xf32>
    %113 = math.exp %112 : vector<16x16xf32>
    %cst_36 = arith.constant dense<0.000000e+00> : vector<16xf32>
    %114 = vector.multi_reduction <add>, %113, %cst_36 [1] : vector<16x16xf32> to vector<16xf32>
    %115 = vector.shape_cast %114 : vector<16xf32> to vector<16x1xf32>
    %116 = vector.broadcast %115 : vector<16x1xf32> to vector<16x16xf32>
    %117 = arith.divf %113, %116 : vector<16x16xf32>
    %118 = arith.truncf %117 : vector<16x16xf32> to vector<16x16xbf16>
    %cst_37 = arith.constant dense<0.000000e+00> : vector<16x8xf32>
    %119 = tpu.matmul %118, %103, %cst_37 {dimension_numbers = #tpu.dot_dimension_numbers<[1], [0], [0], [1], [0, 0, 1, 1], [], []>} : vector<16x16xbf16>, vector<16x8xbf16>, vector<16x8xf32> -> vector<16x8xf32>
    %120 = tpu.concatenate %53, %75, %97, %119 in 1 : vector<16x8xf32>, vector<16x8xf32>, vector<16x8xf32>, vector<16x8xf32> -> vector<16x32xf32>
    %121 = arith.truncf %120 : vector<16x32xf32> to vector<16x32xbf16>
    %c0_38 = arith.constant 0 : index
    %c0_39 = arith.constant 0 : index
    %c0_40 = arith.constant 0 : index
    %122 = vector.load %arg7[%c0_38, %c0_39, %c0_40] : memref<2x32x32xbf16, #tpu.memory_space<vmem>>, vector<1x32x32xbf16>
    %123 = vector.shape_cast %122 : vector<1x32x32xbf16> to vector<32x32xbf16>
    %cst_41 = arith.constant dense<0.000000e+00> : vector<16x32xf32>
    %124 = tpu.matmul %121, %123, %cst_41 {dimension_numbers = #tpu.dot_dimension_numbers<[1], [0], [0], [1], [0, 0, 1, 1], [], []>} : vector<16x32xbf16>, vector<32x32xbf16>, vector<16x32xf32> -> vector<16x32xf32>
    %c0_42 = arith.constant 0 : index
    %c0_43 = arith.constant 0 : index
    %c0_44 = arith.constant 0 : index
    %125 = vector.load %arg8[%c0_42, %c0_43, %c0_44] : memref<2x1x32xf32, #tpu.memory_space<vmem>>, vector<1x1x32xf32>
    %126 = vector.shape_cast %125 : vector<1x1x32xf32> to vector<1x32xf32>
    %127 = vector.broadcast %126 : vector<1x32xf32> to vector<16x32xf32>
    %128 = arith.addf %124, %127 : vector<16x32xf32>
    %129 = arith.addf %128, %22 : vector<16x32xf32>
    %c0_45 = arith.constant 0 : index
    %c0_46 = arith.constant 0 : index
    %c0_47 = arith.constant 0 : index
    %130 = vector.load %arg9[%c0_45, %c0_46, %c0_47] : memref<2x1x32xf32, #tpu.memory_space<vmem>>, vector<1x1x32xf32>
    %131 = vector.shape_cast %130 : vector<1x1x32xf32> to vector<1x32xf32>
    %c0_48 = arith.constant 0 : index
    %c0_49 = arith.constant 0 : index
    %c0_50 = arith.constant 0 : index
    %132 = vector.load %arg10[%c0_48, %c0_49, %c0_50] : memref<2x1x32xf32, #tpu.memory_space<vmem>>, vector<1x1x32xf32>
    %133 = vector.shape_cast %132 : vector<1x1x32xf32> to vector<1x32xf32>
    %cst_51 = arith.constant dense<0.000000e+00> : vector<16xf32>
    %134 = vector.multi_reduction <add>, %129, %cst_51 [1] : vector<16x32xf32> to vector<16xf32>
    %135 = vector.shape_cast %134 : vector<16xf32> to vector<16x1xf32>
    %cst_52 = arith.constant 3.200000e+01 : f32
    %136 = vector.broadcast %cst_52 : f32 to vector<16x1xf32>
    %137 = arith.divf %135, %136 : vector<16x1xf32>
    %138 = vector.broadcast %137 : vector<16x1xf32> to vector<16x32xf32>
    %139 = arith.subf %129, %138 : vector<16x32xf32>
    %140 = arith.mulf %139, %139 : vector<16x32xf32>
    %cst_53 = arith.constant dense<0.000000e+00> : vector<16xf32>
    %141 = vector.multi_reduction <add>, %140, %cst_53 [1] : vector<16x32xf32> to vector<16xf32>
    %142 = vector.shape_cast %141 : vector<16xf32> to vector<16x1xf32>
    %cst_54 = arith.constant 3.200000e+01 : f32
    %143 = vector.broadcast %cst_54 : f32 to vector<16x1xf32>
    %144 = arith.divf %142, %143 : vector<16x1xf32>
    %cst_55 = arith.constant 9.99999996E-13 : f32
    %145 = vector.broadcast %cst_55 : f32 to vector<16x1xf32>
    %146 = arith.addf %144, %145 : vector<16x1xf32>
    %147 = math.rsqrt %146 : vector<16x1xf32>
    %148 = vector.broadcast %147 : vector<16x1xf32> to vector<16x32xf32>
    %149 = arith.mulf %139, %148 : vector<16x32xf32>
    %150 = vector.broadcast %131 : vector<1x32xf32> to vector<16x32xf32>
    %151 = arith.mulf %149, %150 : vector<16x32xf32>
    %152 = vector.broadcast %133 : vector<1x32xf32> to vector<16x32xf32>
    %153 = arith.addf %151, %152 : vector<16x32xf32>
    %154 = arith.truncf %153 : vector<16x32xf32> to vector<16x32xbf16>
    %c0_56 = arith.constant 0 : index
    %c0_57 = arith.constant 0 : index
    %c0_58 = arith.constant 0 : index
    %155 = vector.load %arg11[%c0_56, %c0_57, %c0_58] : memref<2x32x64xbf16, #tpu.memory_space<vmem>>, vector<1x32x64xbf16>
    %156 = vector.shape_cast %155 : vector<1x32x64xbf16> to vector<32x64xbf16>
    %cst_59 = arith.constant dense<0.000000e+00> : vector<16x64xf32>
    %157 = tpu.matmul %154, %156, %cst_59 {dimension_numbers = #tpu.dot_dimension_numbers<[1], [0], [0], [1], [0, 0, 1, 1], [], []>} : vector<16x32xbf16>, vector<32x64xbf16>, vector<16x64xf32> -> vector<16x64xf32>
    %c0_60 = arith.constant 0 : index
    %c0_61 = arith.constant 0 : index
    %c0_62 = arith.constant 0 : index
    %158 = vector.load %arg12[%c0_60, %c0_61, %c0_62] : memref<2x1x64xf32, #tpu.memory_space<vmem>>, vector<1x1x64xf32>
    %159 = vector.shape_cast %158 : vector<1x1x64xf32> to vector<1x64xf32>
    %160 = vector.broadcast %159 : vector<1x64xf32> to vector<16x64xf32>
    %161 = arith.addf %157, %160 : vector<16x64xf32>
    %cst_63 = arith.constant 5.000000e-01 : f32
    %162 = vector.broadcast %cst_63 : f32 to vector<16x64xf32>
    %163 = arith.mulf %162, %161 : vector<16x64xf32>
    %cst_64 = arith.constant 0.707106769 : f32
    %164 = vector.broadcast %cst_64 : f32 to vector<16x64xf32>
    %165 = arith.mulf %161, %164 : vector<16x64xf32>
    %166 = math.absf %165 : vector<16x64xf32>
    %cst_65 = arith.constant 0.327591091 : f32
    %167 = vector.broadcast %cst_65 : f32 to vector<16x64xf32>
    %168 = arith.mulf %167, %166 : vector<16x64xf32>
    %cst_66 = arith.constant 1.000000e+00 : f32
    %169 = vector.broadcast %cst_66 : f32 to vector<16x64xf32>
    %170 = arith.addf %169, %168 : vector<16x64xf32>
    %cst_67 = arith.constant 1.000000e+00 : f32
    %171 = vector.broadcast %cst_67 : f32 to vector<16x64xf32>
    %172 = arith.divf %171, %170 : vector<16x64xf32>
    %cst_68 = arith.constant 1.06140542 : f32
    %173 = vector.broadcast %cst_68 : f32 to vector<16x64xf32>
    %174 = arith.mulf %172, %173 : vector<16x64xf32>
    %cst_69 = arith.constant -1.45315206 : f32
    %175 = vector.broadcast %cst_69 : f32 to vector<16x64xf32>
    %176 = arith.addf %175, %174 : vector<16x64xf32>
    %177 = arith.mulf %172, %176 : vector<16x64xf32>
    %cst_70 = arith.constant 1.42141378 : f32
    %178 = vector.broadcast %cst_70 : f32 to vector<16x64xf32>
    %179 = arith.addf %178, %177 : vector<16x64xf32>
    %180 = arith.mulf %172, %179 : vector<16x64xf32>
    %cst_71 = arith.constant -0.284496725 : f32
    %181 = vector.broadcast %cst_71 : f32 to vector<16x64xf32>
    %182 = arith.addf %181, %180 : vector<16x64xf32>
    %183 = arith.mulf %172, %182 : vector<16x64xf32>
    %cst_72 = arith.constant 0.254829586 : f32
    %184 = vector.broadcast %cst_72 : f32 to vector<16x64xf32>
    %185 = arith.addf %184, %183 : vector<16x64xf32>
    %186 = arith.mulf %172, %185 : vector<16x64xf32>
    %cst_73 = arith.constant 0.000000e+00 : f32
    %187 = vector.broadcast %cst_73 : f32 to vector<16x64xf32>
    %188 = arith.subf %187, %166 : vector<16x64xf32>
    %189 = arith.mulf %188, %166 : vector<16x64xf32>
    %190 = math.exp %189 : vector<16x64xf32>
    %191 = arith.mulf %186, %190 : vector<16x64xf32>
    %cst_74 = arith.constant 1.000000e+00 : f32
    %192 = vector.broadcast %cst_74 : f32 to vector<16x64xf32>
    %193 = arith.subf %192, %191 : vector<16x64xf32>
    %cst_75 = arith.constant 0.000000e+00 : f32
    %194 = vector.broadcast %cst_75 : f32 to vector<16x64xf32>
    %195 = arith.cmpf oge, %165, %194 : vector<16x64xf32>
    %cst_76 = arith.constant 0.000000e+00 : f32
    %196 = vector.broadcast %cst_76 : f32 to vector<16x64xf32>
    %197 = arith.subf %196, %193 : vector<16x64xf32>
    %198 = arith.select %195, %193, %197 : vector<16x64xi1>, vector<16x64xf32>
    %cst_77 = arith.constant 1.000000e+00 : f32
    %199 = vector.broadcast %cst_77 : f32 to vector<16x64xf32>
    %200 = arith.addf %199, %198 : vector<16x64xf32>
    %201 = arith.mulf %163, %200 : vector<16x64xf32>
    %202 = arith.truncf %201 : vector<16x64xf32> to vector<16x64xbf16>
    %c0_78 = arith.constant 0 : index
    %c0_79 = arith.constant 0 : index
    %c0_80 = arith.constant 0 : index
    %203 = vector.load %arg13[%c0_78, %c0_79, %c0_80] : memref<2x64x32xbf16, #tpu.memory_space<vmem>>, vector<1x64x32xbf16>
    %204 = vector.shape_cast %203 : vector<1x64x32xbf16> to vector<64x32xbf16>
    %cst_81 = arith.constant dense<0.000000e+00> : vector<16x32xf32>
    %205 = tpu.matmul %202, %204, %cst_81 {dimension_numbers = #tpu.dot_dimension_numbers<[1], [0], [0], [1], [0, 0, 1, 1], [], []>} : vector<16x64xbf16>, vector<64x32xbf16>, vector<16x32xf32> -> vector<16x32xf32>
    %c0_82 = arith.constant 0 : index
    %c0_83 = arith.constant 0 : index
    %c0_84 = arith.constant 0 : index
    %206 = vector.load %arg14[%c0_82, %c0_83, %c0_84] : memref<2x1x32xf32, #tpu.memory_space<vmem>>, vector<1x1x32xf32>
    %207 = vector.shape_cast %206 : vector<1x1x32xf32> to vector<1x32xf32>
    %208 = vector.broadcast %207 : vector<1x32xf32> to vector<16x32xf32>
    %209 = arith.addf %205, %208 : vector<16x32xf32>
    %210 = arith.addf %209, %153 : vector<16x32xf32>
    %c0_85 = arith.constant 0 : index
    %c0_86 = arith.constant 0 : index
    %c0_87 = arith.constant 0 : index
    %211 = vector.load %arg15[%c0_85, %c0_86, %c0_87] : memref<2x1x32xf32, #tpu.memory_space<vmem>>, vector<1x1x32xf32>
    %212 = vector.shape_cast %211 : vector<1x1x32xf32> to vector<1x32xf32>
    %c0_88 = arith.constant 0 : index
    %c0_89 = arith.constant 0 : index
    %c0_90 = arith.constant 0 : index
    %213 = vector.load %arg16[%c0_88, %c0_89, %c0_90] : memref<2x1x32xf32, #tpu.memory_space<vmem>>, vector<1x1x32xf32>
    %214 = vector.shape_cast %213 : vector<1x1x32xf32> to vector<1x32xf32>
    %cst_91 = arith.constant dense<0.000000e+00> : vector<16xf32>
    %215 = vector.multi_reduction <add>, %210, %cst_91 [1] : vector<16x32xf32> to vector<16xf32>
    %216 = vector.shape_cast %215 : vector<16xf32> to vector<16x1xf32>
    %cst_92 = arith.constant 3.200000e+01 : f32
    %217 = vector.broadcast %cst_92 : f32 to vector<16x1xf32>
    %218 = arith.divf %216, %217 : vector<16x1xf32>
    %219 = vector.broadcast %218 : vector<16x1xf32> to vector<16x32xf32>
    %220 = arith.subf %210, %219 : vector<16x32xf32>
    %221 = arith.mulf %220, %220 : vector<16x32xf32>
    %cst_93 = arith.constant dense<0.000000e+00> : vector<16xf32>
    %222 = vector.multi_reduction <add>, %221, %cst_93 [1] : vector<16x32xf32> to vector<16xf32>
    %223 = vector.shape_cast %222 : vector<16xf32> to vector<16x1xf32>
    %cst_94 = arith.constant 3.200000e+01 : f32
    %224 = vector.broadcast %cst_94 : f32 to vector<16x1xf32>
    %225 = arith.divf %223, %224 : vector<16x1xf32>
    %cst_95 = arith.constant 9.99999996E-13 : f32
    %226 = vector.broadcast %cst_95 : f32 to vector<16x1xf32>
    %227 = arith.addf %225, %226 : vector<16x1xf32>
    %228 = math.rsqrt %227 : vector<16x1xf32>
    %229 = vector.broadcast %228 : vector<16x1xf32> to vector<16x32xf32>
    %230 = arith.mulf %220, %229 : vector<16x32xf32>
    %231 = vector.broadcast %212 : vector<1x32xf32> to vector<16x32xf32>
    %232 = arith.mulf %230, %231 : vector<16x32xf32>
    %233 = vector.broadcast %214 : vector<1x32xf32> to vector<16x32xf32>
    %234 = arith.addf %232, %233 : vector<16x32xf32>
    %235 = arith.truncf %234 : vector<16x32xf32> to vector<16x32xbf16>
    %c1 = arith.constant 1 : index
    %c0_96 = arith.constant 0 : index
    %c0_97 = arith.constant 0 : index
    %236 = vector.load %arg5[%c1, %c0_96, %c0_97] : memref<2x32x96xbf16, #tpu.memory_space<vmem>>, vector<1x32x96xbf16>
    %237 = vector.shape_cast %236 : vector<1x32x96xbf16> to vector<32x96xbf16>
    %cst_98 = arith.constant dense<0.000000e+00> : vector<16x96xf32>
    %238 = tpu.matmul %235, %237, %cst_98 {dimension_numbers = #tpu.dot_dimension_numbers<[1], [0], [0], [1], [0, 0, 1, 1], [], []>} : vector<16x32xbf16>, vector<32x96xbf16>, vector<16x96xf32> -> vector<16x96xf32>
    %c1_99 = arith.constant 1 : index
    %c0_100 = arith.constant 0 : index
    %c0_101 = arith.constant 0 : index
    %239 = vector.load %arg6[%c1_99, %c0_100, %c0_101] : memref<2x1x96xf32, #tpu.memory_space<vmem>>, vector<1x1x96xf32>
    %240 = vector.shape_cast %239 : vector<1x1x96xf32> to vector<1x96xf32>
    %241 = vector.broadcast %240 : vector<1x96xf32> to vector<16x96xf32>
    %242 = arith.addf %238, %241 : vector<16x96xf32>
    %243 = vector.extract_strided_slice %242 {offsets = [0, 0], sizes = [16, 8], strides = [1, 1]} : vector<16x96xf32> to vector<16x8xf32>
    %244 = arith.truncf %243 : vector<16x8xf32> to vector<16x8xbf16>
    %245 = vector.extract_strided_slice %242 {offsets = [0, 32], sizes = [16, 8], strides = [1, 1]} : vector<16x96xf32> to vector<16x8xf32>
    %246 = arith.truncf %245 : vector<16x8xf32> to vector<16x8xbf16>
    %247 = vector.extract_strided_slice %242 {offsets = [0, 64], sizes = [16, 8], strides = [1, 1]} : vector<16x96xf32> to vector<16x8xf32>
    %248 = arith.truncf %247 : vector<16x8xf32> to vector<16x8xbf16>
    %249 = tpu.transpose %246, [1, 0] : vector<16x8xbf16> -> vector<8x16xbf16>
    %cst_102 = arith.constant dense<0.000000e+00> : vector<16x16xf32>
    %250 = tpu.matmul %244, %249, %cst_102 {dimension_numbers = #tpu.dot_dimension_numbers<[1], [0], [0], [1], [0, 0, 1, 1], [], []>} : vector<16x8xbf16>, vector<8x16xbf16>, vector<16x16xf32> -> vector<16x16xf32>
    %cst_103 = arith.constant 0.353553385 : f32
    %251 = vector.broadcast %cst_103 : f32 to vector<16x16xf32>
    %252 = arith.mulf %250, %251 : vector<16x16xf32>
    %253 = arith.addf %252, %23 : vector<16x16xf32>
    %cst_104 = arith.constant dense<0xFF800000> : vector<16xf32>
    %254 = vector.multi_reduction <maximumf>, %253, %cst_104 [1] : vector<16x16xf32> to vector<16xf32>
    %255 = vector.shape_cast %254 : vector<16xf32> to vector<16x1xf32>
    %256 = vector.broadcast %255 : vector<16x1xf32> to vector<16x16xf32>
    %257 = arith.subf %253, %256 : vector<16x16xf32>
    %258 = math.exp %257 : vector<16x16xf32>
    %cst_105 = arith.constant dense<0.000000e+00> : vector<16xf32>
    %259 = vector.multi_reduction <add>, %258, %cst_105 [1] : vector<16x16xf32> to vector<16xf32>
    %260 = vector.shape_cast %259 : vector<16xf32> to vector<16x1xf32>
    %261 = vector.broadcast %260 : vector<16x1xf32> to vector<16x16xf32>
    %262 = arith.divf %258, %261 : vector<16x16xf32>
    %263 = arith.truncf %262 : vector<16x16xf32> to vector<16x16xbf16>
    %cst_106 = arith.constant dense<0.000000e+00> : vector<16x8xf32>
    %264 = tpu.matmul %263, %248, %cst_106 {dimension_numbers = #tpu.dot_dimension_numbers<[1], [0], [0], [1], [0, 0, 1, 1], [], []>} : vector<16x16xbf16>, vector<16x8xbf16>, vector<16x8xf32> -> vector<16x8xf32>
    %265 = vector.extract_strided_slice %242 {offsets = [0, 8], sizes = [16, 8], strides = [1, 1]} : vector<16x96xf32> to vector<16x8xf32>
    %266 = arith.truncf %265 : vector<16x8xf32> to vector<16x8xbf16>
    %267 = vector.extract_strided_slice %242 {offsets = [0, 40], sizes = [16, 8], strides = [1, 1]} : vector<16x96xf32> to vector<16x8xf32>
    %268 = arith.truncf %267 : vector<16x8xf32> to vector<16x8xbf16>
    %269 = vector.extract_strided_slice %242 {offsets = [0, 72], sizes = [16, 8], strides = [1, 1]} : vector<16x96xf32> to vector<16x8xf32>
    %270 = arith.truncf %269 : vector<16x8xf32> to vector<16x8xbf16>
    %271 = tpu.transpose %268, [1, 0] : vector<16x8xbf16> -> vector<8x16xbf16>
    %cst_107 = arith.constant dense<0.000000e+00> : vector<16x16xf32>
    %272 = tpu.matmul %266, %271, %cst_107 {dimension_numbers = #tpu.dot_dimension_numbers<[1], [0], [0], [1], [0, 0, 1, 1], [], []>} : vector<16x8xbf16>, vector<8x16xbf16>, vector<16x16xf32> -> vector<16x16xf32>
    %cst_108 = arith.constant 0.353553385 : f32
    %273 = vector.broadcast %cst_108 : f32 to vector<16x16xf32>
    %274 = arith.mulf %272, %273 : vector<16x16xf32>
    %275 = arith.addf %274, %23 : vector<16x16xf32>
    %cst_109 = arith.constant dense<0xFF800000> : vector<16xf32>
    %276 = vector.multi_reduction <maximumf>, %275, %cst_109 [1] : vector<16x16xf32> to vector<16xf32>
    %277 = vector.shape_cast %276 : vector<16xf32> to vector<16x1xf32>
    %278 = vector.broadcast %277 : vector<16x1xf32> to vector<16x16xf32>
    %279 = arith.subf %275, %278 : vector<16x16xf32>
    %280 = math.exp %279 : vector<16x16xf32>
    %cst_110 = arith.constant dense<0.000000e+00> : vector<16xf32>
    %281 = vector.multi_reduction <add>, %280, %cst_110 [1] : vector<16x16xf32> to vector<16xf32>
    %282 = vector.shape_cast %281 : vector<16xf32> to vector<16x1xf32>
    %283 = vector.broadcast %282 : vector<16x1xf32> to vector<16x16xf32>
    %284 = arith.divf %280, %283 : vector<16x16xf32>
    %285 = arith.truncf %284 : vector<16x16xf32> to vector<16x16xbf16>
    %cst_111 = arith.constant dense<0.000000e+00> : vector<16x8xf32>
    %286 = tpu.matmul %285, %270, %cst_111 {dimension_numbers = #tpu.dot_dimension_numbers<[1], [0], [0], [1], [0, 0, 1, 1], [], []>} : vector<16x16xbf16>, vector<16x8xbf16>, vector<16x8xf32> -> vector<16x8xf32>
    %287 = vector.extract_strided_slice %242 {offsets = [0, 16], sizes = [16, 8], strides = [1, 1]} : vector<16x96xf32> to vector<16x8xf32>
    %288 = arith.truncf %287 : vector<16x8xf32> to vector<16x8xbf16>
    %289 = vector.extract_strided_slice %242 {offsets = [0, 48], sizes = [16, 8], strides = [1, 1]} : vector<16x96xf32> to vector<16x8xf32>
    %290 = arith.truncf %289 : vector<16x8xf32> to vector<16x8xbf16>
    %291 = vector.extract_strided_slice %242 {offsets = [0, 80], sizes = [16, 8], strides = [1, 1]} : vector<16x96xf32> to vector<16x8xf32>
    %292 = arith.truncf %291 : vector<16x8xf32> to vector<16x8xbf16>
    %293 = tpu.transpose %290, [1, 0] : vector<16x8xbf16> -> vector<8x16xbf16>
    %cst_112 = arith.constant dense<0.000000e+00> : vector<16x16xf32>
    %294 = tpu.matmul %288, %293, %cst_112 {dimension_numbers = #tpu.dot_dimension_numbers<[1], [0], [0], [1], [0, 0, 1, 1], [], []>} : vector<16x8xbf16>, vector<8x16xbf16>, vector<16x16xf32> -> vector<16x16xf32>
    %cst_113 = arith.constant 0.353553385 : f32
    %295 = vector.broadcast %cst_113 : f32 to vector<16x16xf32>
    %296 = arith.mulf %294, %295 : vector<16x16xf32>
    %297 = arith.addf %296, %23 : vector<16x16xf32>
    %cst_114 = arith.constant dense<0xFF800000> : vector<16xf32>
    %298 = vector.multi_reduction <maximumf>, %297, %cst_114 [1] : vector<16x16xf32> to vector<16xf32>
    %299 = vector.shape_cast %298 : vector<16xf32> to vector<16x1xf32>
    %300 = vector.broadcast %299 : vector<16x1xf32> to vector<16x16xf32>
    %301 = arith.subf %297, %300 : vector<16x16xf32>
    %302 = math.exp %301 : vector<16x16xf32>
    %cst_115 = arith.constant dense<0.000000e+00> : vector<16xf32>
    %303 = vector.multi_reduction <add>, %302, %cst_115 [1] : vector<16x16xf32> to vector<16xf32>
    %304 = vector.shape_cast %303 : vector<16xf32> to vector<16x1xf32>
    %305 = vector.broadcast %304 : vector<16x1xf32> to vector<16x16xf32>
    %306 = arith.divf %302, %305 : vector<16x16xf32>
    %307 = arith.truncf %306 : vector<16x16xf32> to vector<16x16xbf16>
    %cst_116 = arith.constant dense<0.000000e+00> : vector<16x8xf32>
    %308 = tpu.matmul %307, %292, %cst_116 {dimension_numbers = #tpu.dot_dimension_numbers<[1], [0], [0], [1], [0, 0, 1, 1], [], []>} : vector<16x16xbf16>, vector<16x8xbf16>, vector<16x8xf32> -> vector<16x8xf32>
    %309 = vector.extract_strided_slice %242 {offsets = [0, 24], sizes = [16, 8], strides = [1, 1]} : vector<16x96xf32> to vector<16x8xf32>
    %310 = arith.truncf %309 : vector<16x8xf32> to vector<16x8xbf16>
    %311 = vector.extract_strided_slice %242 {offsets = [0, 56], sizes = [16, 8], strides = [1, 1]} : vector<16x96xf32> to vector<16x8xf32>
    %312 = arith.truncf %311 : vector<16x8xf32> to vector<16x8xbf16>
    %313 = vector.extract_strided_slice %242 {offsets = [0, 88], sizes = [16, 8], strides = [1, 1]} : vector<16x96xf32> to vector<16x8xf32>
    %314 = arith.truncf %313 : vector<16x8xf32> to vector<16x8xbf16>
    %315 = tpu.transpose %312, [1, 0] : vector<16x8xbf16> -> vector<8x16xbf16>
    %cst_117 = arith.constant dense<0.000000e+00> : vector<16x16xf32>
    %316 = tpu.matmul %310, %315, %cst_117 {dimension_numbers = #tpu.dot_dimension_numbers<[1], [0], [0], [1], [0, 0, 1, 1], [], []>} : vector<16x8xbf16>, vector<8x16xbf16>, vector<16x16xf32> -> vector<16x16xf32>
    %cst_118 = arith.constant 0.353553385 : f32
    %317 = vector.broadcast %cst_118 : f32 to vector<16x16xf32>
    %318 = arith.mulf %316, %317 : vector<16x16xf32>
    %319 = arith.addf %318, %23 : vector<16x16xf32>
    %cst_119 = arith.constant dense<0xFF800000> : vector<16xf32>
    %320 = vector.multi_reduction <maximumf>, %319, %cst_119 [1] : vector<16x16xf32> to vector<16xf32>
    %321 = vector.shape_cast %320 : vector<16xf32> to vector<16x1xf32>
    %322 = vector.broadcast %321 : vector<16x1xf32> to vector<16x16xf32>
    %323 = arith.subf %319, %322 : vector<16x16xf32>
    %324 = math.exp %323 : vector<16x16xf32>
    %cst_120 = arith.constant dense<0.000000e+00> : vector<16xf32>
    %325 = vector.multi_reduction <add>, %324, %cst_120 [1] : vector<16x16xf32> to vector<16xf32>
    %326 = vector.shape_cast %325 : vector<16xf32> to vector<16x1xf32>
    %327 = vector.broadcast %326 : vector<16x1xf32> to vector<16x16xf32>
    %328 = arith.divf %324, %327 : vector<16x16xf32>
    %329 = arith.truncf %328 : vector<16x16xf32> to vector<16x16xbf16>
    %cst_121 = arith.constant dense<0.000000e+00> : vector<16x8xf32>
    %330 = tpu.matmul %329, %314, %cst_121 {dimension_numbers = #tpu.dot_dimension_numbers<[1], [0], [0], [1], [0, 0, 1, 1], [], []>} : vector<16x16xbf16>, vector<16x8xbf16>, vector<16x8xf32> -> vector<16x8xf32>
    %331 = tpu.concatenate %264, %286, %308, %330 in 1 : vector<16x8xf32>, vector<16x8xf32>, vector<16x8xf32>, vector<16x8xf32> -> vector<16x32xf32>
    %332 = arith.truncf %331 : vector<16x32xf32> to vector<16x32xbf16>
    %c1_122 = arith.constant 1 : index
    %c0_123 = arith.constant 0 : index
    %c0_124 = arith.constant 0 : index
    %333 = vector.load %arg7[%c1_122, %c0_123, %c0_124] : memref<2x32x32xbf16, #tpu.memory_space<vmem>>, vector<1x32x32xbf16>
    %334 = vector.shape_cast %333 : vector<1x32x32xbf16> to vector<32x32xbf16>
    %cst_125 = arith.constant dense<0.000000e+00> : vector<16x32xf32>
    %335 = tpu.matmul %332, %334, %cst_125 {dimension_numbers = #tpu.dot_dimension_numbers<[1], [0], [0], [1], [0, 0, 1, 1], [], []>} : vector<16x32xbf16>, vector<32x32xbf16>, vector<16x32xf32> -> vector<16x32xf32>
    %c1_126 = arith.constant 1 : index
    %c0_127 = arith.constant 0 : index
    %c0_128 = arith.constant 0 : index
    %336 = vector.load %arg8[%c1_126, %c0_127, %c0_128] : memref<2x1x32xf32, #tpu.memory_space<vmem>>, vector<1x1x32xf32>
    %337 = vector.shape_cast %336 : vector<1x1x32xf32> to vector<1x32xf32>
    %338 = vector.broadcast %337 : vector<1x32xf32> to vector<16x32xf32>
    %339 = arith.addf %335, %338 : vector<16x32xf32>
    %340 = arith.addf %339, %234 : vector<16x32xf32>
    %c1_129 = arith.constant 1 : index
    %c0_130 = arith.constant 0 : index
    %c0_131 = arith.constant 0 : index
    %341 = vector.load %arg9[%c1_129, %c0_130, %c0_131] : memref<2x1x32xf32, #tpu.memory_space<vmem>>, vector<1x1x32xf32>
    %342 = vector.shape_cast %341 : vector<1x1x32xf32> to vector<1x32xf32>
    %c1_132 = arith.constant 1 : index
    %c0_133 = arith.constant 0 : index
    %c0_134 = arith.constant 0 : index
    %343 = vector.load %arg10[%c1_132, %c0_133, %c0_134] : memref<2x1x32xf32, #tpu.memory_space<vmem>>, vector<1x1x32xf32>
    %344 = vector.shape_cast %343 : vector<1x1x32xf32> to vector<1x32xf32>
    %cst_135 = arith.constant dense<0.000000e+00> : vector<16xf32>
    %345 = vector.multi_reduction <add>, %340, %cst_135 [1] : vector<16x32xf32> to vector<16xf32>
    %346 = vector.shape_cast %345 : vector<16xf32> to vector<16x1xf32>
    %cst_136 = arith.constant 3.200000e+01 : f32
    %347 = vector.broadcast %cst_136 : f32 to vector<16x1xf32>
    %348 = arith.divf %346, %347 : vector<16x1xf32>
    %349 = vector.broadcast %348 : vector<16x1xf32> to vector<16x32xf32>
    %350 = arith.subf %340, %349 : vector<16x32xf32>
    %351 = arith.mulf %350, %350 : vector<16x32xf32>
    %cst_137 = arith.constant dense<0.000000e+00> : vector<16xf32>
    %352 = vector.multi_reduction <add>, %351, %cst_137 [1] : vector<16x32xf32> to vector<16xf32>
    %353 = vector.shape_cast %352 : vector<16xf32> to vector<16x1xf32>
    %cst_138 = arith.constant 3.200000e+01 : f32
    %354 = vector.broadcast %cst_138 : f32 to vector<16x1xf32>
    %355 = arith.divf %353, %354 : vector<16x1xf32>
    %cst_139 = arith.constant 9.99999996E-13 : f32
    %356 = vector.broadcast %cst_139 : f32 to vector<16x1xf32>
    %357 = arith.addf %355, %356 : vector<16x1xf32>
    %358 = math.rsqrt %357 : vector<16x1xf32>
    %359 = vector.broadcast %358 : vector<16x1xf32> to vector<16x32xf32>
    %360 = arith.mulf %350, %359 : vector<16x32xf32>
    %361 = vector.broadcast %342 : vector<1x32xf32> to vector<16x32xf32>
    %362 = arith.mulf %360, %361 : vector<16x32xf32>
    %363 = vector.broadcast %344 : vector<1x32xf32> to vector<16x32xf32>
    %364 = arith.addf %362, %363 : vector<16x32xf32>
    %365 = arith.truncf %364 : vector<16x32xf32> to vector<16x32xbf16>
    %c1_140 = arith.constant 1 : index
    %c0_141 = arith.constant 0 : index
    %c0_142 = arith.constant 0 : index
    %366 = vector.load %arg11[%c1_140, %c0_141, %c0_142] : memref<2x32x64xbf16, #tpu.memory_space<vmem>>, vector<1x32x64xbf16>
    %367 = vector.shape_cast %366 : vector<1x32x64xbf16> to vector<32x64xbf16>
    %cst_143 = arith.constant dense<0.000000e+00> : vector<16x64xf32>
    %368 = tpu.matmul %365, %367, %cst_143 {dimension_numbers = #tpu.dot_dimension_numbers<[1], [0], [0], [1], [0, 0, 1, 1], [], []>} : vector<16x32xbf16>, vector<32x64xbf16>, vector<16x64xf32> -> vector<16x64xf32>
    %c1_144 = arith.constant 1 : index
    %c0_145 = arith.constant 0 : index
    %c0_146 = arith.constant 0 : index
    %369 = vector.load %arg12[%c1_144, %c0_145, %c0_146] : memref<2x1x64xf32, #tpu.memory_space<vmem>>, vector<1x1x64xf32>
    %370 = vector.shape_cast %369 : vector<1x1x64xf32> to vector<1x64xf32>
    %371 = vector.broadcast %370 : vector<1x64xf32> to vector<16x64xf32>
    %372 = arith.addf %368, %371 : vector<16x64xf32>
    %cst_147 = arith.constant 5.000000e-01 : f32
    %373 = vector.broadcast %cst_147 : f32 to vector<16x64xf32>
    %374 = arith.mulf %373, %372 : vector<16x64xf32>
    %cst_148 = arith.constant 0.707106769 : f32
    %375 = vector.broadcast %cst_148 : f32 to vector<16x64xf32>
    %376 = arith.mulf %372, %375 : vector<16x64xf32>
    %377 = math.absf %376 : vector<16x64xf32>
    %cst_149 = arith.constant 0.327591091 : f32
    %378 = vector.broadcast %cst_149 : f32 to vector<16x64xf32>
    %379 = arith.mulf %378, %377 : vector<16x64xf32>
    %cst_150 = arith.constant 1.000000e+00 : f32
    %380 = vector.broadcast %cst_150 : f32 to vector<16x64xf32>
    %381 = arith.addf %380, %379 : vector<16x64xf32>
    %cst_151 = arith.constant 1.000000e+00 : f32
    %382 = vector.broadcast %cst_151 : f32 to vector<16x64xf32>
    %383 = arith.divf %382, %381 : vector<16x64xf32>
    %cst_152 = arith.constant 1.06140542 : f32
    %384 = vector.broadcast %cst_152 : f32 to vector<16x64xf32>
    %385 = arith.mulf %383, %384 : vector<16x64xf32>
    %cst_153 = arith.constant -1.45315206 : f32
    %386 = vector.broadcast %cst_153 : f32 to vector<16x64xf32>
    %387 = arith.addf %386, %385 : vector<16x64xf32>
    %388 = arith.mulf %383, %387 : vector<16x64xf32>
    %cst_154 = arith.constant 1.42141378 : f32
    %389 = vector.broadcast %cst_154 : f32 to vector<16x64xf32>
    %390 = arith.addf %389, %388 : vector<16x64xf32>
    %391 = arith.mulf %383, %390 : vector<16x64xf32>
    %cst_155 = arith.constant -0.284496725 : f32
    %392 = vector.broadcast %cst_155 : f32 to vector<16x64xf32>
    %393 = arith.addf %392, %391 : vector<16x64xf32>
    %394 = arith.mulf %383, %393 : vector<16x64xf32>
    %cst_156 = arith.constant 0.254829586 : f32
    %395 = vector.broadcast %cst_156 : f32 to vector<16x64xf32>
    %396 = arith.addf %395, %394 : vector<16x64xf32>
    %397 = arith.mulf %383, %396 : vector<16x64xf32>
    %cst_157 = arith.constant 0.000000e+00 : f32
    %398 = vector.broadcast %cst_157 : f32 to vector<16x64xf32>
    %399 = arith.subf %398, %377 : vector<16x64xf32>
    %400 = arith.mulf %399, %377 : vector<16x64xf32>
    %401 = math.exp %400 : vector<16x64xf32>
    %402 = arith.mulf %397, %401 : vector<16x64xf32>
    %cst_158 = arith.constant 1.000000e+00 : f32
    %403 = vector.broadcast %cst_158 : f32 to vector<16x64xf32>
    %404 = arith.subf %403, %402 : vector<16x64xf32>
    %cst_159 = arith.constant 0.000000e+00 : f32
    %405 = vector.broadcast %cst_159 : f32 to vector<16x64xf32>
    %406 = arith.cmpf oge, %376, %405 : vector<16x64xf32>
    %cst_160 = arith.constant 0.000000e+00 : f32
    %407 = vector.broadcast %cst_160 : f32 to vector<16x64xf32>
    %408 = arith.subf %407, %404 : vector<16x64xf32>
    %409 = arith.select %406, %404, %408 : vector<16x64xi1>, vector<16x64xf32>
    %cst_161 = arith.constant 1.000000e+00 : f32
    %410 = vector.broadcast %cst_161 : f32 to vector<16x64xf32>
    %411 = arith.addf %410, %409 : vector<16x64xf32>
    %412 = arith.mulf %374, %411 : vector<16x64xf32>
    %413 = arith.truncf %412 : vector<16x64xf32> to vector<16x64xbf16>
    %c1_162 = arith.constant 1 : index
    %c0_163 = arith.constant 0 : index
    %c0_164 = arith.constant 0 : index
    %414 = vector.load %arg13[%c1_162, %c0_163, %c0_164] : memref<2x64x32xbf16, #tpu.memory_space<vmem>>, vector<1x64x32xbf16>
    %415 = vector.shape_cast %414 : vector<1x64x32xbf16> to vector<64x32xbf16>
    %cst_165 = arith.constant dense<0.000000e+00> : vector<16x32xf32>
    %416 = tpu.matmul %413, %415, %cst_165 {dimension_numbers = #tpu.dot_dimension_numbers<[1], [0], [0], [1], [0, 0, 1, 1], [], []>} : vector<16x64xbf16>, vector<64x32xbf16>, vector<16x32xf32> -> vector<16x32xf32>
    %c1_166 = arith.constant 1 : index
    %c0_167 = arith.constant 0 : index
    %c0_168 = arith.constant 0 : index
    %417 = vector.load %arg14[%c1_166, %c0_167, %c0_168] : memref<2x1x32xf32, #tpu.memory_space<vmem>>, vector<1x1x32xf32>
    %418 = vector.shape_cast %417 : vector<1x1x32xf32> to vector<1x32xf32>
    %419 = vector.broadcast %418 : vector<1x32xf32> to vector<16x32xf32>
    %420 = arith.addf %416, %419 : vector<16x32xf32>
    %421 = arith.addf %420, %364 : vector<16x32xf32>
    %c1_169 = arith.constant 1 : index
    %c0_170 = arith.constant 0 : index
    %c0_171 = arith.constant 0 : index
    %422 = vector.load %arg15[%c1_169, %c0_170, %c0_171] : memref<2x1x32xf32, #tpu.memory_space<vmem>>, vector<1x1x32xf32>
    %423 = vector.shape_cast %422 : vector<1x1x32xf32> to vector<1x32xf32>
    %c1_172 = arith.constant 1 : index
    %c0_173 = arith.constant 0 : index
    %c0_174 = arith.constant 0 : index
    %424 = vector.load %arg16[%c1_172, %c0_173, %c0_174] : memref<2x1x32xf32, #tpu.memory_space<vmem>>, vector<1x1x32xf32>
    %425 = vector.shape_cast %424 : vector<1x1x32xf32> to vector<1x32xf32>
    %cst_175 = arith.constant dense<0.000000e+00> : vector<16xf32>
    %426 = vector.multi_reduction <add>, %421, %cst_175 [1] : vector<16x32xf32> to vector<16xf32>
    %427 = vector.shape_cast %426 : vector<16xf32> to vector<16x1xf32>
    %cst_176 = arith.constant 3.200000e+01 : f32
    %428 = vector.broadcast %cst_176 : f32 to vector<16x1xf32>
    %429 = arith.divf %427, %428 : vector<16x1xf32>
    %430 = vector.broadcast %429 : vector<16x1xf32> to vector<16x32xf32>
    %431 = arith.subf %421, %430 : vector<16x32xf32>
    %432 = arith.mulf %431, %431 : vector<16x32xf32>
    %cst_177 = arith.constant dense<0.000000e+00> : vector<16xf32>
    %433 = vector.multi_reduction <add>, %432, %cst_177 [1] : vector<16x32xf32> to vector<16xf32>
    %434 = vector.shape_cast %433 : vector<16xf32> to vector<16x1xf32>
    %cst_178 = arith.constant 3.200000e+01 : f32
    %435 = vector.broadcast %cst_178 : f32 to vector<16x1xf32>
    %436 = arith.divf %434, %435 : vector<16x1xf32>
    %cst_179 = arith.constant 9.99999996E-13 : f32
    %437 = vector.broadcast %cst_179 : f32 to vector<16x1xf32>
    %438 = arith.addf %436, %437 : vector<16x1xf32>
    %439 = math.rsqrt %438 : vector<16x1xf32>
    %440 = vector.broadcast %439 : vector<16x1xf32> to vector<16x32xf32>
    %441 = arith.mulf %431, %440 : vector<16x32xf32>
    %442 = vector.broadcast %423 : vector<1x32xf32> to vector<16x32xf32>
    %443 = arith.mulf %441, %442 : vector<16x32xf32>
    %444 = vector.broadcast %425 : vector<1x32xf32> to vector<16x32xf32>
    %445 = arith.addf %443, %444 : vector<16x32xf32>
    %446 = tpu.iota {dimensions = array<i32: 0>} : vector<2x16xi32>
    %447 = tpu.iota {dimensions = array<i32: 1>} : vector<2x16xi32>
    %c8_i32 = arith.constant 8 : i32
    %448 = vector.broadcast %c8_i32 : i32 to vector<2x16xi32>
    %449 = arith.muli %446, %448 : vector<2x16xi32>
    %450 = arith.cmpi eq, %447, %449 : vector<2x16xi32>
    %451 = arith.extui %450 : vector<2x16xi1> to vector<2x16xi32>
    %452 = arith.sitofp %451 : vector<2x16xi32> to vector<2x16xf32>
    %453 = arith.truncf %452 : vector<2x16xf32> to vector<2x16xbf16>
    %454 = arith.truncf %445 : vector<16x32xf32> to vector<16x32xbf16>
    %cst_180 = arith.constant dense<0.000000e+00> : vector<2x32xf32>
    %455 = tpu.matmul %453, %454, %cst_180 {dimension_numbers = #tpu.dot_dimension_numbers<[1], [0], [0], [1], [0, 0, 1, 1], [], []>} : vector<2x16xbf16>, vector<16x32xbf16>, vector<2x32xf32> -> vector<2x32xf32>
    %456 = arith.truncf %455 : vector<2x32xf32> to vector<2x32xbf16>
    %c0_181 = arith.constant 0 : index
    %c0_182 = arith.constant 0 : index
    %457 = vector.load %arg17[%c0_181, %c0_182] : memref<32x32xbf16, #tpu.memory_space<vmem>>, vector<32x32xbf16>
    %cst_183 = arith.constant dense<0.000000e+00> : vector<2x32xf32>
    %458 = tpu.matmul %456, %457, %cst_183 {dimension_numbers = #tpu.dot_dimension_numbers<[1], [0], [0], [1], [0, 0, 1, 1], [], []>} : vector<2x32xbf16>, vector<32x32xbf16>, vector<2x32xf32> -> vector<2x32xf32>
    %c0_184 = arith.constant 0 : index
    %c0_185 = arith.constant 0 : index
    %459 = vector.load %arg18[%c0_184, %c0_185] : memref<1x32xf32, #tpu.memory_space<vmem>>, vector<1x32xf32>
    %460 = vector.broadcast %459 : vector<1x32xf32> to vector<2x32xf32>
    %461 = arith.addf %458, %460 : vector<2x32xf32>
    %462 = math.tanh %461 : vector<2x32xf32>
    %463 = arith.truncf %462 : vector<2x32xf32> to vector<2x32xbf16>
    %c0_186 = arith.constant 0 : index
    %c0_187 = arith.constant 0 : index
    %464 = vector.load %arg19[%c0_186, %c0_187] : memref<32x5xbf16, #tpu.memory_space<vmem>>, vector<32x5xbf16>
    %cst_188 = arith.constant dense<0.000000e+00> : vector<2x5xf32>
    %465 = tpu.matmul %463, %464, %cst_188 {dimension_numbers = #tpu.dot_dimension_numbers<[1], [0], [0], [1], [0, 0, 1, 1], [], []>} : vector<2x32xbf16>, vector<32x5xbf16>, vector<2x5xf32> -> vector<2x5xf32>
    %c0_189 = arith.constant 0 : index
    %c0_190 = arith.constant 0 : index
    %466 = vector.load %arg20[%c0_189, %c0_190] : memref<1x5xf32, #tpu.memory_space<vmem>>, vector<1x5xf32>
    %467 = vector.broadcast %466 : vector<1x5xf32> to vector<2x5xf32>
    %468 = arith.addf %465, %467 : vector<2x5xf32>
    %c0_191 = arith.constant 0 : index
    %c0_192 = arith.constant 0 : index
    %469 = vector.load %arg21[%c0_191, %c0_192] : memref<2x5xf32, #tpu.memory_space<vmem>>, vector<2x5xf32>
    tpu.vector_store %arg21[%c0_191, %c0_192], %468 {strides = array<i32>} : memref<2x5xf32, #tpu.memory_space<vmem>>, vector<2x5xf32>,
    return
  }
  func.func @transform_0(%arg0: i32) -> (i32, i32) {
    %c0_i32 = arith.constant 0 : i32
    %c0_i32_0 = arith.constant 0 : i32
    %c0_i32_1 = arith.constant 0 : i32
    return %c0_i32, %c0_i32_0 : i32, i32
  }
  func.func @transform_1(%arg0: i32) -> (i32, i32) {
    %c0_i32 = arith.constant 0 : i32
    %c0_i32_0 = arith.constant 0 : i32
    %c0_i32_1 = arith.constant 0 : i32
    return %c0_i32, %c0_i32_0 : i32, i32
  }
  func.func @transform_2(%arg0: i32) -> (i32, i32) {
    %c0_i32 = arith.constant 0 : i32
    %c0_i32_0 = arith.constant 0 : i32
    %c0_i32_1 = arith.constant 0 : i32
    return %c0_i32, %c0_i32_0 : i32, i32
  }
  func.func @transform_3(%arg0: i32) -> (i32, i32) {
    %c0_i32 = arith.constant 0 : i32
    %c0_i32_0 = arith.constant 0 : i32
    %c0_i32_1 = arith.constant 0 : i32
    return %c0_i32, %c0_i32_0 : i32, i32
  }
  func.func @transform_4(%arg0: i32) -> (i32, i32, i32) {
    %c0_i32 = arith.constant 0 : i32
    %c0_i32_0 = arith.constant 0 : i32
    %c0_i32_1 = arith.constant 0 : i32
    %c0_i32_2 = arith.constant 0 : i32
    return %c0_i32, %c0_i32_0, %c0_i32_1 : i32, i32, i32
  }
  func.func @transform_5(%arg0: i32) -> (i32, i32, i32) {
    %c0_i32 = arith.constant 0 : i32
    %c0_i32_0 = arith.constant 0 : i32
    %c0_i32_1 = arith.constant 0 : i32
    %c0_i32_2 = arith.constant 0 : i32
    return %c0_i32, %c0_i32_0, %c0_i32_1 : i32, i32, i32
  }
  func.func @transform_6(%arg0: i32) -> (i32, i32, i32) {
    %c0_i32 = arith.constant 0 : i32
    %c0_i32_0 = arith.constant 0 : i32
    %c0_i32_1 = arith.constant 0 : i32
    %c0_i32_2 = arith.constant 0 : i32
    return %c0_i32, %c0_i32_0, %c0_i32_1 : i32, i32, i32
  }
  func.func @transform_7(%arg0: i32) -> (i32, i32, i32) {
    %c0_i32 = arith.constant 0 : i32
    %c0_i32_0 = arith.constant 0 : i32
    %c0_i32_1 = arith.constant 0 : i32
    %c0_i32_2 = arith.constant 0 : i32
    return %c0_i32, %c0_i32_0, %c0_i32_1 : i32, i32, i32
  }
  func.func @transform_8(%arg0: i32) -> (i32, i32, i32) {
    %c0_i32 = arith.constant 0 : i32
    %c0_i32_0 = arith.constant 0 : i32
    %c0_i32_1 = arith.constant 0 : i32
    %c0_i32_2 = arith.constant 0 : i32
    return %c0_i32, %c0_i32_0, %c0_i32_1 : i32, i32, i32
  }
  func.func @transform_9(%arg0: i32) -> (i32, i32, i32) {
    %c0_i32 = arith.constant 0 : i32
    %c0_i32_0 = arith.constant 0 : i32
    %c0_i32_1 = arith.constant 0 : i32
    %c0_i32_2 = arith.constant 0 : i32
    return %c0_i32, %c0_i32_0, %c0_i32_1 : i32, i32, i32
  }
  func.func @transform_10(%arg0: i32) -> (i32, i32, i32) {
    %c0_i32 = arith.constant 0 : i32
    %c0_i32_0 = arith.constant 0 : i32
    %c0_i32_1 = arith.constant 0 : i32
    %c0_i32_2 = arith.constant 0 : i32
    return %c0_i32, %c0_i32_0, %c0_i32_1 : i32, i32, i32
  }
  func.func @transform_11(%arg0: i32) -> (i32, i32, i32) {
    %c0_i32 = arith.constant 0 : i32
    %c0_i32_0 = arith.constant 0 : i32
    %c0_i32_1 = arith.constant 0 : i32
    %c0_i32_2 = arith.constant 0 : i32
    return %c0_i32, %c0_i32_0, %c0_i32_1 : i32, i32, i32
  }
  func.func @transform_12(%arg0: i32) -> (i32, i32, i32) {
    %c0_i32 = arith.constant 0 : i32
    %c0_i32_0 = arith.constant 0 : i32
    %c0_i32_1 = arith.constant 0 : i32
    %c0_i32_2 = arith.constant 0 : i32
    return %c0_i32, %c0_i32_0, %c0_i32_1 : i32, i32, i32
  }
  func.func @transform_13(%arg0: i32) -> (i32, i32, i32) {
    %c0_i32 = arith.constant 0 : i32
    %c0_i32_0 = arith.constant 0 : i32
    %c0_i32_1 = arith.constant 0 : i32
    %c0_i32_2 = arith.constant 0 : i32
    return %c0_i32, %c0_i32_0, %c0_i32_1 : i32, i32, i32
  }
  func.func @transform_14(%arg0: i32) -> (i32, i32, i32) {
    %c0_i32 = arith.constant 0 : i32
    %c0_i32_0 = arith.constant 0 : i32
    %c0_i32_1 = arith.constant 0 : i32
    %c0_i32_2 = arith.constant 0 : i32
    return %c0_i32, %c0_i32_0, %c0_i32_1 : i32, i32, i32
  }
  func.func @transform_15(%arg0: i32) -> (i32, i32, i32) {
    %c0_i32 = arith.constant 0 : i32
    %c0_i32_0 = arith.constant 0 : i32
    %c0_i32_1 = arith.constant 0 : i32
    %c0_i32_2 = arith.constant 0 : i32
    return %c0_i32, %c0_i32_0, %c0_i32_1 : i32, i32, i32
  }
  func.func @transform_16(%arg0: i32) -> (i32, i32) {
    %c0_i32 = arith.constant 0 : i32
    %c0_i32_0 = arith.constant 0 : i32
    %c0_i32_1 = arith.constant 0 : i32
    return %c0_i32, %c0_i32_0 : i32, i32
  }
  func.func @transform_17(%arg0: i32) -> (i32, i32) {
    %c0_i32 = arith.constant 0 : i32
    %c0_i32_0 = arith.constant 0 : i32
    %c0_i32_1 = arith.constant 0 : i32
    return %c0_i32, %c0_i32_0 : i32, i32
  }
  func.func @transform_18(%arg0: i32) -> (i32, i32) {
    %c0_i32 = arith.constant 0 : i32
    %c0_i32_0 = arith.constant 0 : i32
    %c0_i32_1 = arith.constant 0 : i32
    return %c0_i32, %c0_i32_0 : i32, i32
  }
  func.func @transform_19(%arg0: i32) -> (i32, i32) {
    %c0_i32 = arith.constant 0 : i32
    %c0_i32_0 = arith.constant 0 : i32
    %c0_i32_1 = arith.constant 0 : i32
    return %c0_i32, %c0_i32_0 : i32, i32
  }
  func.func @transform_20(%arg0: i32) -> (i32, i32) {
    %c0_i32 = arith.constant 0 : i32
    %c0_i32_0 = arith.constant 0 : i32
    %c0_i32_1 = arith.constant 0 : i32
    return %c0_i32, %c0_i32_0 : i32, i32
  }
}

</mosaic_0001>

<llo_original>
// kernel: patent_classification_forward.1
$region0: #{patent_classification_forward.1}
  #allocation0 [shape = 'u32[]', space=smem, size = 0x4, offset = 0x4, fixed_abs, tag = 'smem constant byte address 0x4 - core index']
  #allocation1 [shape = 'u32[144,128]{1,0:T(1,128)}', space=vmem, size = 0x12000, scoped, tag = 'internal scratch']
  %s0 = inlined_call_operand.vmem [shape: f32[16,32], index: 0, kind: input, shape index: {}]
  %s1 = inlined_call_operand.vmem [shape: f32[16,16], index: 1, kind: input, shape index: {}]
  %s2 = inlined_call_operand.vmem [shape: f32[1,32], index: 2, kind: input, shape index: {}]
  %s3 = inlined_call_operand.vmem [shape: f32[1,32], index: 3, kind: input, shape index: {}]
  %s4 = inlined_call_operand.vmem [shape: bf16[2,32,96], index: 4, kind: input, shape index: {}]
  %s5 = inlined_call_operand.vmem [shape: f32[2,1,96], index: 5, kind: input, shape index: {}]
  %s6 = inlined_call_operand.vmem [shape: bf16[2,32,32], index: 6, kind: input, shape index: {}]
  %s7 = inlined_call_operand.vmem [shape: f32[2,1,32], index: 7, kind: input, shape index: {}]
  %s8 = inlined_call_operand.vmem [shape: f32[2,1,32], index: 8, kind: input, shape index: {}]
  %s9 = inlined_call_operand.vmem [shape: f32[2,1,32], index: 9, kind: input, shape index: {}]
  %s10 = inlined_call_operand.vmem [shape: bf16[2,32,64], index: 10, kind: input, shape index: {}]
  %s11 = inlined_call_operand.vmem [shape: f32[2,1,64], index: 11, kind: input, shape index: {}]
  %s12 = inlined_call_operand.vmem [shape: bf16[2,64,32], index: 12, kind: input, shape index: {}]
  %s13 = inlined_call_operand.vmem [shape: f32[2,1,32], index: 13, kind: input, shape index: {}]
  %s14 = inlined_call_operand.vmem [shape: f32[2,1,32], index: 14, kind: input, shape index: {}]
  %s15 = inlined_call_operand.vmem [shape: f32[2,1,32], index: 15, kind: input, shape index: {}]
  %s16 = inlined_call_operand.vmem [shape: bf16[32,32], index: 16, kind: input, shape index: {}]
  %s17 = inlined_call_operand.vmem [shape: f32[1,32], index: 17, kind: input, shape index: {}]
  %s18 = inlined_call_operand.vmem [shape: bf16[32,5], index: 18, kind: input, shape index: {}]
  %s19 = inlined_call_operand.vmem [shape: f32[1,5], index: 19, kind: input, shape index: {}]
  %s20 = inlined_call_operand.hbm [shape: f32[2,5], index: 20, kind: output, shape index: {}]
  %s21 = sld [smem:[#allocation0]]
  $region90: #{patent_classification_forward.1} parent=0
    _
  %s23 = ssub.s32 1, %s21
  %s24 = scalar_select 0, %s23, %s21
  $region1: #{patent_classification_forward.1} parent=0
    #allocation2 [shape = 'u8[1024]{0}', space=vmem, size = 0x400, scoped, tag = 'output window, operand 0, single buffered']
    #allocation3 [shape = 's32[1]{0}', space=sflag, size = 0x4, scoped, tag = 'scoped memory for patent_classification_forward.1']
    %25 = vsyncpa [#allocation3], 0
    // Predicated region
    $region2: #{patent_classification_forward.1} parent=1 // pred_check
      _
    $region3: #{patent_classification_forward.1} parent=1 // pred_check_branch
      %27 = sbr.rel (0) target = $region5
    $region4: #{patent_classification_forward.1} parent=1 // pred_region
      _
    $region5: #{patent_classification_forward.1} parent=1 // pred_fallthru
      _
    // Predicated region
    $region6: #{patent_classification_forward.1} parent=1 // pred_check
      _
    $region7: #{patent_classification_forward.1} parent=1 // pred_check_branch
      %29 = sbr.rel (0) target = $region9
    $region8: #{patent_classification_forward.1} parent=1 // pred_region
      _
    $region9: #{patent_classification_forward.1} parent=1 // pred_fallthru
      _
    // Predicated region
    $region10: #{patent_classification_forward.1} parent=1 // pred_check
      _
    $region11: #{patent_classification_forward.1} parent=1 // pred_check_branch
      %31 = sbr.rel (0) target = $region13
    $region12: #{patent_classification_forward.1} parent=1 // pred_region
      _
    $region13: #{patent_classification_forward.1} parent=1 // pred_fallthru
      _
    // Predicated region
    $region14: #{patent_classification_forward.1} parent=1 // pred_check
      _
    $region15: #{patent_classification_forward.1} parent=1 // pred_check_branch
      %33 = sbr.rel (0) target = $region17
    $region16: #{patent_classification_forward.1} parent=1 // pred_region
      _
    $region17: #{patent_classification_forward.1} parent=1 // pred_fallthru
      _
    // Predicated region
    $region18: #{patent_classification_forward.1} parent=1 // pred_check
      _
    $region19: #{patent_classification_forward.1} parent=1 // pred_check_branch
      %35 = sbr.rel (0) target = $region21
    $region20: #{patent_classification_forward.1} parent=1 // pred_region
      _
    $region21: #{patent_classification_forward.1} parent=1 // pred_fallthru
      _
    // Predicated region
    $region22: #{patent_classification_forward.1} parent=1 // pred_check
      _
    $region23: #{patent_classification_forward.1} parent=1 // pred_check_branch
      %37 = sbr.rel (0) target = $region25
    $region24: #{patent_classification_forward.1} parent=1 // pred_region
      _
    $region25: #{patent_classification_forward.1} parent=1 // pred_fallthru
      _
    // Predicated region
    $region26: #{patent_classification_forward.1} parent=1 // pred_check
      _
    $region27: #{patent_classification_forward.1} parent=1 // pred_check_branch
      %39 = sbr.rel (0) target = $region29
    $region28: #{patent_classification_forward.1} parent=1 // pred_region
      _
    $region29: #{patent_classification_forward.1} parent=1 // pred_fallthru
      _
    // Predicated region
    $region30: #{patent_classification_forward.1} parent=1 // pred_check
      _
    $region31: #{patent_classification_forward.1} parent=1 // pred_check_branch
      %41 = sbr.rel (0) target = $region33
    $region32: #{patent_classification_forward.1} parent=1 // pred_region
      _
    $region33: #{patent_classification_forward.1} parent=1 // pred_fallthru
      _
    // Predicated region
    $region34: #{patent_classification_forward.1} parent=1 // pred_check
      _
    $region35: #{patent_classification_forward.1} parent=1 // pred_check_branch
      %43 = sbr.rel (0) target = $region37
    $region36: #{patent_classification_forward.1} parent=1 // pred_region
      _
    $region37: #{patent_classification_forward.1} parent=1 // pred_fallthru
      _
    // Predicated region
    $region38: #{patent_classification_forward.1} parent=1 // pred_check
      _
    $region39: #{patent_classification_forward.1} parent=1 // pred_check_branch
      %45 = sbr.rel (0) target = $region41
    $region40: #{patent_classification_forward.1} parent=1 // pred_region
      _
    $region41: #{patent_classification_forward.1} parent=1 // pred_fallthru
      _
    // Predicated region
    $region42: #{patent_classification_forward.1} parent=1 // pred_check
      _
    $region43: #{patent_classification_forward.1} parent=1 // pred_check_branch
      %47 = sbr.rel (0) target = $region45
    $region44: #{patent_classification_forward.1} parent=1 // pred_region
      _
    $region45: #{patent_classification_forward.1} parent=1 // pred_fallthru
      _
    // Predicated region
    $region46: #{patent_classification_forward.1} parent=1 // pred_check
      _
    $region47: #{patent_classification_forward.1} parent=1 // pred_check_branch
      %49 = sbr.rel (0) target = $region49
    $region48: #{patent_classification_forward.1} parent=1 // pred_region
      _
    $region49: #{patent_classification_forward.1} parent=1 // pred_fallthru
      _
    // Predicated region
    $region50: #{patent_classification_forward.1} parent=1 // pred_check
      _
    $region51: #{patent_classification_forward.1} parent=1 // pred_check_branch
      %51 = sbr.rel (0) target = $region53
    $region52: #{patent_classification_forward.1} parent=1 // pred_region
      _
    $region53: #{patent_classification_forward.1} parent=1 // pred_fallthru
      _
    // Predicated region
    $region54: #{patent_classification_forward.1} parent=1 // pred_check
      _
    $region55: #{patent_classification_forward.1} parent=1 // pred_check_branch
      %53 = sbr.rel (0) target = $region57
    $region56: #{patent_classification_forward.1} parent=1 // pred_region
      _
    $region57: #{patent_classification_forward.1} parent=1 // pred_fallthru
      _
    // Predicated region
    $region58: #{patent_classification_forward.1} parent=1 // pred_check
      _
    $region59: #{patent_classification_forward.1} parent=1 // pred_check_branch
      %55 = sbr.rel (0) target = $region61
    $region60: #{patent_classification_forward.1} parent=1 // pred_region
      _
    $region61: #{patent_classification_forward.1} parent=1 // pred_fallthru
      _
    // Predicated region
    $region62: #{patent_classification_forward.1} parent=1 // pred_check
      _
    $region63: #{patent_classification_forward.1} parent=1 // pred_check_branch
      %57 = sbr.rel (0) target = $region65
    $region64: #{patent_classification_forward.1} parent=1 // pred_region
      _
    $region65: #{patent_classification_forward.1} parent=1 // pred_fallthru
      _
    // Predicated region
    $region66: #{patent_classification_forward.1} parent=1 // pred_check
      _
    $region67: #{patent_classification_forward.1} parent=1 // pred_check_branch
      %59 = sbr.rel (0) target = $region69
    $region68: #{patent_classification_forward.1} parent=1 // pred_region
      _
    $region69: #{patent_classification_forward.1} parent=1 // pred_fallthru
      _
    // Predicated region
    $region70: #{patent_classification_forward.1} parent=1 // pred_check
      _
    $region71: #{patent_classification_forward.1} parent=1 // pred_check_branch
      %61 = sbr.rel (0) target = $region73
    $region72: #{patent_classification_forward.1} parent=1 // pred_region
      _
    $region73: #{patent_classification_forward.1} parent=1 // pred_fallthru
      _
    // Predicated region
    $region74: #{patent_classification_forward.1} parent=1 // pred_check
      _
    $region75: #{patent_classification_forward.1} parent=1 // pred_check_branch
      %63 = sbr.rel (0) target = $region77
    $region76: #{patent_classification_forward.1} parent=1 // pred_region
      _
    $region77: #{patent_classification_forward.1} parent=1 // pred_fallthru
      _
    // Predicated region
    $region78: #{patent_classification_forward.1} parent=1 // pred_check
      _
    $region79: #{patent_classification_forward.1} parent=1 // pred_check_branch
      %65 = sbr.rel (0) target = $region81
    $region80: #{patent_classification_forward.1} parent=1 // pred_region
      _
    $region81: #{patent_classification_forward.1} parent=1 // pred_fallthru
      _
    %v67 = vld [vmem:[%s0] sm:$0xff]
    %v68 = vld [vmem:[%s0 + $0x8] sm:$0xff]
    %v69 = vld [vmem:[%s2] sm:$0x1]
    %v70 = vld [vmem:[%s3] sm:$0x1]
    %vm71 = vcmask 261120
    %v72 = vsel %vm71, %v67, 0.0
    %73 = vadd.xlane.f32.xlu0 %v72
    %v74 = vpop.xlane.xlu0 %73
    %v75 = vsel %vm71, %v68, 0.0
    %76 = vadd.xlane.f32.xlu0 %v75
    %v77 = vpop.xlane.xlu0 %76
    %v78 = vrcp.pop 32.0
    %v79 = vmul.f32 %v74, %v78
    %v80 = vmul.f32 %v77, %v78
    %v81 = vsub.f32 %v67, %v79
    %v82 = vsub.f32 %v68, %v80
    %v83 = vmul.f32 %v81, %v81
    %v84 = vmul.f32 %v82, %v82
    %v85 = vsel %vm71, %v83, 0.0
    %86 = vadd.xlane.f32.xlu0 %v85
    %v87 = vpop.xlane.xlu0 %86
    %v88 = vsel %vm71, %v84, 0.0
    %89 = vadd.xlane.f32.xlu0 %v88
    %v90 = vpop.xlane.xlu0 %89
    %v91 = vmul.f32 %v87, %v78
    %v92 = vmul.f32 %v90, %v78
    %v93 = vadd.f32 %v91, 1e-12
    %v94 = vadd.f32 %v92, 1e-12
    %v95 = vrsqrt.pop %v93
    %v96 = vrsqrt.pop %v94
    %v97 = vmul.f32 %v81, %v95
    %v98 = vmul.f32 %v82, %v96
    %v100 = vlaneseq
    %v101 = vshrl.u32 %v100, 7
    %v102 = vsub.s32 0, %v101
    %v103 = vrot.slane %v69, %v102
    %v105 = vmul.f32 %v97, %v103
    %v106 = vmul.f32 %v98, %v103
    %v108 = vlaneseq
    %v109 = vshrl.u32 %v108, 7
    %v110 = vsub.s32 0, %v109
    %v111 = vrot.slane %v70, %v110
    %v113 = vadd.f32 %v105, %v111
    %v114 = vadd.f32 %v106, %v111
    %v115 = vld [vmem:[%s1] sm:$0xff]
    %v116 = vld [vmem:[%s1 + $0x8] sm:$0xff]
    %v117 = vpack.c.bf16 %v114, %v113
    %v118 = vld [vmem:[%s4] sm:$0xf]
    %v119 = vld [vmem:[%s4 + $0x4] sm:$0xf]
    %v120 = vld [vmem:[%s4 + $0x8] sm:$0xf]
    %v121 = vld [vmem:[%s4 + $0xc] sm:$0xf]
    %v122 = vld [vmem:[%s5] sm:$0x1]
    %v124 = vlaneseq
    %v125 = vshrl.u32 %v124, 7
    %v126 = vsub.s32 0, %v125
    %v127 = vrot.slane %v122, %v126
    %v133 = vunpack.c.l.b16 %v118
    %v134 = vunpack.c.l.b16 %v119
    %v135 = vunpack.c.l.b16 %v120
    %v136 = vunpack.c.l.b16 %v121
    %v137 = vpack.c.b16 %v134, %v133
    %v138 = vpack.c.b16 %v136, %v135
    %v142 = vsel %vm71, %v117, 0
    %144 = vmatprep.subr.bf16.mxu0 0
    %145 = vmatpush1.bf16.msra.mxu0 %v137
    %146 = vmatprep.subr.bf16.mxu0 0
    %147 = vmatpush1.bf16.msra.mxu0 %v138
    %148 = vmatprep.subr.bf16.mxu0 0
    %149 = vmatpush1.bf16.msra.mxu0 0
    %150 = vmatprep.subr.bf16.mxu0 0
    %151 = vmatpush1.bf16.msra.mxu0 0
    %152 = vmatprep.subr.bf16.mxu0 0
    %153 = vmatpush1.bf16.msra.mxu0 0
    %154 = vmatprep.subr.bf16.mxu0 0
    %155 = vmatpush1.bf16.msra.mxu0 0
    %156 = vmatprep.subr.bf16.mxu0 0
    %157 = vmatpush1.bf16.msra.mxu0 0
    %158 = vmatprep.subr.bf16.mxu0 0
    %159 = vmatpush1.bf16.msra.mxu0 0
    %160 = vmatprep.subr.bf16.mxu0 0
    %161 = vmatpush1.bf16.msra.mxu0 0
    %162 = vmatprep.subr.bf16.mxu0 0
    %163 = vmatpush1.bf16.msra.mxu0 0
    %164 = vmatprep.subr.bf16.mxu0 0
    %165 = vmatpush1.bf16.msra.mxu0 0
    %166 = vmatprep.subr.bf16.mxu0 0
    %167 = vmatpush1.bf16.msra.mxu0 0
    %168 = vmatprep.subr.bf16.mxu0 0
    %169 = vmatpush1.bf16.msra.mxu0 0
    %170 = vmatprep.subr.bf16.mxu0 0
    %171 = vmatpush1.bf16.msra.mxu0 0
    %172 = vmatprep.subr.bf16.mxu0 0
    %173 = vmatpush1.bf16.msra.mxu0 0
    %174 = vmatprep.subr.bf16.mxu0 0
    %175 = vmatpush1.bf16.msra.mxu0 0
    %176 = vmatprep.mubr.bf16.mxu0 0
    %177 = vmatmul.mubr.bf16.gmra.mrb[0].mxu0 %v142
    %v178 = vpop.f32.mrb[0].mxu0
    %v179 = vadd.f32 %v127, %v178
    %v180 = vpop.f32.mrb[0].mxu0
    %v181 = vpop.f32.mrb[0].mxu0
    %v182 = vadd.f32 %v127, %v181
    %v183 = vpop.f32.mrb[0].mxu0
    %184 = vdwg.mxu0
    %v185 = vpack.c.bf16 %v182, %v179
    %187 = vrot.lane.b32.xlu0 %v185, 96
    %v188 = vpop.permute.xlu0 %187
    %vm189 = vcmask 64512
    %v191 = vsel %vm189, %v185, 0
    %v194 = vsel %vm189, %v188, 0
    %196 = vmatprep.subr.bf16.mxu0 0
    %197 = vmatpush1.bf16.xpose.msra.mxu0 %v194
    %198 = vmatprep.subr.bf16.mxu0 0
    %199 = vmatpush1.bf16.xpose.msra.mxu0 0
    %200 = vmatprep.subr.bf16.mxu0 0
    %201 = vmatpush1.bf16.xpose.msra.mxu0 0
    %202 = vmatprep.subr.bf16.mxu0 0
    %203 = vmatpush1.bf16.xpose.msra.mxu0 0
    %204 = vmatprep.subr.bf16.mxu0 0
    %205 = vmatpush1.bf16.xpose.msra.mxu0 0
    %206 = vmatprep.subr.bf16.mxu0 0
    %207 = vmatpush1.bf16.xpose.msra.mxu0 0
    %208 = vmatprep.subr.bf16.mxu0 0
    %209 = vmatpush1.bf16.xpose.msra.mxu0 0
    %210 = vmatprep.subr.bf16.mxu0 0
    %211 = vmatpush1.bf16.xpose.msra.mxu0 0
    %212 = vmatprep.subr.bf16.mxu0 0
    %213 = vmatpush1.bf16.xpose.msra.mxu0 0
    %214 = vmatprep.subr.bf16.mxu0 0
    %215 = vmatpush1.bf16.xpose.msra.mxu0 0
    %216 = vmatprep.subr.bf16.mxu0 0
    %217 = vmatpush1.bf16.xpose.msra.mxu0 0
    %218 = vmatprep.subr.bf16.mxu0 0
    %219 = vmatpush1.bf16.xpose.msra.mxu0 0
    %220 = vmatprep.subr.bf16.mxu0 0
    %221 = vmatpush1.bf16.xpose.msra.mxu0 0
    %222 = vmatprep.subr.bf16.mxu0 0
    %223 = vmatpush1.bf16.xpose.msra.mxu0 0
    %224 = vmatprep.subr.bf16.mxu0 0
    %225 = vmatpush1.bf16.xpose.msra.mxu0 0
    %226 = vmatprep.subr.bf16.mxu0 0
    %227 = vmatpush1.bf16.xpose.msra.mxu0 0
    %228 = vmatprep.mubr.bf16.mxu0 0
    %229 = vmatmul.mubr.bf16.gmra.mrb[0].mxu0 %v191
    %v230 = vpop.f32.mrb[0].mxu0
    %v231 = vadd.f32 0.0, %v230
    %v232 = vpop.f32.mrb[0].mxu0
    %v233 = vpop.f32.mrb[0].mxu0
    %v234 = vadd.f32 0.0, %v233
    %v235 = vpop.f32.mrb[0].mxu0
    %236 = vdwg.mxu0
    %v237 = vmul.f32 %v231, 0.35355338
    %v238 = vmul.f32 %v234, 0.35355338
    %v239 = vadd.f32 %v237, %v115
    %v240 = vadd.f32 %v238, %v116
    %vm241 = vcmask 130048
    %v242 = vsel %vm241, %v239, -inf
    %243 = vmax.xlane.f32.xlu0 %v242
    %v244 = vpop.xlane.xlu0 %243
    %v245 = vsel %vm241, %v240, -inf
    %246 = vmax.xlane.f32.xlu0 %v245
    %v247 = vpop.xlane.xlu0 %246
    %v248 = vsub.f32 %v239, %v244
    %v249 = vsub.f32 %v240, %v247
    %v250 = vmul.f32 %v248, 1.442695
    %v251 = vpow.pop %v250
    %v252 = vmul.f32 %v249, 1.442695
    %v253 = vpow.pop %v252
    %v254 = vsel %vm241, %v251, 0.0
    %255 = vadd.xlane.f32.xlu0 %v254
    %v256 = vpop.xlane.xlu0 %255
    %v257 = vsel %vm241, %v253, 0.0
    %258 = vadd.xlane.f32.xlu0 %v257
    %v259 = vpop.xlane.xlu0 %258
    %v260 = vrcp.pop %v256
    %v261 = vmul.f32 %v251, %v260
    %v262 = vrcp.pop %v259
    %v263 = vmul.f32 %v253, %v262
    %v264 = vpack.c.bf16 %v263, %v261
    %265 = vrot.lane.b32.xlu0 %v185, 64
    %v266 = vpop.permute.xlu0 %265
    %v269 = vsel %vm241, %v264, 0
    %271 = vmatprep.subr.bf16.mxu0 0
    %272 = vmatpush1.bf16.msra.mxu0 %v266
    %273 = vmatprep.subr.bf16.mxu0 0
    %274 = vmatpush1.bf16.msra.mxu0 0
    %275 = vmatprep.subr.bf16.mxu0 0
    %276 = vmatpush1.bf16.msra.mxu0 0
    %277 = vmatprep.subr.bf16.mxu0 0
    %278 = vmatpush1.bf16.msra.mxu0 0
    %279 = vmatprep.subr.bf16.mxu0 0
    %280 = vmatpush1.bf16.msra.mxu0 0
    %281 = vmatprep.subr.bf16.mxu0 0
    %282 = vmatpush1.bf16.msra.mxu0 0
    %283 = vmatprep.subr.bf16.mxu0 0
    %284 = vmatpush1.bf16.msra.mxu0 0
    %285 = vmatprep.subr.bf16.mxu0 0
    %286 = vmatpush1.bf16.msra.mxu0 0
    %287 = vmatprep.subr.bf16.mxu0 0
    %288 = vmatpush1.bf16.msra.mxu0 0
    %289 = vmatprep.subr.bf16.mxu0 0
    %290 = vmatpush1.bf16.msra.mxu0 0
    %291 = vmatprep.subr.bf16.mxu0 0
    %292 = vmatpush1.bf16.msra.mxu0 0
    %293 = vmatprep.subr.bf16.mxu0 0
    %294 = vmatpush1.bf16.msra.mxu0 0
    %295 = vmatprep.subr.bf16.mxu0 0
    %296 = vmatpush1.bf16.msra.mxu0 0
    %297 = vmatprep.subr.bf16.mxu0 0
    %298 = vmatpush1.bf16.msra.mxu0 0
    %299 = vmatprep.subr.bf16.mxu0 0
    %300 = vmatpush1.bf16.msra.mxu0 0
    %301 = vmatprep.subr.bf16.mxu0 0
    %302 = vmatpush1.bf16.msra.mxu0 0
    %303 = vmatprep.mubr.bf16.mxu0 0
    %304 = vmatmul.mubr.bf16.gmra.mrb[0].mxu0 %v269
    %v305 = vpop.f32.mrb[0].mxu0
    %v306 = vadd.f32 0.0, %v305
    %v307 = vpop.f32.mrb[0].mxu0
    %v308 = vpop.f32.mrb[0].mxu0
    %v309 = vadd.f32 0.0, %v308
    %v310 = vpop.f32.mrb[0].mxu0
    %311 = vdwg.mxu0
    %312 = vrot.lane.b32.xlu0 %v185, 120
    %v313 = vpop.permute.xlu0 %312
    %314 = vrot.lane.b32.xlu0 %v185, 88
    %v315 = vpop.permute.xlu0 %314
    %v317 = vsel %vm189, %v313, 0
    %v320 = vsel %vm189, %v315, 0
    %322 = vmatprep.subr.bf16.mxu0 0
    %323 = vmatpush1.bf16.xpose.msra.mxu0 %v320
    %324 = vmatprep.subr.bf16.mxu0 0
    %325 = vmatpush1.bf16.xpose.msra.mxu0 0
    %326 = vmatprep.subr.bf16.mxu0 0
    %327 = vmatpush1.bf16.xpose.msra.mxu0 0
    %328 = vmatprep.subr.bf16.mxu0 0
    %329 = vmatpush1.bf16.xpose.msra.mxu0 0
    %330 = vmatprep.subr.bf16.mxu0 0
    %331 = vmatpush1.bf16.xpose.msra.mxu0 0
    %332 = vmatprep.subr.bf16.mxu0 0
    %333 = vmatpush1.bf16.xpose.msra.mxu0 0
    %334 = vmatprep.subr.bf16.mxu0 0
    %335 = vmatpush1.bf16.xpose.msra.mxu0 0
    %336 = vmatprep.subr.bf16.mxu0 0
    %337 = vmatpush1.bf16.xpose.msra.mxu0 0
    %338 = vmatprep.subr.bf16.mxu0 0
    %339 = vmatpush1.bf16.xpose.msra.mxu0 0
    %340 = vmatprep.subr.bf16.mxu0 0
    %341 = vmatpush1.bf16.xpose.msra.mxu0 0
    %342 = vmatprep.subr.bf16.mxu0 0
    %343 = vmatpush1.bf16.xpose.msra.mxu0 0
    %344 = vmatprep.subr.bf16.mxu0 0
    %345 = vmatpush1.bf16.xpose.msra.mxu0 0
    %346 = vmatprep.subr.bf16.mxu0 0
    %347 = vmatpush1.bf16.xpose.msra.mxu0 0
    %348 = vmatprep.subr.bf16.mxu0 0
    %349 = vmatpush1.bf16.xpose.msra.mxu0 0
    %350 = vmatprep.subr.bf16.mxu0 0
    %351 = vmatpush1.bf16.xpose.msra.mxu0 0
    %352 = vmatprep.subr.bf16.mxu0 0
    %353 = vmatpush1.bf16.xpose.msra.mxu0 0
    %354 = vmatprep.mubr.bf16.mxu0 0
    %355 = vmatmul.mubr.bf16.gmra.mrb[0].mxu0 %v317
    %v356 = vpop.f32.mrb[0].mxu0
    %v357 = vadd.f32 0.0, %v356
    %v358 = vpop.f32.mrb[0].mxu0
    %v359 = vpop.f32.mrb[0].mxu0
    %v360 = vadd.f32 0.0, %v359
    %v361 = vpop.f32.mrb[0].mxu0
    %362 = vdwg.mxu0
    %v363 = vmul.f32 %v357, 0.35355338
    %v364 = vmul.f32 %v360, 0.35355338
    %v365 = vadd.f32 %v363, %v115
    %v366 = vadd.f32 %v364, %v116
    %v367 = vsel %vm241, %v365, -inf
    %368 = vmax.xlane.f32.xlu0 %v367
    %v369 = vpop.xlane.xlu0 %368
    %v370 = vsel %vm241, %v366, -inf
    %371 = vmax.xlane.f32.xlu0 %v370
    %v372 = vpop.xlane.xlu0 %371
    %v373 = vsub.f32 %v365, %v369
    %v374 = vsub.f32 %v366, %v372
    %v375 = vmul.f32 %v373, 1.442695
    %v376 = vpow.pop %v375
    %v377 = vmul.f32 %v374, 1.442695
    %v378 = vpow.pop %v377
    %v379 = vsel %vm241, %v376, 0.0
    %380 = vadd.xlane.f32.xlu0 %v379
    %v381 = vpop.xlane.xlu0 %380
    %v382 = vsel %vm241, %v378, 0.0
    %383 = vadd.xlane.f32.xlu0 %v382
    %v384 = vpop.xlane.xlu0 %383
    %v385 = vrcp.pop %v381
    %v386 = vmul.f32 %v376, %v385
    %v387 = vrcp.pop %v384
    %v388 = vmul.f32 %v378, %v387
    %v389 = vpack.c.bf16 %v388, %v386
    %390 = vrot.lane.b32.xlu0 %v185, 56
    %v391 = vpop.permute.xlu0 %390
    %v394 = vsel %vm241, %v389, 0
    %396 = vmatprep.subr.bf16.mxu0 0
    %397 = vmatpush1.bf16.msra.mxu0 %v391
    %398 = vmatprep.subr.bf16.mxu0 0
    %399 = vmatpush1.bf16.msra.mxu0 0
    %400 = vmatprep.subr.bf16.mxu0 0
    %401 = vmatpush1.bf16.msra.mxu0 0
    %402 = vmatprep.subr.bf16.mxu0 0
    %403 = vmatpush1.bf16.msra.mxu0 0
    %404 = vmatprep.subr.bf16.mxu0 0
    %405 = vmatpush1.bf16.msra.mxu0 0
    %406 = vmatprep.subr.bf16.mxu0 0
    %407 = vmatpush1.bf16.msra.mxu0 0
    %408 = vmatprep.subr.bf16.mxu0 0
    %409 = vmatpush1.bf16.msra.mxu0 0
    %410 = vmatprep.subr.bf16.mxu0 0
    %411 = vmatpush1.bf16.msra.mxu0 0
    %412 = vmatprep.subr.bf16.mxu0 0
    %413 = vmatpush1.bf16.msra.mxu0 0
    %414 = vmatprep.subr.bf16.mxu0 0
    %415 = vmatpush1.bf16.msra.mxu0 0
    %416 = vmatprep.subr.bf16.mxu0 0
    %417 = vmatpush1.bf16.msra.mxu0 0
    %418 = vmatprep.subr.bf16.mxu0 0
    %419 = vmatpush1.bf16.msra.mxu0 0
    %420 = vmatprep.subr.bf16.mxu0 0
    %421 = vmatpush1.bf16.msra.mxu0 0
    %422 = vmatprep.subr.bf16.mxu0 0
    %423 = vmatpush1.bf16.msra.mxu0 0
    %424 = vmatprep.subr.bf16.mxu0 0
    %425 = vmatpush1.bf16.msra.mxu0 0
    %426 = vmatprep.subr.bf16.mxu0 0
    %427 = vmatpush1.bf16.msra.mxu0 0
    %428 = vmatprep.mubr.bf16.mxu0 0
    %429 = vmatmul.mubr.bf16.gmra.mrb[0].mxu0 %v394
    %v430 = vpop.f32.mrb[0].mxu0
    %v431 = vadd.f32 0.0, %v430
    %v432 = vpop.f32.mrb[0].mxu0
    %v433 = vpop.f32.mrb[0].mxu0
    %v434 = vadd.f32 0.0, %v433
    %v435 = vpop.f32.mrb[0].mxu0
    %436 = vdwg.mxu0
    %437 = vrot.lane.b32.xlu0 %v185, 112
    %v438 = vpop.permute.xlu0 %437
    %439 = vrot.lane.b32.xlu0 %v185, 80
    %v440 = vpop.permute.xlu0 %439
    %v442 = vsel %vm189, %v438, 0
    %v445 = vsel %vm189, %v440, 0
    %447 = vmatprep.subr.bf16.mxu0 0
    %448 = vmatpush1.bf16.xpose.msra.mxu0 %v445
    %449 = vmatprep.subr.bf16.mxu0 0
    %450 = vmatpush1.bf16.xpose.msra.mxu0 0
    %451 = vmatprep.subr.bf16.mxu0 0
    %452 = vmatpush1.bf16.xpose.msra.mxu0 0
    %453 = vmatprep.subr.bf16.mxu0 0
    %454 = vmatpush1.bf16.xpose.msra.mxu0 0
    %455 = vmatprep.subr.bf16.mxu0 0
    %456 = vmatpush1.bf16.xpose.msra.mxu0 0
    %457 = vmatprep.subr.bf16.mxu0 0
    %458 = vmatpush1.bf16.xpose.msra.mxu0 0
    %459 = vmatprep.subr.bf16.mxu0 0
    %460 = vmatpush1.bf16.xpose.msra.mxu0 0
    %461 = vmatprep.subr.bf16.mxu0 0
    %462 = vmatpush1.bf16.xpose.msra.mxu0 0
    %463 = vmatprep.subr.bf16.mxu0 0
    %464 = vmatpush1.bf16.xpose.msra.mxu0 0
    %465 = vmatprep.subr.bf16.mxu0 0
    %466 = vmatpush1.bf16.xpose.msra.mxu0 0
    %467 = vmatprep.subr.bf16.mxu0 0
    %468 = vmatpush1.bf16.xpose.msra.mxu0 0
    %469 = vmatprep.subr.bf16.mxu0 0
    %470 = vmatpush1.bf16.xpose.msra.mxu0 0
    %471 = vmatprep.subr.bf16.mxu0 0
    %472 = vmatpush1.bf16.xpose.msra.mxu0 0
    %473 = vmatprep.subr.bf16.mxu0 0
    %474 = vmatpush1.bf16.xpose.msra.mxu0 0
    %475 = vmatprep.subr.bf16.mxu0 0
    %476 = vmatpush1.bf16.xpose.msra.mxu0 0
    %477 = vmatprep.subr.bf16.mxu0 0
    %478 = vmatpush1.bf16.xpose.msra.mxu0 0
    %479 = vmatprep.mubr.bf16.mxu0 0
    %480 = vmatmul.mubr.bf16.gmra.mrb[0].mxu0 %v442
    %v481 = vpop.f32.mrb[0].mxu0
    %v482 = vadd.f32 0.0, %v481
    %v483 = vpop.f32.mrb[0].mxu0
    %v484 = vpop.f32.mrb[0].mxu0
    %v485 = vadd.f32 0.0, %v484
    %v486 = vpop.f32.mrb[0].mxu0
    %487 = vdwg.mxu0
    %v488 = vmul.f32 %v482, 0.35355338
    %v489 = vmul.f32 %v485, 0.35355338
    %v490 = vadd.f32 %v488, %v115
    %v491 = vadd.f32 %v489, %v116
    %v492 = vsel %vm241, %v490, -inf
    %493 = vmax.xlane.f32.xlu0 %v492
    %v494 = vpop.xlane.xlu0 %493
    %v495 = vsel %vm241, %v491, -inf
    %496 = vmax.xlane.f32.xlu0 %v495
    %v497 = vpop.xlane.xlu0 %496
    %v498 = vsub.f32 %v490, %v494
    %v499 = vsub.f32 %v491, %v497
    %v500 = vmul.f32 %v498, 1.442695
    %v501 = vpow.pop %v500
    %v502 = vmul.f32 %v499, 1.442695
    %v503 = vpow.pop %v502
    %v504 = vsel %vm241, %v501, 0.0
    %505 = vadd.xlane.f32.xlu0 %v504
    %v506 = vpop.xlane.xlu0 %505
    %v507 = vsel %vm241, %v503, 0.0
    %508 = vadd.xlane.f32.xlu0 %v507
    %v509 = vpop.xlane.xlu0 %508
    %v510 = vrcp.pop %v506
    %v511 = vmul.f32 %v501, %v510
    %v512 = vrcp.pop %v509
    %v513 = vmul.f32 %v503, %v512
    %v514 = vpack.c.bf16 %v513, %v511
    %515 = vrot.lane.b32.xlu0 %v185, 48
    %v516 = vpop.permute.xlu0 %515
    %v519 = vsel %vm241, %v514, 0
    %521 = vmatprep.subr.bf16.mxu0 0
    %522 = vmatpush1.bf16.msra.mxu0 %v516
    %523 = vmatprep.subr.bf16.mxu0 0
    %524 = vmatpush1.bf16.msra.mxu0 0
    %525 = vmatprep.subr.bf16.mxu0 0
    %526 = vmatpush1.bf16.msra.mxu0 0
    %527 = vmatprep.subr.bf16.mxu0 0
    %528 = vmatpush1.bf16.msra.mxu0 0
    %529 = vmatprep.subr.bf16.mxu0 0
    %530 = vmatpush1.bf16.msra.mxu0 0
    %531 = vmatprep.subr.bf16.mxu0 0
    %532 = vmatpush1.bf16.msra.mxu0 0
    %533 = vmatprep.subr.bf16.mxu0 0
    %534 = vmatpush1.bf16.msra.mxu0 0
    %535 = vmatprep.subr.bf16.mxu0 0
    %536 = vmatpush1.bf16.msra.mxu0 0
    %537 = vmatprep.subr.bf16.mxu0 0
    %538 = vmatpush1.bf16.msra.mxu0 0
    %539 = vmatprep.subr.bf16.mxu0 0
    %540 = vmatpush1.bf16.msra.mxu0 0
    %541 = vmatprep.subr.bf16.mxu0 0
    %542 = vmatpush1.bf16.msra.mxu0 0
    %543 = vmatprep.subr.bf16.mxu0 0
    %544 = vmatpush1.bf16.msra.mxu0 0
    %545 = vmatprep.subr.bf16.mxu0 0
    %546 = vmatpush1.bf16.msra.mxu0 0
    %547 = vmatprep.subr.bf16.mxu0 0
    %548 = vmatpush1.bf16.msra.mxu0 0
    %549 = vmatprep.subr.bf16.mxu0 0
    %550 = vmatpush1.bf16.msra.mxu0 0
    %551 = vmatprep.subr.bf16.mxu0 0
    %552 = vmatpush1.bf16.msra.mxu0 0
    %553 = vmatprep.mubr.bf16.mxu0 0
    %554 = vmatmul.mubr.bf16.gmra.mrb[0].mxu0 %v519
    %v555 = vpop.f32.mrb[0].mxu0
    %v556 = vadd.f32 0.0, %v555
    %v557 = vpop.f32.mrb[0].mxu0
    %v558 = vpop.f32.mrb[0].mxu0
    %v559 = vadd.f32 0.0, %v558
    %v560 = vpop.f32.mrb[0].mxu0
    %561 = vdwg.mxu0
    %562 = vrot.lane.b32.xlu0 %v185, 104
    %v563 = vpop.permute.xlu0 %562
    %564 = vrot.lane.b32.xlu0 %v185, 72
    %v565 = vpop.permute.xlu0 %564
    %v567 = vsel %vm189, %v563, 0
    %v570 = vsel %vm189, %v565, 0
    %572 = vmatprep.subr.bf16.mxu0 0
    %573 = vmatpush1.bf16.xpose.msra.mxu0 %v570
    %574 = vmatprep.subr.bf16.mxu0 0
    %575 = vmatpush1.bf16.xpose.msra.mxu0 0
    %576 = vmatprep.subr.bf16.mxu0 0
    %577 = vmatpush1.bf16.xpose.msra.mxu0 0
    %578 = vmatprep.subr.bf16.mxu0 0
    %579 = vmatpush1.bf16.xpose.msra.mxu0 0
    %580 = vmatprep.subr.bf16.mxu0 0
    %581 = vmatpush1.bf16.xpose.msra.mxu0 0
    %582 = vmatprep.subr.bf16.mxu0 0
    %583 = vmatpush1.bf16.xpose.msra.mxu0 0
    %584 = vmatprep.subr.bf16.mxu0 0
    %585 = vmatpush1.bf16.xpose.msra.mxu0 0
    %586 = vmatprep.subr.bf16.mxu0 0
    %587 = vmatpush1.bf16.xpose.msra.mxu0 0
    %588 = vmatprep.subr.bf16.mxu0 0
    %589 = vmatpush1.bf16.xpose.msra.mxu0 0
    %590 = vmatprep.subr.bf16.mxu0 0
    %591 = vmatpush1.bf16.xpose.msra.mxu0 0
    %592 = vmatprep.subr.bf16.mxu0 0
    %593 = vmatpush1.bf16.xpose.msra.mxu0 0
    %594 = vmatprep.subr.bf16.mxu0 0
    %595 = vmatpush1.bf16.xpose.msra.mxu0 0
    %596 = vmatprep.subr.bf16.mxu0 0
    %597 = vmatpush1.bf16.xpose.msra.mxu0 0
    %598 = vmatprep.subr.bf16.mxu0 0
    %599 = vmatpush1.bf16.xpose.msra.mxu0 0
    %600 = vmatprep.subr.bf16.mxu0 0
    %601 = vmatpush1.bf16.xpose.msra.mxu0 0
    %602 = vmatprep.subr.bf16.mxu0 0
    %603 = vmatpush1.bf16.xpose.msra.mxu0 0
    %604 = vmatprep.mubr.bf16.mxu0 0
    %605 = vmatmul.mubr.bf16.gmra.mrb[0].mxu0 %v567
    %v606 = vpop.f32.mrb[0].mxu0
    %v607 = vadd.f32 0.0, %v606
    %v608 = vpop.f32.mrb[0].mxu0
    %v609 = vpop.f32.mrb[0].mxu0
    %v610 = vadd.f32 0.0, %v609
    %v611 = vpop.f32.mrb[0].mxu0
    %612 = vdwg.mxu0
    %v613 = vmul.f32 %v607, 0.35355338
    %v614 = vmul.f32 %v610, 0.35355338
    %v615 = vadd.f32 %v613, %v115
    %v616 = vadd.f32 %v614, %v116
    %v617 = vsel %vm241, %v615, -inf
    %618 = vmax.xlane.f32.xlu0 %v617
    %v619 = vpop.xlane.xlu0 %618
    %v620 = vsel %vm241, %v616, -inf
    %621 = vmax.xlane.f32.xlu0 %v620
    %v622 = vpop.xlane.xlu0 %621
    %v623 = vsub.f32 %v615, %v619
    %v624 = vsub.f32 %v616, %v622
    %v625 = vmul.f32 %v623, 1.442695
    %v626 = vpow.pop %v625
    %v627 = vmul.f32 %v624, 1.442695
    %v628 = vpow.pop %v627
    %v629 = vsel %vm241, %v626, 0.0
    %630 = vadd.xlane.f32.xlu0 %v629
    %v631 = vpop.xlane.xlu0 %630
    %v632 = vsel %vm241, %v628, 0.0
    %633 = vadd.xlane.f32.xlu0 %v632
    %v634 = vpop.xlane.xlu0 %633
    %v635 = vrcp.pop %v631
    %v636 = vmul.f32 %v626, %v635
    %v637 = vrcp.pop %v634
    %v638 = vmul.f32 %v628, %v637
    %v639 = vpack.c.bf16 %v638, %v636
    %640 = vrot.lane.b32.xlu0 %v185, 40
    %v641 = vpop.permute.xlu0 %640
    %v644 = vsel %vm241, %v639, 0
    %646 = vmatprep.subr.bf16.mxu0 0
    %647 = vmatpush1.bf16.msra.mxu0 %v641
    %648 = vmatprep.subr.bf16.mxu0 0
    %649 = vmatpush1.bf16.msra.mxu0 0
    %650 = vmatprep.subr.bf16.mxu0 0
    %651 = vmatpush1.bf16.msra.mxu0 0
    %652 = vmatprep.subr.bf16.mxu0 0
    %653 = vmatpush1.bf16.msra.mxu0 0
    %654 = vmatprep.subr.bf16.mxu0 0
    %655 = vmatpush1.bf16.msra.mxu0 0
    %656 = vmatprep.subr.bf16.mxu0 0
    %657 = vmatpush1.bf16.msra.mxu0 0
    %658 = vmatprep.subr.bf16.mxu0 0
    %659 = vmatpush1.bf16.msra.mxu0 0
    %660 = vmatprep.subr.bf16.mxu0 0
    %661 = vmatpush1.bf16.msra.mxu0 0
    %662 = vmatprep.subr.bf16.mxu0 0
    %663 = vmatpush1.bf16.msra.mxu0 0
    %664 = vmatprep.subr.bf16.mxu0 0
    %665 = vmatpush1.bf16.msra.mxu0 0
    %666 = vmatprep.subr.bf16.mxu0 0
    %667 = vmatpush1.bf16.msra.mxu0 0
    %668 = vmatprep.subr.bf16.mxu0 0
    %669 = vmatpush1.bf16.msra.mxu0 0
    %670 = vmatprep.subr.bf16.mxu0 0
    %671 = vmatpush1.bf16.msra.mxu0 0
    %672 = vmatprep.subr.bf16.mxu0 0
    %673 = vmatpush1.bf16.msra.mxu0 0
    %674 = vmatprep.subr.bf16.mxu0 0
    %675 = vmatpush1.bf16.msra.mxu0 0
    %676 = vmatprep.subr.bf16.mxu0 0
    %677 = vmatpush1.bf16.msra.mxu0 0
    %678 = vmatprep.mubr.bf16.mxu0 0
    %679 = vmatmul.mubr.bf16.gmra.mrb[0].mxu0 %v644
    %v680 = vpop.f32.mrb[0].mxu0
    %v681 = vadd.f32 0.0, %v680
    %v682 = vpop.f32.mrb[0].mxu0
    %v683 = vpop.f32.mrb[0].mxu0
    %v684 = vadd.f32 0.0, %v683
    %v685 = vpop.f32.mrb[0].mxu0
    %686 = vdwg.mxu0
    %689 = vrot.lane.b32.xlu0 %v431, 8
    %v690 = vpop.permute.xlu0 %689
    %691 = vrot.lane.b32.xlu0 %v434, 8
    %v692 = vpop.permute.xlu0 %691
    %697 = vrot.lane.b32.xlu0 %v556, 16
    %v698 = vpop.permute.xlu0 %697
    %699 = vrot.lane.b32.xlu0 %v559, 16
    %v700 = vpop.permute.xlu0 %699
    %705 = vrot.lane.b32.xlu0 %v681, 24
    %v706 = vpop.permute.xlu0 %705
    %707 = vrot.lane.b32.xlu0 %v684, 24
    %v708 = vpop.permute.xlu0 %707
    %v711 = vsel %vm189, %v306, %v690
    %v712 = vsel %vm189, %v309, %v692
    %v713 = vsel %vm241, %v711, %v698
    %v714 = vsel %vm241, %v712, %v700
    %vm715 = vcmask 195584
    %v716 = vsel %vm715, %v713, %v706
    %v717 = vsel %vm715, %v714, %v708
    %v718 = vpack.c.bf16 %v717, %v716
    %v719 = vld [vmem:[%s6] sm:$0xf]
    %v720 = vld [vmem:[%s6 + $0x4] sm:$0xf]
    %v721 = vld [vmem:[%s6 + $0x8] sm:$0xf]
    %v722 = vld [vmem:[%s6 + $0xc] sm:$0xf]
    %v723 = vld [vmem:[%s7] sm:$0x1]
    %v725 = vlaneseq
    %v726 = vshrl.u32 %v725, 7
    %v727 = vsub.s32 0, %v726
    %v728 = vrot.slane %v723, %v727
    %v734 = vunpack.c.l.b16 %v719
    %v735 = vunpack.c.l.b16 %v720
    %v736 = vunpack.c.l.b16 %v721
    %v737 = vunpack.c.l.b16 %v722
    %v738 = vpack.c.b16 %v735, %v734
    %v739 = vpack.c.b16 %v737, %v736
    %v743 = vsel %vm71, %v718, 0
    %745 = vmatprep.subr.bf16.mxu0 0
    %746 = vmatpush1.bf16.msra.mxu0 %v738
    %747 = vmatprep.subr.bf16.mxu0 0
    %748 = vmatpush1.bf16.msra.mxu0 %v739
    %749 = vmatprep.subr.bf16.mxu0 0
    %750 = vmatpush1.bf16.msra.mxu0 0
    %751 = vmatprep.subr.bf16.mxu0 0
    %752 = vmatpush1.bf16.msra.mxu0 0
    %753 = vmatprep.subr.bf16.mxu0 0
    %754 = vmatpush1.bf16.msra.mxu0 0
    %755 = vmatprep.subr.bf16.mxu0 0
    %756 = vmatpush1.bf16.msra.mxu0 0
    %757 = vmatprep.subr.bf16.mxu0 0
    %758 = vmatpush1.bf16.msra.mxu0 0
    %759 = vmatprep.subr.bf16.mxu0 0
    %760 = vmatpush1.bf16.msra.mxu0 0
    %761 = vmatprep.subr.bf16.mxu0 0
    %762 = vmatpush1.bf16.msra.mxu0 0
    %763 = vmatprep.subr.bf16.mxu0 0
    %764 = vmatpush1.bf16.msra.mxu0 0
    %765 = vmatprep.subr.bf16.mxu0 0
    %766 = vmatpush1.bf16.msra.mxu0 0
    %767 = vmatprep.subr.bf16.mxu0 0
    %768 = vmatpush1.bf16.msra.mxu0 0
    %769 = vmatprep.subr.bf16.mxu0 0
    %770 = vmatpush1.bf16.msra.mxu0 0
    %771 = vmatprep.subr.bf16.mxu0 0
    %772 = vmatpush1.bf16.msra.mxu0 0
    %773 = vmatprep.subr.bf16.mxu0 0
    %774 = vmatpush1.bf16.msra.mxu0 0
    %775 = vmatprep.subr.bf16.mxu0 0
    %776 = vmatpush1.bf16.msra.mxu0 0
    %777 = vmatprep.mubr.bf16.mxu0 0
    %778 = vmatmul.mubr.bf16.gmra.mrb[0].mxu0 %v743
    %v779 = vpop.f32.mrb[0].mxu0
    %v780 = vadd.f32 %v728, %v779
    %v781 = vpop.f32.mrb[0].mxu0
    %v782 = vpop.f32.mrb[0].mxu0
    %v783 = vadd.f32 %v728, %v782
    %v784 = vpop.f32.mrb[0].mxu0
    %785 = vdwg.mxu0
    %v786 = vadd.f32 %v780, %v113
    %v787 = vadd.f32 %v783, %v114
    %v788 = vld [vmem:[%s8] sm:$0x1]
    %v789 = vld [vmem:[%s9] sm:$0x1]
    %v790 = vsel %vm71, %v786, 0.0
    %791 = vadd.xlane.f32.xlu0 %v790
    %v792 = vpop.xlane.xlu0 %791
    %v793 = vsel %vm71, %v787, 0.0
    %794 = vadd.xlane.f32.xlu0 %v793
    %v795 = vpop.xlane.xlu0 %794
    %v796 = vmul.f32 %v792, %v78
    %v797 = vmul.f32 %v795, %v78
    %v798 = vsub.f32 %v786, %v796
    %v799 = vsub.f32 %v787, %v797
    %v800 = vmul.f32 %v798, %v798
    %v801 = vmul.f32 %v799, %v799
    %v802 = vsel %vm71, %v800, 0.0
    %803 = vadd.xlane.f32.xlu0 %v802
    %v804 = vpop.xlane.xlu0 %803
    %v805 = vsel %vm71, %v801, 0.0
    %806 = vadd.xlane.f32.xlu0 %v805
    %v807 = vpop.xlane.xlu0 %806
    %v808 = vmul.f32 %v804, %v78
    %v809 = vmul.f32 %v807, %v78
    %v810 = vadd.f32 %v808, 1e-12
    %v811 = vadd.f32 %v809, 1e-12
    %v812 = vrsqrt.pop %v810
    %v813 = vrsqrt.pop %v811
    %v814 = vmul.f32 %v798, %v812
    %v815 = vmul.f32 %v799, %v813
    %v817 = vlaneseq
    %v818 = vshrl.u32 %v817, 7
    %v819 = vsub.s32 0, %v818
    %v820 = vrot.slane %v788, %v819
    %v822 = vmul.f32 %v814, %v820
    %v823 = vmul.f32 %v815, %v820
    %v825 = vlaneseq
    %v826 = vshrl.u32 %v825, 7
    %v827 = vsub.s32 0, %v826
    %v828 = vrot.slane %v789, %v827
    %v830 = vadd.f32 %v822, %v828
    %v831 = vadd.f32 %v823, %v828
    %v832 = vpack.c.bf16 %v831, %v830
    %v833 = vld [vmem:[%s10] sm:$0xf]
    %v834 = vld [vmem:[%s10 + $0x4] sm:$0xf]
    %v835 = vld [vmem:[%s10 + $0x8] sm:$0xf]
    %v836 = vld [vmem:[%s10 + $0xc] sm:$0xf]
    %v837 = vld [vmem:[%s11] sm:$0x1]
    %v839 = vlaneseq
    %v840 = vshrl.u32 %v839, 7
    %v841 = vsub.s32 0, %v840
    %v842 = vrot.slane %v837, %v841
    %v848 = vunpack.c.l.b16 %v833
    %v849 = vunpack.c.l.b16 %v834
    %v850 = vunpack.c.l.b16 %v835
    %v851 = vunpack.c.l.b16 %v836
    %v852 = vpack.c.b16 %v849, %v848
    %v853 = vpack.c.b16 %v851, %v850
    %v857 = vsel %vm71, %v832, 0
    %859 = vmatprep.subr.bf16.mxu0 0
    %860 = vmatpush1.bf16.msra.mxu0 %v852
    %861 = vmatprep.subr.bf16.mxu0 0
    %862 = vmatpush1.bf16.msra.mxu0 %v853
    %863 = vmatprep.subr.bf16.mxu0 0
    %864 = vmatpush1.bf16.msra.mxu0 0
    %865 = vmatprep.subr.bf16.mxu0 0
    %866 = vmatpush1.bf16.msra.mxu0 0
    %867 = vmatprep.subr.bf16.mxu0 0
    %868 = vmatpush1.bf16.msra.mxu0 0
    %869 = vmatprep.subr.bf16.mxu0 0
    %870 = vmatpush1.bf16.msra.mxu0 0
    %871 = vmatprep.subr.bf16.mxu0 0
    %872 = vmatpush1.bf16.msra.mxu0 0
    %873 = vmatprep.subr.bf16.mxu0 0
    %874 = vmatpush1.bf16.msra.mxu0 0
    %875 = vmatprep.subr.bf16.mxu0 0
    %876 = vmatpush1.bf16.msra.mxu0 0
    %877 = vmatprep.subr.bf16.mxu0 0
    %878 = vmatpush1.bf16.msra.mxu0 0
    %879 = vmatprep.subr.bf16.mxu0 0
    %880 = vmatpush1.bf16.msra.mxu0 0
    %881 = vmatprep.subr.bf16.mxu0 0
    %882 = vmatpush1.bf16.msra.mxu0 0
    %883 = vmatprep.subr.bf16.mxu0 0
    %884 = vmatpush1.bf16.msra.mxu0 0
    %885 = vmatprep.subr.bf16.mxu0 0
    %886 = vmatpush1.bf16.msra.mxu0 0
    %887 = vmatprep.subr.bf16.mxu0 0
    %888 = vmatpush1.bf16.msra.mxu0 0
    %889 = vmatprep.subr.bf16.mxu0 0
    %890 = vmatpush1.bf16.msra.mxu0 0
    %891 = vmatprep.mubr.bf16.mxu0 0
    %892 = vmatmul.mubr.bf16.gmra.mrb[0].mxu0 %v857
    %v893 = vpop.f32.mrb[0].mxu0
    %v894 = vadd.f32 %v842, %v893
    %v895 = vpop.f32.mrb[0].mxu0
    %v896 = vpop.f32.mrb[0].mxu0
    %v897 = vadd.f32 %v842, %v896
    %v898 = vpop.f32.mrb[0].mxu0
    %899 = vdwg.mxu0
    %v900 = vmul.f32 %v894, 0.5
    %v901 = vmul.f32 %v897, 0.5
    %v902 = vmul.f32 %v894, 0.70710677
    %v903 = vmul.f32 %v897, 0.70710677
    %v904 = vand.u32 2147483647, %v902
    %v905 = vand.u32 2147483647, %v903
    %v906 = vmul.f32 %v904, 0.3275911
    %v907 = vmul.f32 %v905, 0.3275911
    %v908 = vadd.f32 %v906, 1.0
    %v909 = vadd.f32 %v907, 1.0
    %v910 = vrcp.pop %v908
    %v911 = vmul.f32 1.0, %v910
    %v912 = vrcp.pop %v909
    %v913 = vmul.f32 1.0, %v912
    %v914 = vmul.f32 %v911, 1.0614054
    %v915 = vmul.f32 %v913, 1.0614054
    %v916 = vadd.f32 %v914, -1.4531521
    %v917 = vadd.f32 %v915, -1.4531521
    %v918 = vmul.f32 %v911, %v916
    %v919 = vmul.f32 %v913, %v917
    %v920 = vadd.f32 %v918, 1.4214138
    %v921 = vadd.f32 %v919, 1.4214138
    %v922 = vmul.f32 %v911, %v920
    %v923 = vmul.f32 %v913, %v921
    %v924 = vadd.f32 %v922, -0.28449672
    %v925 = vadd.f32 %v923, -0.28449672
    %v926 = vmul.f32 %v911, %v924
    %v927 = vmul.f32 %v913, %v925
    %v928 = vadd.f32 %v926, 0.2548296
    %v929 = vadd.f32 %v927, 0.2548296
    %v930 = vmul.f32 %v911, %v928
    %v931 = vmul.f32 %v913, %v929
    %v932 = vsub.f32 0.0, %v904
    %v933 = vsub.f32 0.0, %v905
    %v934 = vmul.f32 %v932, %v904
    %v935 = vmul.f32 %v933, %v905
    %v936 = vmul.f32 %v934, 1.442695
    %v937 = vpow.pop %v936
    %v938 = vmul.f32 %v935, 1.442695
    %v939 = vpow.pop %v938
    %v940 = vmul.f32 %v930, %v937
    %v941 = vmul.f32 %v931, %v939
    %v942 = vsub.f32 1.0, %v940
    %v943 = vsub.f32 1.0, %v941
    %vm944 = vcmp.ge.f32.partialorder %v902, 0.0
    %vm945 = vcmp.ge.f32.partialorder %v903, 0.0
    %v946 = vsub.f32 0.0, %v942
    %v947 = vsub.f32 0.0, %v943
    %v948 = vsel %vm944, %v942, %v946
    %v949 = vsel %vm945, %v943, %v947
    %v950 = vadd.f32 %v948, 1.0
    %v951 = vadd.f32 %v949, 1.0
    %v952 = vmul.f32 %v900, %v950
    %v953 = vmul.f32 %v901, %v951
    %v954 = vpack.c.bf16 %v953, %v952
    %v955 = vld [vmem:[%s12] sm:$0xf]
    %v956 = vld [vmem:[%s12 + $0x4] sm:$0xf]
    %v957 = vld [vmem:[%s12 + $0x8] sm:$0xf]
    %v958 = vld [vmem:[%s12 + $0xc] sm:$0xf]
    %v959 = vld [vmem:[%s12 + $0x10] sm:$0xf]
    %v960 = vld [vmem:[%s12 + $0x14] sm:$0xf]
    %v961 = vld [vmem:[%s12 + $0x18] sm:$0xf]
    %v962 = vld [vmem:[%s12 + $0x1c] sm:$0xf]
    %v963 = vld [vmem:[%s13] sm:$0x1]
    %v965 = vlaneseq
    %v966 = vshrl.u32 %v965, 7
    %v967 = vsub.s32 0, %v966
    %v968 = vrot.slane %v963, %v967
    %v978 = vunpack.c.l.b16 %v955
    %v979 = vunpack.c.l.b16 %v956
    %v980 = vunpack.c.l.b16 %v957
    %v981 = vunpack.c.l.b16 %v958
    %v982 = vunpack.c.l.b16 %v959
    %v983 = vunpack.c.l.b16 %v960
    %v984 = vunpack.c.l.b16 %v961
    %v985 = vunpack.c.l.b16 %v962
    %v986 = vpack.c.b16 %v979, %v978
    %v987 = vpack.c.b16 %v981, %v980
    %v988 = vpack.c.b16 %v983, %v982
    %v989 = vpack.c.b16 %v985, %v984
    %vm994 = vcmask 523264
    %v996 = vsel %vm994, %v954, 0
    %998 = vmatprep.subr.bf16.mxu0 0
    %999 = vmatpush1.bf16.msra.mxu0 %v986
    %1000 = vmatprep.subr.bf16.mxu0 0
    %1001 = vmatpush1.bf16.msra.mxu0 %v987
    %1002 = vmatprep.subr.bf16.mxu0 0
    %1003 = vmatpush1.bf16.msra.mxu0 %v988
    %1004 = vmatprep.subr.bf16.mxu0 0
    %1005 = vmatpush1.bf16.msra.mxu0 %v989
    %1006 = vmatprep.subr.bf16.mxu0 0
    %1007 = vmatpush1.bf16.msra.mxu0 0
    %1008 = vmatprep.subr.bf16.mxu0 0
    %1009 = vmatpush1.bf16.msra.mxu0 0
    %1010 = vmatprep.subr.bf16.mxu0 0
    %1011 = vmatpush1.bf16.msra.mxu0 0
    %1012 = vmatprep.subr.bf16.mxu0 0
    %1013 = vmatpush1.bf16.msra.mxu0 0
    %1014 = vmatprep.subr.bf16.mxu0 0
    %1015 = vmatpush1.bf16.msra.mxu0 0
    %1016 = vmatprep.subr.bf16.mxu0 0
    %1017 = vmatpush1.bf16.msra.mxu0 0
    %1018 = vmatprep.subr.bf16.mxu0 0
    %1019 = vmatpush1.bf16.msra.mxu0 0
    %1020 = vmatprep.subr.bf16.mxu0 0
    %1021 = vmatpush1.bf16.msra.mxu0 0
    %1022 = vmatprep.subr.bf16.mxu0 0
    %1023 = vmatpush1.bf16.msra.mxu0 0
    %1024 = vmatprep.subr.bf16.mxu0 0
    %1025 = vmatpush1.bf16.msra.mxu0 0
    %1026 = vmatprep.subr.bf16.mxu0 0
    %1027 = vmatpush1.bf16.msra.mxu0 0
    %1028 = vmatprep.subr.bf16.mxu0 0
    %1029 = vmatpush1.bf16.msra.mxu0 0
    %1030 = vmatprep.mubr.bf16.mxu0 0
    %1031 = vmatmul.mubr.bf16.gmra.mrb[0].mxu0 %v996
    %v1032 = vpop.f32.mrb[0].mxu0
    %v1033 = vadd.f32 %v968, %v1032
    %v1034 = vpop.f32.mrb[0].mxu0
    %v1035 = vpop.f32.mrb[0].mxu0
    %v1036 = vadd.f32 %v968, %v1035
    %v1037 = vpop.f32.mrb[0].mxu0
    %1038 = vdwg.mxu0
    %v1039 = vadd.f32 %v1033, %v830
    %v1040 = vadd.f32 %v1036, %v831
    %v1041 = vld [vmem:[%s14] sm:$0x1]
    %v1042 = vld [vmem:[%s15] sm:$0x1]
    %v1043 = vsel %vm71, %v1039, 0.0
    %1044 = vadd.xlane.f32.xlu0 %v1043
    %v1045 = vpop.xlane.xlu0 %1044
    %v1046 = vsel %vm71, %v1040, 0.0
    %1047 = vadd.xlane.f32.xlu0 %v1046
    %v1048 = vpop.xlane.xlu0 %1047
    %v1049 = vmul.f32 %v1045, %v78
    %v1050 = vmul.f32 %v1048, %v78
    %v1051 = vsub.f32 %v1039, %v1049
    %v1052 = vsub.f32 %v1040, %v1050
    %v1053 = vmul.f32 %v1051, %v1051
    %v1054 = vmul.f32 %v1052, %v1052
    %v1055 = vsel %vm71, %v1053, 0.0
    %1056 = vadd.xlane.f32.xlu0 %v1055
    %v1057 = vpop.xlane.xlu0 %1056
    %v1058 = vsel %vm71, %v1054, 0.0
    %1059 = vadd.xlane.f32.xlu0 %v1058
    %v1060 = vpop.xlane.xlu0 %1059
    %v1061 = vmul.f32 %v1057, %v78
    %v1062 = vmul.f32 %v1060, %v78
    %v1063 = vadd.f32 %v1061, 1e-12
    %v1064 = vadd.f32 %v1062, 1e-12
    %v1065 = vrsqrt.pop %v1063
    %v1066 = vrsqrt.pop %v1064
    %v1067 = vmul.f32 %v1051, %v1065
    %v1068 = vmul.f32 %v1052, %v1066
    %v1070 = vlaneseq
    %v1071 = vshrl.u32 %v1070, 7
    %v1072 = vsub.s32 0, %v1071
    %v1073 = vrot.slane %v1041, %v1072
    %v1075 = vmul.f32 %v1067, %v1073
    %v1076 = vmul.f32 %v1068, %v1073
    %v1078 = vlaneseq
    %v1079 = vshrl.u32 %v1078, 7
    %v1080 = vsub.s32 0, %v1079
    %v1081 = vrot.slane %v1042, %v1080
    %v1083 = vadd.f32 %v1075, %v1081
    %v1084 = vadd.f32 %v1076, %v1081
    %v1085 = vpack.c.bf16 %v1084, %v1083
    %s1086 = scalar_lea.vmem %s4, 16
    %v1087 = vld [vmem:[%s1086] sm:$0xf]
    %v1088 = vld [vmem:[%s1086 + $0x4] sm:$0xf]
    %v1089 = vld [vmem:[%s1086 + $0x8] sm:$0xf]
    %v1090 = vld [vmem:[%s1086 + $0xc] sm:$0xf]
    %s1091 = scalar_lea.vmem %s5, 1
    %v1092 = vld [vmem:[%s1091] sm:$0x1]
    %v1094 = vlaneseq
    %v1095 = vshrl.u32 %v1094, 7
    %v1096 = vsub.s32 0, %v1095
    %v1097 = vrot.slane %v1092, %v1096
    %v1103 = vunpack.c.l.b16 %v1087
    %v1104 = vunpack.c.l.b16 %v1088
    %v1105 = vunpack.c.l.b16 %v1089
    %v1106 = vunpack.c.l.b16 %v1090
    %v1107 = vpack.c.b16 %v1104, %v1103
    %v1108 = vpack.c.b16 %v1106, %v1105
    %v1112 = vsel %vm71, %v1085, 0
    %1114 = vmatprep.subr.bf16.mxu0 0
    %1115 = vmatpush1.bf16.msra.mxu0 %v1107
    %1116 = vmatprep.subr.bf16.mxu0 0
    %1117 = vmatpush1.bf16.msra.mxu0 %v1108
    %1118 = vmatprep.subr.bf16.mxu0 0
    %1119 = vmatpush1.bf16.msra.mxu0 0
    %1120 = vmatprep.subr.bf16.mxu0 0
    %1121 = vmatpush1.bf16.msra.mxu0 0
    %1122 = vmatprep.subr.bf16.mxu0 0
    %1123 = vmatpush1.bf16.msra.mxu0 0
    %1124 = vmatprep.subr.bf16.mxu0 0
    %1125 = vmatpush1.bf16.msra.mxu0 0
    %1126 = vmatprep.subr.bf16.mxu0 0
    %1127 = vmatpush1.bf16.msra.mxu0 0
    %1128 = vmatprep.subr.bf16.mxu0 0
    %1129 = vmatpush1.bf16.msra.mxu0 0
    %1130 = vmatprep.subr.bf16.mxu0 0
    %1131 = vmatpush1.bf16.msra.mxu0 0
    %1132 = vmatprep.subr.bf16.mxu0 0
    %1133 = vmatpush1.bf16.msra.mxu0 0
    %1134 = vmatprep.subr.bf16.mxu0 0
    %1135 = vmatpush1.bf16.msra.mxu0 0
    %1136 = vmatprep.subr.bf16.mxu0 0
    %1137 = vmatpush1.bf16.msra.mxu0 0
    %1138 = vmatprep.subr.bf16.mxu0 0
    %1139 = vmatpush1.bf16.msra.mxu0 0
    %1140 = vmatprep.subr.bf16.mxu0 0
    %1141 = vmatpush1.bf16.msra.mxu0 0
    %1142 = vmatprep.subr.bf16.mxu0 0
    %1143 = vmatpush1.bf16.msra.mxu0 0
    %1144 = vmatprep.subr.bf16.mxu0 0
    %1145 = vmatpush1.bf16.msra.mxu0 0
    %1146 = vmatprep.mubr.bf16.mxu0 0
    %1147 = vmatmul.mubr.bf16.gmra.mrb[0].mxu0 %v1112
    %v1148 = vpop.f32.mrb[0].mxu0
    %v1149 = vadd.f32 %v1097, %v1148
    %v1150 = vpop.f32.mrb[0].mxu0
    %v1151 = vpop.f32.mrb[0].mxu0
    %v1152 = vadd.f32 %v1097, %v1151
    %v1153 = vpop.f32.mrb[0].mxu0
    %1154 = vdwg.mxu0
    %v1155 = vpack.c.bf16 %v1152, %v1149
    %1157 = vrot.lane.b32.xlu0 %v1155, 96
    %v1158 = vpop.permute.xlu0 %1157
    %v1160 = vsel %vm189, %v1155, 0
    %v1163 = vsel %vm189, %v1158, 0
    %1165 = vmatprep.subr.bf16.mxu0 0
    %1166 = vmatpush1.bf16.xpose.msra.mxu0 %v1163
    %1167 = vmatprep.subr.bf16.mxu0 0
    %1168 = vmatpush1.bf16.xpose.msra.mxu0 0
    %1169 = vmatprep.subr.bf16.mxu0 0
    %1170 = vmatpush1.bf16.xpose.msra.mxu0 0
    %1171 = vmatprep.subr.bf16.mxu0 0
    %1172 = vmatpush1.bf16.xpose.msra.mxu0 0
    %1173 = vmatprep.subr.bf16.mxu0 0
    %1174 = vmatpush1.bf16.xpose.msra.mxu0 0
    %1175 = vmatprep.subr.bf16.mxu0 0
    %1176 = vmatpush1.bf16.xpose.msra.mxu0 0
    %1177 = vmatprep.subr.bf16.mxu0 0
    %1178 = vmatpush1.bf16.xpose.msra.mxu0 0
    %1179 = vmatprep.subr.bf16.mxu0 0
    %1180 = vmatpush1.bf16.xpose.msra.mxu0 0
    %1181 = vmatprep.subr.bf16.mxu0 0
    %1182 = vmatpush1.bf16.xpose.msra.mxu0 0
    %1183 = vmatprep.subr.bf16.mxu0 0
    %1184 = vmatpush1.bf16.xpose.msra.mxu0 0
    %1185 = vmatprep.subr.bf16.mxu0 0
    %1186 = vmatpush1.bf16.xpose.msra.mxu0 0
    %1187 = vmatprep.subr.bf16.mxu0 0
    %1188 = vmatpush1.bf16.xpose.msra.mxu0 0
    %1189 = vmatprep.subr.bf16.mxu0 0
    %1190 = vmatpush1.bf16.xpose.msra.mxu0 0
    %1191 = vmatprep.subr.bf16.mxu0 0
    %1192 = vmatpush1.bf16.xpose.msra.mxu0 0
    %1193 = vmatprep.subr.bf16.mxu0 0
    %1194 = vmatpush1.bf16.xpose.msra.mxu0 0
    %1195 = vmatprep.subr.bf16.mxu0 0
    %1196 = vmatpush1.bf16.xpose.msra.mxu0 0
    %1197 = vmatprep.mubr.bf16.mxu0 0
    %1198 = vmatmul.mubr.bf16.gmra.mrb[0].mxu0 %v1160
    %v1199 = vpop.f32.mrb[0].mxu0
    %v1200 = vadd.f32 0.0, %v1199
    %v1201 = vpop.f32.mrb[0].mxu0
    %v1202 = vpop.f32.mrb[0].mxu0
    %v1203 = vadd.f32 0.0, %v1202
    %v1204 = vpop.f32.mrb[0].mxu0
    %1205 = vdwg.mxu0
    %v1206 = vmul.f32 %v1200, 0.35355338
    %v1207 = vmul.f32 %v1203, 0.35355338
    %v1208 = vadd.f32 %v1206, %v115
    %v1209 = vadd.f32 %v1207, %v116
    %v1210 = vsel %vm241, %v1208, -inf
    %1211 = vmax.xlane.f32.xlu0 %v1210
    %v1212 = vpop.xlane.xlu0 %1211
    %v1213 = vsel %vm241, %v1209, -inf
    %1214 = vmax.xlane.f32.xlu0 %v1213
    %v1215 = vpop.xlane.xlu0 %1214
    %v1216 = vsub.f32 %v1208, %v1212
    %v1217 = vsub.f32 %v1209, %v1215
    %v1218 = vmul.f32 %v1216, 1.442695
    %v1219 = vpow.pop %v1218
    %v1220 = vmul.f32 %v1217, 1.442695
    %v1221 = vpow.pop %v1220
    %v1222 = vsel %vm241, %v1219, 0.0
    %1223 = vadd.xlane.f32.xlu0 %v1222
    %v1224 = vpop.xlane.xlu0 %1223
    %v1225 = vsel %vm241, %v1221, 0.0
    %1226 = vadd.xlane.f32.xlu0 %v1225
    %v1227 = vpop.xlane.xlu0 %1226
    %v1228 = vrcp.pop %v1224
    %v1229 = vmul.f32 %v1219, %v1228
    %v1230 = vrcp.pop %v1227
    %v1231 = vmul.f32 %v1221, %v1230
    %v1232 = vpack.c.bf16 %v1231, %v1229
    %1233 = vrot.lane.b32.xlu0 %v1155, 64
    %v1234 = vpop.permute.xlu0 %1233
    %v1237 = vsel %vm241, %v1232, 0
    %1239 = vmatprep.subr.bf16.mxu0 0
    %1240 = vmatpush1.bf16.msra.mxu0 %v1234
    %1241 = vmatprep.subr.bf16.mxu0 0
    %1242 = vmatpush1.bf16.msra.mxu0 0
    %1243 = vmatprep.subr.bf16.mxu0 0
    %1244 = vmatpush1.bf16.msra.mxu0 0
    %1245 = vmatprep.subr.bf16.mxu0 0
    %1246 = vmatpush1.bf16.msra.mxu0 0
    %1247 = vmatprep.subr.bf16.mxu0 0
    %1248 = vmatpush1.bf16.msra.mxu0 0
    %1249 = vmatprep.subr.bf16.mxu0 0
    %1250 = vmatpush1.bf16.msra.mxu0 0
    %1251 = vmatprep.subr.bf16.mxu0 0
    %1252 = vmatpush1.bf16.msra.mxu0 0
    %1253 = vmatprep.subr.bf16.mxu0 0
    %1254 = vmatpush1.bf16.msra.mxu0 0
    %1255 = vmatprep.subr.bf16.mxu0 0
    %1256 = vmatpush1.bf16.msra.mxu0 0
    %1257 = vmatprep.subr.bf16.mxu0 0
    %1258 = vmatpush1.bf16.msra.mxu0 0
    %1259 = vmatprep.subr.bf16.mxu0 0
    %1260 = vmatpush1.bf16.msra.mxu0 0
    %1261 = vmatprep.subr.bf16.mxu0 0
    %1262 = vmatpush1.bf16.msra.mxu0 0
    %1263 = vmatprep.subr.bf16.mxu0 0
    %1264 = vmatpush1.bf16.msra.mxu0 0
    %1265 = vmatprep.subr.bf16.mxu0 0
    %1266 = vmatpush1.bf16.msra.mxu0 0
    %1267 = vmatprep.subr.bf16.mxu0 0
    %1268 = vmatpush1.bf16.msra.mxu0 0
    %1269 = vmatprep.subr.bf16.mxu0 0
    %1270 = vmatpush1.bf16.msra.mxu0 0
    %1271 = vmatprep.mubr.bf16.mxu0 0
    %1272 = vmatmul.mubr.bf16.gmra.mrb[0].mxu0 %v1237
    %v1273 = vpop.f32.mrb[0].mxu0
    %v1274 = vadd.f32 0.0, %v1273
    %v1275 = vpop.f32.mrb[0].mxu0
    %v1276 = vpop.f32.mrb[0].mxu0
    %v1277 = vadd.f32 0.0, %v1276
    %v1278 = vpop.f32.mrb[0].mxu0
    %1279 = vdwg.mxu0
    %1280 = vrot.lane.b32.xlu0 %v1155, 120
    %v1281 = vpop.permute.xlu0 %1280
    %1282 = vrot.lane.b32.xlu0 %v1155, 88
    %v1283 = vpop.permute.xlu0 %1282
    %v1285 = vsel %vm189, %v1281, 0
    %v1288 = vsel %vm189, %v1283, 0
    %1290 = vmatprep.subr.bf16.mxu0 0
    %1291 = vmatpush1.bf16.xpose.msra.mxu0 %v1288
    %1292 = vmatprep.subr.bf16.mxu0 0
    %1293 = vmatpush1.bf16.xpose.msra.mxu0 0
    %1294 = vmatprep.subr.bf16.mxu0 0
    %1295 = vmatpush1.bf16.xpose.msra.mxu0 0
    %1296 = vmatprep.subr.bf16.mxu0 0
    %1297 = vmatpush1.bf16.xpose.msra.mxu0 0
    %1298 = vmatprep.subr.bf16.mxu0 0
    %1299 = vmatpush1.bf16.xpose.msra.mxu0 0
    %1300 = vmatprep.subr.bf16.mxu0 0
    %1301 = vmatpush1.bf16.xpose.msra.mxu0 0
    %1302 = vmatprep.subr.bf16.mxu0 0
    %1303 = vmatpush1.bf16.xpose.msra.mxu0 0
    %1304 = vmatprep.subr.bf16.mxu0 0
    %1305 = vmatpush1.bf16.xpose.msra.mxu0 0
    %1306 = vmatprep.subr.bf16.mxu0 0
    %1307 = vmatpush1.bf16.xpose.msra.mxu0 0
    %1308 = vmatprep.subr.bf16.mxu0 0
    %1309 = vmatpush1.bf16.xpose.msra.mxu0 0
    %1310 = vmatprep.subr.bf16.mxu0 0
    %1311 = vmatpush1.bf16.xpose.msra.mxu0 0
    %1312 = vmatprep.subr.bf16.mxu0 0
    %1313 = vmatpush1.bf16.xpose.msra.mxu0 0
    %1314 = vmatprep.subr.bf16.mxu0 0
    %1315 = vmatpush1.bf16.xpose.msra.mxu0 0
    %1316 = vmatprep.subr.bf16.mxu0 0
    %1317 = vmatpush1.bf16.xpose.msra.mxu0 0
    %1318 = vmatprep.subr.bf16.mxu0 0
    %1319 = vmatpush1.bf16.xpose.msra.mxu0 0
    %1320 = vmatprep.subr.bf16.mxu0 0
    %1321 = vmatpush1.bf16.xpose.msra.mxu0 0
    %1322 = vmatprep.mubr.bf16.mxu0 0
    %1323 = vmatmul.mubr.bf16.gmra.mrb[0].mxu0 %v1285
    %v1324 = vpop.f32.mrb[0].mxu0
    %v1325 = vadd.f32 0.0, %v1324
    %v1326 = vpop.f32.mrb[0].mxu0
    %v1327 = vpop.f32.mrb[0].mxu0
    %v1328 = vadd.f32 0.0, %v1327
    %v1329 = vpop.f32.mrb[0].mxu0
    %1330 = vdwg.mxu0
    %v1331 = vmul.f32 %v1325, 0.35355338
    %v1332 = vmul.f32 %v1328, 0.35355338
    %v1333 = vadd.f32 %v1331, %v115
    %v1334 = vadd.f32 %v1332, %v116
    %v1335 = vsel %vm241, %v1333, -inf
    %1336 = vmax.xlane.f32.xlu0 %v1335
    %v1337 = vpop.xlane.xlu0 %1336
    %v1338 = vsel %vm241, %v1334, -inf
    %1339 = vmax.xlane.f32.xlu0 %v1338
    %v1340 = vpop.xlane.xlu0 %1339
    %v1341 = vsub.f32 %v1333, %v1337
    %v1342 = vsub.f32 %v1334, %v1340
    %v1343 = vmul.f32 %v1341, 1.442695
    %v1344 = vpow.pop %v1343
    %v1345 = vmul.f32 %v1342, 1.442695
    %v1346 = vpow.pop %v1345
    %v1347 = vsel %vm241, %v1344, 0.0
    %1348 = vadd.xlane.f32.xlu0 %v1347
    %v1349 = vpop.xlane.xlu0 %1348
    %v1350 = vsel %vm241, %v1346, 0.0
    %1351 = vadd.xlane.f32.xlu0 %v1350
    %v1352 = vpop.xlane.xlu0 %1351
    %v1353 = vrcp.pop %v1349
    %v1354 = vmul.f32 %v1344, %v1353
    %v1355 = vrcp.pop %v1352
    %v1356 = vmul.f32 %v1346, %v1355
    %v1357 = vpack.c.bf16 %v1356, %v1354
    %1358 = vrot.lane.b32.xlu0 %v1155, 56
    %v1359 = vpop.permute.xlu0 %1358
    %v1362 = vsel %vm241, %v1357, 0
    %1364 = vmatprep.subr.bf16.mxu0 0
    %1365 = vmatpush1.bf16.msra.mxu0 %v1359
    %1366 = vmatprep.subr.bf16.mxu0 0
    %1367 = vmatpush1.bf16.msra.mxu0 0
    %1368 = vmatprep.subr.bf16.mxu0 0
    %1369 = vmatpush1.bf16.msra.mxu0 0
    %1370 = vmatprep.subr.bf16.mxu0 0
    %1371 = vmatpush1.bf16.msra.mxu0 0
    %1372 = vmatprep.subr.bf16.mxu0 0
    %1373 = vmatpush1.bf16.msra.mxu0 0
    %1374 = vmatprep.subr.bf16.mxu0 0
    %1375 = vmatpush1.bf16.msra.mxu0 0
    %1376 = vmatprep.subr.bf16.mxu0 0
    %1377 = vmatpush1.bf16.msra.mxu0 0
    %1378 = vmatprep.subr.bf16.mxu0 0
    %1379 = vmatpush1.bf16.msra.mxu0 0
    %1380 = vmatprep.subr.bf16.mxu0 0
    %1381 = vmatpush1.bf16.msra.mxu0 0
    %1382 = vmatprep.subr.bf16.mxu0 0
    %1383 = vmatpush1.bf16.msra.mxu0 0
    %1384 = vmatprep.subr.bf16.mxu0 0
    %1385 = vmatpush1.bf16.msra.mxu0 0
    %1386 = vmatprep.subr.bf16.mxu0 0
    %1387 = vmatpush1.bf16.msra.mxu0 0
    %1388 = vmatprep.subr.bf16.mxu0 0
    %1389 = vmatpush1.bf16.msra.mxu0 0
    %1390 = vmatprep.subr.bf16.mxu0 0
    %1391 = vmatpush1.bf16.msra.mxu0 0
    %1392 = vmatprep.subr.bf16.mxu0 0
    %1393 = vmatpush1.bf16.msra.mxu0 0
    %1394 = vmatprep.subr.bf16.mxu0 0
    %1395 = vmatpush1.bf16.msra.mxu0 0
    %1396 = vmatprep.mubr.bf16.mxu0 0
    %1397 = vmatmul.mubr.bf16.gmra.mrb[0].mxu0 %v1362
    %v1398 = vpop.f32.mrb[0].mxu0
    %v1399 = vadd.f32 0.0, %v1398
    %v1400 = vpop.f32.mrb[0].mxu0
    %v1401 = vpop.f32.mrb[0].mxu0
    %v1402 = vadd.f32 0.0, %v1401
    %v1403 = vpop.f32.mrb[0].mxu0
    %1404 = vdwg.mxu0
    %1405 = vrot.lane.b32.xlu0 %v1155, 112
    %v1406 = vpop.permute.xlu0 %1405
    %1407 = vrot.lane.b32.xlu0 %v1155, 80
    %v1408 = vpop.permute.xlu0 %1407
    %v1410 = vsel %vm189, %v1406, 0
    %v1413 = vsel %vm189, %v1408, 0
    %1415 = vmatprep.subr.bf16.mxu0 0
    %1416 = vmatpush1.bf16.xpose.msra.mxu0 %v1413
    %1417 = vmatprep.subr.bf16.mxu0 0
    %1418 = vmatpush1.bf16.xpose.msra.mxu0 0
    %1419 = vmatprep.subr.bf16.mxu0 0
    %1420 = vmatpush1.bf16.xpose.msra.mxu0 0
    %1421 = vmatprep.subr.bf16.mxu0 0
    %1422 = vmatpush1.bf16.xpose.msra.mxu0 0
    %1423 = vmatprep.subr.bf16.mxu0 0
    %1424 = vmatpush1.bf16.xpose.msra.mxu0 0
    %1425 = vmatprep.subr.bf16.mxu0 0
    %1426 = vmatpush1.bf16.xpose.msra.mxu0 0
    %1427 = vmatprep.subr.bf16.mxu0 0
    %1428 = vmatpush1.bf16.xpose.msra.mxu0 0
    %1429 = vmatprep.subr.bf16.mxu0 0
    %1430 = vmatpush1.bf16.xpose.msra.mxu0 0
    %1431 = vmatprep.subr.bf16.mxu0 0
    %1432 = vmatpush1.bf16.xpose.msra.mxu0 0
    %1433 = vmatprep.subr.bf16.mxu0 0
    %1434 = vmatpush1.bf16.xpose.msra.mxu0 0
    %1435 = vmatprep.subr.bf16.mxu0 0
    %1436 = vmatpush1.bf16.xpose.msra.mxu0 0
    %1437 = vmatprep.subr.bf16.mxu0 0
    %1438 = vmatpush1.bf16.xpose.msra.mxu0 0
    %1439 = vmatprep.subr.bf16.mxu0 0
    %1440 = vmatpush1.bf16.xpose.msra.mxu0 0
    %1441 = vmatprep.subr.bf16.mxu0 0
    %1442 = vmatpush1.bf16.xpose.msra.mxu0 0
    %1443 = vmatprep.subr.bf16.mxu0 0
    %1444 = vmatpush1.bf16.xpose.msra.mxu0 0
    %1445 = vmatprep.subr.bf16.mxu0 0
    %1446 = vmatpush1.bf16.xpose.msra.mxu0 0
    %1447 = vmatprep.mubr.bf16.mxu0 0
    %1448 = vmatmul.mubr.bf16.gmra.mrb[0].mxu0 %v1410
    %v1449 = vpop.f32.mrb[0].mxu0
    %v1450 = vadd.f32 0.0, %v1449
    %v1451 = vpop.f32.mrb[0].mxu0
    %v1452 = vpop.f32.mrb[0].mxu0
    %v1453 = vadd.f32 0.0, %v1452
    %v1454 = vpop.f32.mrb[0].mxu0
    %1455 = vdwg.mxu0
    %v1456 = vmul.f32 %v1450, 0.35355338
    %v1457 = vmul.f32 %v1453, 0.35355338
    %v1458 = vadd.f32 %v1456, %v115
    %v1459 = vadd.f32 %v1457, %v116
    %v1460 = vsel %vm241, %v1458, -inf
    %1461 = vmax.xlane.f32.xlu0 %v1460
    %v1462 = vpop.xlane.xlu0 %1461
    %v1463 = vsel %vm241, %v1459, -inf
    %1464 = vmax.xlane.f32.xlu0 %v1463
    %v1465 = vpop.xlane.xlu0 %1464
    %v1466 = vsub.f32 %v1458, %v1462
    %v1467 = vsub.f32 %v1459, %v1465
    %v1468 = vmul.f32 %v1466, 1.442695
    %v1469 = vpow.pop %v1468
    %v1470 = vmul.f32 %v1467, 1.442695
    %v1471 = vpow.pop %v1470
    %v1472 = vsel %vm241, %v1469, 0.0
    %1473 = vadd.xlane.f32.xlu0 %v1472
    %v1474 = vpop.xlane.xlu0 %1473
    %v1475 = vsel %vm241, %v1471, 0.0
    %1476 = vadd.xlane.f32.xlu0 %v1475
    %v1477 = vpop.xlane.xlu0 %1476
    %v1478 = vrcp.pop %v1474
    %v1479 = vmul.f32 %v1469, %v1478
    %v1480 = vrcp.pop %v1477
    %v1481 = vmul.f32 %v1471, %v1480
    %v1482 = vpack.c.bf16 %v1481, %v1479
    %1483 = vrot.lane.b32.xlu0 %v1155, 48
    %v1484 = vpop.permute.xlu0 %1483
    %v1487 = vsel %vm241, %v1482, 0
    %1489 = vmatprep.subr.bf16.mxu0 0
    %1490 = vmatpush1.bf16.msra.mxu0 %v1484
    %1491 = vmatprep.subr.bf16.mxu0 0
    %1492 = vmatpush1.bf16.msra.mxu0 0
    %1493 = vmatprep.subr.bf16.mxu0 0
    %1494 = vmatpush1.bf16.msra.mxu0 0
    %1495 = vmatprep.subr.bf16.mxu0 0
    %1496 = vmatpush1.bf16.msra.mxu0 0
    %1497 = vmatprep.subr.bf16.mxu0 0
    %1498 = vmatpush1.bf16.msra.mxu0 0
    %1499 = vmatprep.subr.bf16.mxu0 0
    %1500 = vmatpush1.bf16.msra.mxu0 0
    %1501 = vmatprep.subr.bf16.mxu0 0
    %1502 = vmatpush1.bf16.msra.mxu0 0
    %1503 = vmatprep.subr.bf16.mxu0 0
    %1504 = vmatpush1.bf16.msra.mxu0 0
    %1505 = vmatprep.subr.bf16.mxu0 0
    %1506 = vmatpush1.bf16.msra.mxu0 0
    %1507 = vmatprep.subr.bf16.mxu0 0
    %1508 = vmatpush1.bf16.msra.mxu0 0
    %1509 = vmatprep.subr.bf16.mxu0 0
    %1510 = vmatpush1.bf16.msra.mxu0 0
    %1511 = vmatprep.subr.bf16.mxu0 0
    %1512 = vmatpush1.bf16.msra.mxu0 0
    %1513 = vmatprep.subr.bf16.mxu0 0
    %1514 = vmatpush1.bf16.msra.mxu0 0
    %1515 = vmatprep.subr.bf16.mxu0 0
    %1516 = vmatpush1.bf16.msra.mxu0 0
    %1517 = vmatprep.subr.bf16.mxu0 0
    %1518 = vmatpush1.bf16.msra.mxu0 0
    %1519 = vmatprep.subr.bf16.mxu0 0
    %1520 = vmatpush1.bf16.msra.mxu0 0
    %1521 = vmatprep.mubr.bf16.mxu0 0
    %1522 = vmatmul.mubr.bf16.gmra.mrb[0].mxu0 %v1487
    %v1523 = vpop.f32.mrb[0].mxu0
    %v1524 = vadd.f32 0.0, %v1523
    %v1525 = vpop.f32.mrb[0].mxu0
    %v1526 = vpop.f32.mrb[0].mxu0
    %v1527 = vadd.f32 0.0, %v1526
    %v1528 = vpop.f32.mrb[0].mxu0
    %1529 = vdwg.mxu0
    %1530 = vrot.lane.b32.xlu0 %v1155, 104
    %v1531 = vpop.permute.xlu0 %1530
    %1532 = vrot.lane.b32.xlu0 %v1155, 72
    %v1533 = vpop.permute.xlu0 %1532
    %v1535 = vsel %vm189, %v1531, 0
    %v1538 = vsel %vm189, %v1533, 0
    %1540 = vmatprep.subr.bf16.mxu0 0
    %1541 = vmatpush1.bf16.xpose.msra.mxu0 %v1538
    %1542 = vmatprep.subr.bf16.mxu0 0
    %1543 = vmatpush1.bf16.xpose.msra.mxu0 0
    %1544 = vmatprep.subr.bf16.mxu0 0
    %1545 = vmatpush1.bf16.xpose.msra.mxu0 0
    %1546 = vmatprep.subr.bf16.mxu0 0
    %1547 = vmatpush1.bf16.xpose.msra.mxu0 0
    %1548 = vmatprep.subr.bf16.mxu0 0
    %1549 = vmatpush1.bf16.xpose.msra.mxu0 0
    %1550 = vmatprep.subr.bf16.mxu0 0
    %1551 = vmatpush1.bf16.xpose.msra.mxu0 0
    %1552 = vmatprep.subr.bf16.mxu0 0
    %1553 = vmatpush1.bf16.xpose.msra.mxu0 0
    %1554 = vmatprep.subr.bf16.mxu0 0
    %1555 = vmatpush1.bf16.xpose.msra.mxu0 0
    %1556 = vmatprep.subr.bf16.mxu0 0
    %1557 = vmatpush1.bf16.xpose.msra.mxu0 0
    %1558 = vmatprep.subr.bf16.mxu0 0
    %1559 = vmatpush1.bf16.xpose.msra.mxu0 0
    %1560 = vmatprep.subr.bf16.mxu0 0
    %1561 = vmatpush1.bf16.xpose.msra.mxu0 0
    %1562 = vmatprep.subr.bf16.mxu0 0
    %1563 = vmatpush1.bf16.xpose.msra.mxu0 0
    %1564 = vmatprep.subr.bf16.mxu0 0
    %1565 = vmatpush1.bf16.xpose.msra.mxu0 0
    %1566 = vmatprep.subr.bf16.mxu0 0
    %1567 = vmatpush1.bf16.xpose.msra.mxu0 0
    %1568 = vmatprep.subr.bf16.mxu0 0
    %1569 = vmatpush1.bf16.xpose.msra.mxu0 0
    %1570 = vmatprep.subr.bf16.mxu0 0
    %1571 = vmatpush1.bf16.xpose.msra.mxu0 0
    %1572 = vmatprep.mubr.bf16.mxu0 0
    %1573 = vmatmul.mubr.bf16.gmra.mrb[0].mxu0 %v1535
    %v1574 = vpop.f32.mrb[0].mxu0
    %v1575 = vadd.f32 0.0, %v1574
    %v1576 = vpop.f32.mrb[0].mxu0
    %v1577 = vpop.f32.mrb[0].mxu0
    %v1578 = vadd.f32 0.0, %v1577
    %v1579 = vpop.f32.mrb[0].mxu0
    %1580 = vdwg.mxu0
    %v1581 = vmul.f32 %v1575, 0.35355338
    %v1582 = vmul.f32 %v1578, 0.35355338
    %v1583 = vadd.f32 %v1581, %v115
    %v1584 = vadd.f32 %v1582, %v116
    %v1585 = vsel %vm241, %v1583, -inf
    %1586 = vmax.xlane.f32.xlu0 %v1585
    %v1587 = vpop.xlane.xlu0 %1586
    %v1588 = vsel %vm241, %v1584, -inf
    %1589 = vmax.xlane.f32.xlu0 %v1588
    %v1590 = vpop.xlane.xlu0 %1589
    %v1591 = vsub.f32 %v1583, %v1587
    %v1592 = vsub.f32 %v1584, %v1590
    %v1593 = vmul.f32 %v1591, 1.442695
    %v1594 = vpow.pop %v1593
    %v1595 = vmul.f32 %v1592, 1.442695
    %v1596 = vpow.pop %v1595
    %v1597 = vsel %vm241, %v1594, 0.0
    %1598 = vadd.xlane.f32.xlu0 %v1597
    %v1599 = vpop.xlane.xlu0 %1598
    %v1600 = vsel %vm241, %v1596, 0.0
    %1601 = vadd.xlane.f32.xlu0 %v1600
    %v1602 = vpop.xlane.xlu0 %1601
    %v1603 = vrcp.pop %v1599
    %v1604 = vmul.f32 %v1594, %v1603
    %v1605 = vrcp.pop %v1602
    %v1606 = vmul.f32 %v1596, %v1605
    %v1607 = vpack.c.bf16 %v1606, %v1604
    %1608 = vrot.lane.b32.xlu0 %v1155, 40
    %v1609 = vpop.permute.xlu0 %1608
    %v1612 = vsel %vm241, %v1607, 0
    %1614 = vmatprep.subr.bf16.mxu0 0
    %1615 = vmatpush1.bf16.msra.mxu0 %v1609
    %1616 = vmatprep.subr.bf16.mxu0 0
    %1617 = vmatpush1.bf16.msra.mxu0 0
    %1618 = vmatprep.subr.bf16.mxu0 0
    %1619 = vmatpush1.bf16.msra.mxu0 0
    %1620 = vmatprep.subr.bf16.mxu0 0
    %1621 = vmatpush1.bf16.msra.mxu0 0
    %1622 = vmatprep.subr.bf16.mxu0 0
    %1623 = vmatpush1.bf16.msra.mxu0 0
    %1624 = vmatprep.subr.bf16.mxu0 0
    %1625 = vmatpush1.bf16.msra.mxu0 0
    %1626 = vmatprep.subr.bf16.mxu0 0
    %1627 = vmatpush1.bf16.msra.mxu0 0
    %1628 = vmatprep.subr.bf16.mxu0 0
    %1629 = vmatpush1.bf16.msra.mxu0 0
    %1630 = vmatprep.subr.bf16.mxu0 0
    %1631 = vmatpush1.bf16.msra.mxu0 0
    %1632 = vmatprep.subr.bf16.mxu0 0
    %1633 = vmatpush1.bf16.msra.mxu0 0
    %1634 = vmatprep.subr.bf16.mxu0 0
    %1635 = vmatpush1.bf16.msra.mxu0 0
    %1636 = vmatprep.subr.bf16.mxu0 0
    %1637 = vmatpush1.bf16.msra.mxu0 0
    %1638 = vmatprep.subr.bf16.mxu0 0
    %1639 = vmatpush1.bf16.msra.mxu0 0
    %1640 = vmatprep.subr.bf16.mxu0 0
    %1641 = vmatpush1.bf16.msra.mxu0 0
    %1642 = vmatprep.subr.bf16.mxu0 0
    %1643 = vmatpush1.bf16.msra.mxu0 0
    %1644 = vmatprep.subr.bf16.mxu0 0
    %1645 = vmatpush1.bf16.msra.mxu0 0
    %1646 = vmatprep.mubr.bf16.mxu0 0
    %1647 = vmatmul.mubr.bf16.gmra.mrb[0].mxu0 %v1612
    %v1648 = vpop.f32.mrb[0].mxu0
    %v1649 = vadd.f32 0.0, %v1648
    %v1650 = vpop.f32.mrb[0].mxu0
    %v1651 = vpop.f32.mrb[0].mxu0
    %v1652 = vadd.f32 0.0, %v1651
    %v1653 = vpop.f32.mrb[0].mxu0
    %1654 = vdwg.mxu0
    %1657 = vrot.lane.b32.xlu0 %v1399, 8
    %v1658 = vpop.permute.xlu0 %1657
    %1659 = vrot.lane.b32.xlu0 %v1402, 8
    %v1660 = vpop.permute.xlu0 %1659
    %1665 = vrot.lane.b32.xlu0 %v1524, 16
    %v1666 = vpop.permute.xlu0 %1665
    %1667 = vrot.lane.b32.xlu0 %v1527, 16
    %v1668 = vpop.permute.xlu0 %1667
    %1673 = vrot.lane.b32.xlu0 %v1649, 24
    %v1674 = vpop.permute.xlu0 %1673
    %1675 = vrot.lane.b32.xlu0 %v1652, 24
    %v1676 = vpop.permute.xlu0 %1675
    %v1679 = vsel %vm189, %v1274, %v1658
    %v1680 = vsel %vm189, %v1277, %v1660
    %v1681 = vsel %vm241, %v1679, %v1666
    %v1682 = vsel %vm241, %v1680, %v1668
    %v1683 = vsel %vm715, %v1681, %v1674
    %v1684 = vsel %vm715, %v1682, %v1676
    %v1685 = vpack.c.bf16 %v1684, %v1683
    %s1686 = scalar_lea.vmem %s6, 16
    %v1687 = vld [vmem:[%s1686] sm:$0xf]
    %v1688 = vld [vmem:[%s1686 + $0x4] sm:$0xf]
    %v1689 = vld [vmem:[%s1686 + $0x8] sm:$0xf]
    %v1690 = vld [vmem:[%s1686 + $0xc] sm:$0xf]
    %s1691 = scalar_lea.vmem %s7, 1
    %v1692 = vld [vmem:[%s1691] sm:$0x1]
    %v1694 = vlaneseq
    %v1695 = vshrl.u32 %v1694, 7
    %v1696 = vsub.s32 0, %v1695
    %v1697 = vrot.slane %v1692, %v1696
    %v1703 = vunpack.c.l.b16 %v1687
    %v1704 = vunpack.c.l.b16 %v1688
    %v1705 = vunpack.c.l.b16 %v1689
    %v1706 = vunpack.c.l.b16 %v1690
    %v1707 = vpack.c.b16 %v1704, %v1703
    %v1708 = vpack.c.b16 %v1706, %v1705
    %v1712 = vsel %vm71, %v1685, 0
    %1714 = vmatprep.subr.bf16.mxu0 0
    %1715 = vmatpush1.bf16.msra.mxu0 %v1707
    %1716 = vmatprep.subr.bf16.mxu0 0
    %1717 = vmatpush1.bf16.msra.mxu0 %v1708
    %1718 = vmatprep.subr.bf16.mxu0 0
    %1719 = vmatpush1.bf16.msra.mxu0 0
    %1720 = vmatprep.subr.bf16.mxu0 0
    %1721 = vmatpush1.bf16.msra.mxu0 0
    %1722 = vmatprep.subr.bf16.mxu0 0
    %1723 = vmatpush1.bf16.msra.mxu0 0
    %1724 = vmatprep.subr.bf16.mxu0 0
    %1725 = vmatpush1.bf16.msra.mxu0 0
    %1726 = vmatprep.subr.bf16.mxu0 0
    %1727 = vmatpush1.bf16.msra.mxu0 0
    %1728 = vmatprep.subr.bf16.mxu0 0
    %1729 = vmatpush1.bf16.msra.mxu0 0
    %1730 = vmatprep.subr.bf16.mxu0 0
    %1731 = vmatpush1.bf16.msra.mxu0 0
    %1732 = vmatprep.subr.bf16.mxu0 0
    %1733 = vmatpush1.bf16.msra.mxu0 0
    %1734 = vmatprep.subr.bf16.mxu0 0
    %1735 = vmatpush1.bf16.msra.mxu0 0
    %1736 = vmatprep.subr.bf16.mxu0 0
    %1737 = vmatpush1.bf16.msra.mxu0 0
    %1738 = vmatprep.subr.bf16.mxu0 0
    %1739 = vmatpush1.bf16.msra.mxu0 0
    %1740 = vmatprep.subr.bf16.mxu0 0
    %1741 = vmatpush1.bf16.msra.mxu0 0
    %1742 = vmatprep.subr.bf16.mxu0 0
    %1743 = vmatpush1.bf16.msra.mxu0 0
    %1744 = vmatprep.subr.bf16.mxu0 0
    %1745 = vmatpush1.bf16.msra.mxu0 0
    %1746 = vmatprep.mubr.bf16.mxu0 0
    %1747 = vmatmul.mubr.bf16.gmra.mrb[0].mxu0 %v1712
    %v1748 = vpop.f32.mrb[0].mxu0
    %v1749 = vadd.f32 %v1697, %v1748
    %v1750 = vpop.f32.mrb[0].mxu0
    %v1751 = vpop.f32.mrb[0].mxu0
    %v1752 = vadd.f32 %v1697, %v1751
    %v1753 = vpop.f32.mrb[0].mxu0
    %1754 = vdwg.mxu0
    %v1755 = vadd.f32 %v1749, %v1083
    %v1756 = vadd.f32 %v1752, %v1084
    %s1757 = scalar_lea.vmem %s8, 1
    %v1758 = vld [vmem:[%s1757] sm:$0x1]
    %s1759 = scalar_lea.vmem %s9, 1
    %v1760 = vld [vmem:[%s1759] sm:$0x1]
    %v1761 = vsel %vm71, %v1755, 0.0
    %1762 = vadd.xlane.f32.xlu0 %v1761
    %v1763 = vpop.xlane.xlu0 %1762
    %v1764 = vsel %vm71, %v1756, 0.0
    %1765 = vadd.xlane.f32.xlu0 %v1764
    %v1766 = vpop.xlane.xlu0 %1765
    %v1767 = vmul.f32 %v1763, %v78
    %v1768 = vmul.f32 %v1766, %v78
    %v1769 = vsub.f32 %v1755, %v1767
    %v1770 = vsub.f32 %v1756, %v1768
    %v1771 = vmul.f32 %v1769, %v1769
    %v1772 = vmul.f32 %v1770, %v1770
    %v1773 = vsel %vm71, %v1771, 0.0
    %1774 = vadd.xlane.f32.xlu0 %v1773
    %v1775 = vpop.xlane.xlu0 %1774
    %v1776 = vsel %vm71, %v1772, 0.0
    %1777 = vadd.xlane.f32.xlu0 %v1776
    %v1778 = vpop.xlane.xlu0 %1777
    %v1779 = vmul.f32 %v1775, %v78
    %v1780 = vmul.f32 %v1778, %v78
    %v1781 = vadd.f32 %v1779, 1e-12
    %v1782 = vadd.f32 %v1780, 1e-12
    %v1783 = vrsqrt.pop %v1781
    %v1784 = vrsqrt.pop %v1782
    %v1785 = vmul.f32 %v1769, %v1783
    %v1786 = vmul.f32 %v1770, %v1784
    %v1788 = vlaneseq
    %v1789 = vshrl.u32 %v1788, 7
    %v1790 = vsub.s32 0, %v1789
    %v1791 = vrot.slane %v1758, %v1790
    %v1793 = vmul.f32 %v1785, %v1791
    %v1794 = vmul.f32 %v1786, %v1791
    %v1796 = vlaneseq
    %v1797 = vshrl.u32 %v1796, 7
    %v1798 = vsub.s32 0, %v1797
    %v1799 = vrot.slane %v1760, %v1798
    %v1801 = vadd.f32 %v1793, %v1799
    %v1802 = vadd.f32 %v1794, %v1799
    %v1803 = vpack.c.bf16 %v1802, %v1801
    %s1804 = scalar_lea.vmem %s10, 16
    %v1805 = vld [vmem:[%s1804] sm:$0xf]
    %v1806 = vld [vmem:[%s1804 + $0x4] sm:$0xf]
    %v1807 = vld [vmem:[%s1804 + $0x8] sm:$0xf]
    %v1808 = vld [vmem:[%s1804 + $0xc] sm:$0xf]
    %s1809 = scalar_lea.vmem %s11, 1
    %v1810 = vld [vmem:[%s1809] sm:$0x1]
    %v1812 = vlaneseq
    %v1813 = vshrl.u32 %v1812, 7
    %v1814 = vsub.s32 0, %v1813
    %v1815 = vrot.slane %v1810, %v1814
    %v1821 = vunpack.c.l.b16 %v1805
    %v1822 = vunpack.c.l.b16 %v1806
    %v1823 = vunpack.c.l.b16 %v1807
    %v1824 = vunpack.c.l.b16 %v1808
    %v1825 = vpack.c.b16 %v1822, %v1821
    %v1826 = vpack.c.b16 %v1824, %v1823
    %v1830 = vsel %vm71, %v1803, 0
    %1832 = vmatprep.subr.bf16.mxu0 0
    %1833 = vmatpush1.bf16.msra.mxu0 %v1825
    %1834 = vmatprep.subr.bf16.mxu0 0
    %1835 = vmatpush1.bf16.msra.mxu0 %v1826
    %1836 = vmatprep.subr.bf16.mxu0 0
    %1837 = vmatpush1.bf16.msra.mxu0 0
    %1838 = vmatprep.subr.bf16.mxu0 0
    %1839 = vmatpush1.bf16.msra.mxu0 0
    %1840 = vmatprep.subr.bf16.mxu0 0
    %1841 = vmatpush1.bf16.msra.mxu0 0
    %1842 = vmatprep.subr.bf16.mxu0 0
    %1843 = vmatpush1.bf16.msra.mxu0 0
    %1844 = vmatprep.subr.bf16.mxu0 0
    %1845 = vmatpush1.bf16.msra.mxu0 0
    %1846 = vmatprep.subr.bf16.mxu0 0
    %1847 = vmatpush1.bf16.msra.mxu0 0
    %1848 = vmatprep.subr.bf16.mxu0 0
    %1849 = vmatpush1.bf16.msra.mxu0 0
    %1850 = vmatprep.subr.bf16.mxu0 0
    %1851 = vmatpush1.bf16.msra.mxu0 0
    %1852 = vmatprep.subr.bf16.mxu0 0
    %1853 = vmatpush1.bf16.msra.mxu0 0
    %1854 = vmatprep.subr.bf16.mxu0 0
    %1855 = vmatpush1.bf16.msra.mxu0 0
    %1856 = vmatprep.subr.bf16.mxu0 0
    %1857 = vmatpush1.bf16.msra.mxu0 0
    %1858 = vmatprep.subr.bf16.mxu0 0
    %1859 = vmatpush1.bf16.msra.mxu0 0
    %1860 = vmatprep.subr.bf16.mxu0 0
    %1861 = vmatpush1.bf16.msra.mxu0 0
    %1862 = vmatprep.subr.bf16.mxu0 0
    %1863 = vmatpush1.bf16.msra.mxu0 0
    %1864 = vmatprep.mubr.bf16.mxu0 0
    %1865 = vmatmul.mubr.bf16.gmra.mrb[0].mxu0 %v1830
    %v1866 = vpop.f32.mrb[0].mxu0
    %v1867 = vadd.f32 %v1815, %v1866
    %v1868 = vpop.f32.mrb[0].mxu0
    %v1869 = vpop.f32.mrb[0].mxu0
    %v1870 = vadd.f32 %v1815, %v1869
    %v1871 = vpop.f32.mrb[0].mxu0
    %1872 = vdwg.mxu0
    %v1873 = vmul.f32 %v1867, 0.5
    %v1874 = vmul.f32 %v1870, 0.5
    %v1875 = vmul.f32 %v1867, 0.70710677
    %v1876 = vmul.f32 %v1870, 0.70710677
    %v1877 = vand.u32 2147483647, %v1875
    %v1878 = vand.u32 2147483647, %v1876
    %v1879 = vmul.f32 %v1877, 0.3275911
    %v1880 = vmul.f32 %v1878, 0.3275911
    %v1881 = vadd.f32 %v1879, 1.0
    %v1882 = vadd.f32 %v1880, 1.0
    %v1883 = vrcp.pop %v1881
    %v1884 = vmul.f32 1.0, %v1883
    %v1885 = vrcp.pop %v1882
    %v1886 = vmul.f32 1.0, %v1885
    %v1887 = vmul.f32 %v1884, 1.0614054
    %v1888 = vmul.f32 %v1886, 1.0614054
    %v1889 = vadd.f32 %v1887, -1.4531521
    %v1890 = vadd.f32 %v1888, -1.4531521
    %v1891 = vmul.f32 %v1884, %v1889
    %v1892 = vmul.f32 %v1886, %v1890
    %v1893 = vadd.f32 %v1891, 1.4214138
    %v1894 = vadd.f32 %v1892, 1.4214138
    %v1895 = vmul.f32 %v1884, %v1893
    %v1896 = vmul.f32 %v1886, %v1894
    %v1897 = vadd.f32 %v1895, -0.28449672
    %v1898 = vadd.f32 %v1896, -0.28449672
    %v1899 = vmul.f32 %v1884, %v1897
    %v1900 = vmul.f32 %v1886, %v1898
    %v1901 = vadd.f32 %v1899, 0.2548296
    %v1902 = vadd.f32 %v1900, 0.2548296
    %v1903 = vmul.f32 %v1884, %v1901
    %v1904 = vmul.f32 %v1886, %v1902
    %v1905 = vsub.f32 0.0, %v1877
    %v1906 = vsub.f32 0.0, %v1878
    %v1907 = vmul.f32 %v1905, %v1877
    %v1908 = vmul.f32 %v1906, %v1878
    %v1909 = vmul.f32 %v1907, 1.442695
    %v1910 = vpow.pop %v1909
    %v1911 = vmul.f32 %v1908, 1.442695
    %v1912 = vpow.pop %v1911
    %v1913 = vmul.f32 %v1903, %v1910
    %v1914 = vmul.f32 %v1904, %v1912
    %v1915 = vsub.f32 1.0, %v1913
    %v1916 = vsub.f32 1.0, %v1914
    %vm1917 = vcmp.ge.f32.partialorder %v1875, 0.0
    %vm1918 = vcmp.ge.f32.partialorder %v1876, 0.0
    %v1919 = vsub.f32 0.0, %v1915
    %v1920 = vsub.f32 0.0, %v1916
    %v1921 = vsel %vm1917, %v1915, %v1919
    %v1922 = vsel %vm1918, %v1916, %v1920
    %v1923 = vadd.f32 %v1921, 1.0
    %v1924 = vadd.f32 %v1922, 1.0
    %v1925 = vmul.f32 %v1873, %v1923
    %v1926 = vmul.f32 %v1874, %v1924
    %v1927 = vpack.c.bf16 %v1926, %v1925
    %s1928 = scalar_lea.vmem %s12, 32
    %v1929 = vld [vmem:[%s1928] sm:$0xf]
    %v1930 = vld [vmem:[%s1928 + $0x4] sm:$0xf]
    %v1931 = vld [vmem:[%s1928 + $0x8] sm:$0xf]
    %v1932 = vld [vmem:[%s1928 + $0xc] sm:$0xf]
    %v1933 = vld [vmem:[%s1928 + $0x10] sm:$0xf]
    %v1934 = vld [vmem:[%s1928 + $0x14] sm:$0xf]
    %v1935 = vld [vmem:[%s1928 + $0x18] sm:$0xf]
    %v1936 = vld [vmem:[%s1928 + $0x1c] sm:$0xf]
    %s1937 = scalar_lea.vmem %s13, 1
    %v1938 = vld [vmem:[%s1937] sm:$0x1]
    %v1940 = vlaneseq
    %v1941 = vshrl.u32 %v1940, 7
    %v1942 = vsub.s32 0, %v1941
    %v1943 = vrot.slane %v1938, %v1942
    %v1953 = vunpack.c.l.b16 %v1929
    %v1954 = vunpack.c.l.b16 %v1930
    %v1955 = vunpack.c.l.b16 %v1931
    %v1956 = vunpack.c.l.b16 %v1932
    %v1957 = vunpack.c.l.b16 %v1933
    %v1958 = vunpack.c.l.b16 %v1934
    %v1959 = vunpack.c.l.b16 %v1935
    %v1960 = vunpack.c.l.b16 %v1936
    %v1961 = vpack.c.b16 %v1954, %v1953
    %v1962 = vpack.c.b16 %v1956, %v1955
    %v1963 = vpack.c.b16 %v1958, %v1957
    %v1964 = vpack.c.b16 %v1960, %v1959
    %v1970 = vsel %vm994, %v1927, 0
    %1972 = vmatprep.subr.bf16.mxu0 0
    %1973 = vmatpush1.bf16.msra.mxu0 %v1961
    %1974 = vmatprep.subr.bf16.mxu0 0
    %1975 = vmatpush1.bf16.msra.mxu0 %v1962
    %1976 = vmatprep.subr.bf16.mxu0 0
    %1977 = vmatpush1.bf16.msra.mxu0 %v1963
    %1978 = vmatprep.subr.bf16.mxu0 0
    %1979 = vmatpush1.bf16.msra.mxu0 %v1964
    %1980 = vmatprep.subr.bf16.mxu0 0
    %1981 = vmatpush1.bf16.msra.mxu0 0
    %1982 = vmatprep.subr.bf16.mxu0 0
    %1983 = vmatpush1.bf16.msra.mxu0 0
    %1984 = vmatprep.subr.bf16.mxu0 0
    %1985 = vmatpush1.bf16.msra.mxu0 0
    %1986 = vmatprep.subr.bf16.mxu0 0
    %1987 = vmatpush1.bf16.msra.mxu0 0
    %1988 = vmatprep.subr.bf16.mxu0 0
    %1989 = vmatpush1.bf16.msra.mxu0 0
    %1990 = vmatprep.subr.bf16.mxu0 0
    %1991 = vmatpush1.bf16.msra.mxu0 0
    %1992 = vmatprep.subr.bf16.mxu0 0
    %1993 = vmatpush1.bf16.msra.mxu0 0
    %1994 = vmatprep.subr.bf16.mxu0 0
    %1995 = vmatpush1.bf16.msra.mxu0 0
    %1996 = vmatprep.subr.bf16.mxu0 0
    %1997 = vmatpush1.bf16.msra.mxu0 0
    %1998 = vmatprep.subr.bf16.mxu0 0
    %1999 = vmatpush1.bf16.msra.mxu0 0
    %2000 = vmatprep.subr.bf16.mxu0 0
    %2001 = vmatpush1.bf16.msra.mxu0 0
    %2002 = vmatprep.subr.bf16.mxu0 0
    %2003 = vmatpush1.bf16.msra.mxu0 0
    %2004 = vmatprep.mubr.bf16.mxu0 0
    %2005 = vmatmul.mubr.bf16.gmra.mrb[0].mxu0 %v1970
    %v2006 = vpop.f32.mrb[0].mxu0
    %v2007 = vadd.f32 %v1943, %v2006
    %v2008 = vpop.f32.mrb[0].mxu0
    %v2009 = vpop.f32.mrb[0].mxu0
    %v2010 = vadd.f32 %v1943, %v2009
    %v2011 = vpop.f32.mrb[0].mxu0
    %2012 = vdwg.mxu0
    %v2013 = vadd.f32 %v2007, %v1801
    %v2014 = vadd.f32 %v2010, %v1802
    %s2015 = scalar_lea.vmem %s14, 1
    %v2016 = vld [vmem:[%s2015] sm:$0x1]
    %s2017 = scalar_lea.vmem %s15, 1
    %v2018 = vld [vmem:[%s2017] sm:$0x1]
    %v2019 = vsel %vm71, %v2013, 0.0
    %2020 = vadd.xlane.f32.xlu0 %v2019
    %v2021 = vpop.xlane.xlu0 %2020
    %v2022 = vsel %vm71, %v2014, 0.0
    %2023 = vadd.xlane.f32.xlu0 %v2022
    %v2024 = vpop.xlane.xlu0 %2023
    %v2025 = vmul.f32 %v2021, %v78
    %v2026 = vmul.f32 %v2024, %v78
    %v2027 = vsub.f32 %v2013, %v2025
    %v2028 = vsub.f32 %v2014, %v2026
    %v2029 = vmul.f32 %v2027, %v2027
    %v2030 = vmul.f32 %v2028, %v2028
    %v2031 = vsel %vm71, %v2029, 0.0
    %2032 = vadd.xlane.f32.xlu0 %v2031
    %v2033 = vpop.xlane.xlu0 %2032
    %v2034 = vsel %vm71, %v2030, 0.0
    %2035 = vadd.xlane.f32.xlu0 %v2034
    %v2036 = vpop.xlane.xlu0 %2035
    %v2037 = vmul.f32 %v2033, %v78
    %v2038 = vmul.f32 %v2036, %v78
    %v2039 = vadd.f32 %v2037, 1e-12
    %v2040 = vadd.f32 %v2038, 1e-12
    %v2041 = vrsqrt.pop %v2039
    %v2042 = vrsqrt.pop %v2040
    %v2043 = vmul.f32 %v2027, %v2041
    %v2044 = vmul.f32 %v2028, %v2042
    %v2046 = vlaneseq
    %v2047 = vshrl.u32 %v2046, 7
    %v2048 = vsub.s32 0, %v2047
    %v2049 = vrot.slane %v2016, %v2048
    %v2051 = vmul.f32 %v2043, %v2049
    %v2052 = vmul.f32 %v2044, %v2049
    %v2054 = vlaneseq
    %v2055 = vshrl.u32 %v2054, 7
    %v2056 = vsub.s32 0, %v2055
    %v2057 = vrot.slane %v2018, %v2056
    %v2059 = vadd.f32 %v2051, %v2057
    %v2060 = vadd.f32 %v2052, %v2057
    %v2061 = vlaneseq
    %v2062 = vshrl.u32 %v2061, 7
    %v2063 = vlaneseq
    %v2064 = vand.u32 %v2063, 127
    %v2065 = vmul.u32 %v2062, 8
    %vm2066 = vcmp.eq.s32.totalorder %v2064, %v2065
    %v2067 = vsel %vm2066, 1, 0
    %v2068 = vcvt.s32.f32 %v2067
    %v2069 = vpack.c.bf16 %v2068, %v2068
    %v2070 = vpack.c.bf16 %v2060, %v2059
    %v2072 = vsel %vm241, %v2069, 0
    %2074 = vmatprep.subr.bf16.mxu0 0
    %2075 = vmatpush1.bf16.msra.mxu0 %v2070
    %2076 = vmatprep.subr.bf16.mxu0 0
    %2077 = vmatpush1.bf16.msra.mxu0 0
    %2078 = vmatprep.subr.bf16.mxu0 0
    %2079 = vmatpush1.bf16.msra.mxu0 0
    %2080 = vmatprep.subr.bf16.mxu0 0
    %2081 = vmatpush1.bf16.msra.mxu0 0
    %2082 = vmatprep.subr.bf16.mxu0 0
    %2083 = vmatpush1.bf16.msra.mxu0 0
    %2084 = vmatprep.subr.bf16.mxu0 0
    %2085 = vmatpush1.bf16.msra.mxu0 0
    %2086 = vmatprep.subr.bf16.mxu0 0
    %2087 = vmatpush1.bf16.msra.mxu0 0
    %2088 = vmatprep.subr.bf16.mxu0 0
    %2089 = vmatpush1.bf16.msra.mxu0 0
    %2090 = vmatprep.subr.bf16.mxu0 0
    %2091 = vmatpush1.bf16.msra.mxu0 0
    %2092 = vmatprep.subr.bf16.mxu0 0
    %2093 = vmatpush1.bf16.msra.mxu0 0
    %2094 = vmatprep.subr.bf16.mxu0 0
    %2095 = vmatpush1.bf16.msra.mxu0 0
    %2096 = vmatprep.subr.bf16.mxu0 0
    %2097 = vmatpush1.bf16.msra.mxu0 0
    %2098 = vmatprep.subr.bf16.mxu0 0
    %2099 = vmatpush1.bf16.msra.mxu0 0
    %2100 = vmatprep.subr.bf16.mxu0 0
    %2101 = vmatpush1.bf16.msra.mxu0 0
    %2102 = vmatprep.subr.bf16.mxu0 0
    %2103 = vmatpush1.bf16.msra.mxu0 0
    %2104 = vmatprep.subr.bf16.mxu0 0
    %2105 = vmatpush1.bf16.msra.mxu0 0
    %2106 = vmatprep.mubr.bf16.mxu0 0
    %2107 = vmatmul.mubr.bf16.gmra.mrb[0].mxu0 %v2072
    %v2108 = vpop.f32.mrb[0].mxu0
    %v2109 = vadd.f32 0.0, %v2108
    %v2110 = vpop.f32.mrb[0].mxu0
    %v2111 = vpop.f32.mrb[0].mxu0
    %v2112 = vpop.f32.mrb[0].mxu0
    %2113 = vdwg.mxu0
    %v2114 = vpack.c.bf16 %v2109, %v2109
    %v2115 = vld [vmem:[%s16] sm:$0xf]
    %v2116 = vld [vmem:[%s16 + $0x4] sm:$0xf]
    %v2117 = vld [vmem:[%s16 + $0x8] sm:$0xf]
    %v2118 = vld [vmem:[%s16 + $0xc] sm:$0xf]
    %v2119 = vld [vmem:[%s17] sm:$0x1]
    %v2121 = vlaneseq
    %v2122 = vshrl.u32 %v2121, 7
    %v2123 = vsub.s32 0, %v2122
    %v2124 = vrot.slane %v2119, %v2123
    %v2130 = vunpack.c.l.b16 %v2115
    %v2131 = vunpack.c.l.b16 %v2116
    %v2132 = vunpack.c.l.b16 %v2117
    %v2133 = vunpack.c.l.b16 %v2118
    %v2134 = vpack.c.b16 %v2131, %v2130
    %v2135 = vpack.c.b16 %v2133, %v2132
    %v2139 = vsel %vm71, %v2114, 0
    %2141 = vmatprep.subr.bf16.mxu0 0
    %2142 = vmatpush1.bf16.msra.mxu0 %v2134
    %2143 = vmatprep.subr.bf16.mxu0 0
    %2144 = vmatpush1.bf16.msra.mxu0 %v2135
    %2145 = vmatprep.subr.bf16.mxu0 0
    %2146 = vmatpush1.bf16.msra.mxu0 0
    %2147 = vmatprep.subr.bf16.mxu0 0
    %2148 = vmatpush1.bf16.msra.mxu0 0
    %2149 = vmatprep.subr.bf16.mxu0 0
    %2150 = vmatpush1.bf16.msra.mxu0 0
    %2151 = vmatprep.subr.bf16.mxu0 0
    %2152 = vmatpush1.bf16.msra.mxu0 0
    %2153 = vmatprep.subr.bf16.mxu0 0
    %2154 = vmatpush1.bf16.msra.mxu0 0
    %2155 = vmatprep.subr.bf16.mxu0 0
    %2156 = vmatpush1.bf16.msra.mxu0 0
    %2157 = vmatprep.subr.bf16.mxu0 0
    %2158 = vmatpush1.bf16.msra.mxu0 0
    %2159 = vmatprep.subr.bf16.mxu0 0
    %2160 = vmatpush1.bf16.msra.mxu0 0
    %2161 = vmatprep.subr.bf16.mxu0 0
    %2162 = vmatpush1.bf16.msra.mxu0 0
    %2163 = vmatprep.subr.bf16.mxu0 0
    %2164 = vmatpush1.bf16.msra.mxu0 0
    %2165 = vmatprep.subr.bf16.mxu0 0
    %2166 = vmatpush1.bf16.msra.mxu0 0
    %2167 = vmatprep.subr.bf16.mxu0 0
    %2168 = vmatpush1.bf16.msra.mxu0 0
    %2169 = vmatprep.subr.bf16.mxu0 0
    %2170 = vmatpush1.bf16.msra.mxu0 0
    %2171 = vmatprep.subr.bf16.mxu0 0
    %2172 = vmatpush1.bf16.msra.mxu0 0
    %2173 = vmatprep.mubr.bf16.mxu0 0
    %2174 = vmatmul.mubr.bf16.gmra.mrb[0].mxu0 %v2139
    %v2175 = vpop.f32.mrb[0].mxu0
    %v2176 = vadd.f32 %v2124, %v2175
    %v2177 = vpop.f32.mrb[0].mxu0
    %v2178 = vpop.f32.mrb[0].mxu0
    %v2179 = vpop.f32.mrb[0].mxu0
    %2180 = vdwg.mxu0
    %v2181 = vtanh.pop %v2176
    %v2182 = vpack.c.bf16 %v2181, %v2181
    %v2183 = vld [vmem:[%s18] sm:$0xf]
    %v2184 = vld [vmem:[%s18 + $0x4] sm:$0xf]
    %v2185 = vld [vmem:[%s18 + $0x8] sm:$0xf]
    %v2186 = vld [vmem:[%s18 + $0xc] sm:$0xf]
    %v2187 = vld [vmem:[%s19] sm:$0x1]
    %v2189 = vlaneseq
    %v2190 = vshrl.u32 %v2189, 7
    %v2191 = vsub.s32 0, %v2190
    %v2192 = vrot.slane %v2187, %v2191
    %v2198 = vunpack.c.l.b16 %v2183
    %v2199 = vunpack.c.l.b16 %v2184
    %v2200 = vunpack.c.l.b16 %v2185
    %v2201 = vunpack.c.l.b16 %v2186
    %v2202 = vpack.c.b16 %v2199, %v2198
    %v2203 = vpack.c.b16 %v2201, %v2200
    %v2207 = vsel %vm71, %v2182, 0
    %2209 = vmatprep.subr.bf16.mxu0 0
    %2210 = vmatpush1.bf16.msra.mxu0 %v2202
    %2211 = vmatprep.subr.bf16.mxu0 0
    %2212 = vmatpush1.bf16.msra.mxu0 %v2203
    %2213 = vmatprep.subr.bf16.mxu0 0
    %2214 = vmatpush1.bf16.msra.mxu0 0
    %2215 = vmatprep.subr.bf16.mxu0 0
    %2216 = vmatpush1.bf16.msra.mxu0 0
    %2217 = vmatprep.subr.bf16.mxu0 0
    %2218 = vmatpush1.bf16.msra.mxu0 0
    %2219 = vmatprep.subr.bf16.mxu0 0
    %2220 = vmatpush1.bf16.msra.mxu0 0
    %2221 = vmatprep.subr.bf16.mxu0 0
    %2222 = vmatpush1.bf16.msra.mxu0 0
    %2223 = vmatprep.subr.bf16.mxu0 0
    %2224 = vmatpush1.bf16.msra.mxu0 0
    %2225 = vmatprep.subr.bf16.mxu0 0
    %2226 = vmatpush1.bf16.msra.mxu0 0
    %2227 = vmatprep.subr.bf16.mxu0 0
    %2228 = vmatpush1.bf16.msra.mxu0 0
    %2229 = vmatprep.subr.bf16.mxu0 0
    %2230 = vmatpush1.bf16.msra.mxu0 0
    %2231 = vmatprep.subr.bf16.mxu0 0
    %2232 = vmatpush1.bf16.msra.mxu0 0
    %2233 = vmatprep.subr.bf16.mxu0 0
    %2234 = vmatpush1.bf16.msra.mxu0 0
    %2235 = vmatprep.subr.bf16.mxu0 0
    %2236 = vmatpush1.bf16.msra.mxu0 0
    %2237 = vmatprep.subr.bf16.mxu0 0
    %2238 = vmatpush1.bf16.msra.mxu0 0
    %2239 = vmatprep.subr.bf16.mxu0 0
    %2240 = vmatpush1.bf16.msra.mxu0 0
    %2241 = vmatprep.mubr.bf16.mxu0 0
    %2242 = vmatmul.mubr.bf16.gmra.mrb[0].mxu0 %v2207
    %v2243 = vpop.f32.mrb[0].mxu0
    %v2244 = vadd.f32 %v2192, %v2243
    %v2245 = vpop.f32.mrb[0].mxu0
    %v2246 = vpop.f32.mrb[0].mxu0
    %v2247 = vpop.f32.mrb[0].mxu0
    %2248 = vdwg.mxu0
    %vm2249 = vcmask 33792
    %2250 = vst.msk [vmem:[#allocation2] sm:$0x3] %vm2249, %v2244
    // Predicated region
    $region82: #{patent_classification_forward.1} parent=1 // pred_check
      _
    $region83: #{patent_classification_forward.1} parent=1 // pred_check_branch
      %2252 = sbr.rel (0) target = $region85
    $region84: #{patent_classification_forward.1} parent=1 // pred_region
      %s2254 = ssub.s32 32, 32
      %2255 = vsyncadd [#allocation3], %s2254
      %s2257 = sshll.u32 [#allocation2], 4
      %s2258 = int_to_ptr.vmem [resolvable:$true] %s2257
      %2260 = dma.vmem_to_hbm [thread:$0]  %s2258, 32, %s20, [#allocation3]
    $region85: #{patent_classification_forward.1} parent=1 // pred_fallthru
      _
    // Predicated region
    $region86: #{patent_classification_forward.1} parent=1 // pred_check
      _
    $region87: #{patent_classification_forward.1} parent=1 // pred_check_branch
      %2262 = sbr.rel (0) target = $region89
    $region88: #{patent_classification_forward.1} parent=1 // pred_region
      %2263 = dma.done [#allocation3], 32
    $region89: #{patent_classification_forward.1} parent=1 // pred_fallthru
      _
    %2264 = vsyncpa [#allocation3], 1

</llo_original>
